<compile_context>
chip_gen: v7x
topology: tpu7x:2x2x1
jax: 0.10.0
libtpu: 0.0.40
codegen_flags: <defaults>
</compile_context>

<pallas_src>
import math
import jax
import jax.numpy as jnp
from jax.experimental import pallas as pl
from jax.experimental.pallas import tpu as pltpu

NUM_HEADS = 4
LN_EPS = 1e-12


def _layer_norm(x, gamma, beta, eps=LN_EPS):
    # f32 elementwise (v5e-safe); x is always f32 here.
    mu = jnp.mean(x, axis=-1, keepdims=True)
    var = jnp.mean(jnp.square(x - mu), axis=-1, keepdims=True)
    return (x - mu) * jax.lax.rsqrt(var + eps) * gamma + beta


# ----------------------------- fused forward kernel --------------------------
def fused_forward_kernel(emb_ref, mask_ref, eg_ref, eb_ref,
                         wqkv_ref, bqkv_ref, wo_ref, bo_ref, ln1g_ref, ln1b_ref,
                         w1_ref, b1_ref, w2_ref, b2_ref, ln2g_ref, ln2b_ref,
                         pw_ref, pb_ref, fw_ref, fb_ref, o_ref):
    _, BB, S, H = emb_ref.shape           # one grid step == one batch block
    L = wqkv_ref.shape[0]
    dh = H // NUM_HEADS
    scale = 1.0 / math.sqrt(dh)
    BBS = BB * S

    mask = mask_ref[0]                    # (BB, 1, S) additive key mask, f32

    # Embedding LayerNorm on the collapsed (BB*S, H) activation slab.
    x = _layer_norm(emb_ref[0].reshape(BBS, H), eg_ref[...], eb_ref[...])

    for l in range(L):                    # static unroll over layers
        # --- fused QKV projection: one (BB*S, H) x (H, 3H) matmul ------------
        qkv = (jnp.dot(x.astype(jnp.bfloat16), wqkv_ref[l],
                       preferred_element_type=jnp.float32) + bqkv_ref[l])
        q = qkv[:, 0 * H:1 * H].reshape(BB, S, H)
        k = qkv[:, 1 * H:2 * H].reshape(BB, S, H)
        v = qkv[:, 2 * H:3 * H].reshape(BB, S, H)

        # --- multi-head attention, batched over the batch block --------------
        # Each head's context is folded straight through its (dh, H) slice of
        # W_o and accumulated -> no lane-axis concatenate, no transposes.
        attn = jnp.zeros((BBS, H), jnp.float32)
        for h in range(NUM_HEADS):
            sl = slice(h * dh, (h + 1) * dh)
            qh = q[:, :, sl].astype(jnp.bfloat16)
            kh = k[:, :, sl].astype(jnp.bfloat16)
            vh = v[:, :, sl].astype(jnp.bfloat16)
            s = jnp.einsum('bqd,bkd->bqk', qh, kh,
                           preferred_element_type=jnp.float32) * scale + mask
            s = s - jnp.max(s, axis=-1, keepdims=True)
            p = jnp.exp(s)
            p = p * pl.reciprocal(jnp.sum(p, axis=-1, keepdims=True), approx=True)
            ctx = jnp.einsum('bqk,bkd->bqd', p.astype(jnp.bfloat16), vh,
                             preferred_element_type=jnp.float32)     # (BB,S,dh)
            attn = attn + jnp.dot(ctx.reshape(BBS, dh).astype(jnp.bfloat16),
                                  wo_ref[l, h],                      # (dh, H)
                                  preferred_element_type=jnp.float32)
        attn = attn + bo_ref[l]

        h1 = _layer_norm(x + attn, ln1g_ref[l], ln1b_ref[l])

        # --- FFN on the collapsed batch block --------------------------------
        ffn = jnp.dot(h1.astype(jnp.bfloat16), w1_ref[l],
                      preferred_element_type=jnp.float32) + b1_ref[l]
        ffn = jax.nn.gelu(ffn, approximate=True)        # BERT tanh-GELU (EUP)
        ffn = jnp.dot(ffn.astype(jnp.bfloat16), w2_ref[l],
                      preferred_element_type=jnp.float32) + b2_ref[l]

        x = _layer_norm(h1 + ffn, ln2g_ref[l], ln2b_ref[l])

    # --- pooler (tanh of [CLS] projection) -> dropout(eval=id) -> classifier --
    # TODO(synk): training-mode dropout (RNG masking) not implemented.
    cls = x.reshape(BB, S, H)[:, 0, :]                              # (BB, H)
    pooled = jnp.tanh(jnp.dot(cls.astype(jnp.bfloat16), pw_ref[...],
                              preferred_element_type=jnp.float32) + pb_ref[...])
    logits = (jnp.dot(pooled.astype(jnp.bfloat16), fw_ref[...],
                      preferred_element_type=jnp.float32) + fb_ref[...])
    o_ref[0] = logits                                   # lane-dense (BB, 128)


# ------------------------------- parameters ----------------------------------
def init_params(key, vocab=100, max_pos=16, type_vocab=2, H=32, I=128, L=2, C=3):
    ks = iter(jax.random.split(key, 32))

    def nrm(shape, dtype=jnp.float32):
        return (0.02 * jax.random.normal(next(ks), shape, jnp.float32)).astype(dtype)

    ones = lambda s: jnp.ones(s, jnp.float32)
    zeros = lambda s: jnp.zeros(s, jnp.float32)

    dh = H // NUM_HEADS
    return dict(
        word_emb=nrm((vocab, H)),
        pos_emb=nrm((max_pos, H)),
        type_emb=nrm((type_vocab, H)),
        emb_ln_g=ones((1, H)), emb_ln_b=zeros((1, H)),
        # Per-layer weights stacked on a leading L axis.
        # Matmul weights bf16 (f32 accumulation in-kernel); biases/LN params f32.
        wqkv=nrm((L, H, 3 * H), jnp.bfloat16), bqkv=zeros((L, 1, 3 * H)),
        wo=nrm((L, NUM_HEADS, dh, H), jnp.bfloat16), bo=zeros((L, 1, H)),
        ln1_g=ones((L, 1, H)), ln1_b=zeros((L, 1, H)),
        w1=nrm((L, H, I), jnp.bfloat16), b1=zeros((L, 1, I)),
        w2=nrm((L, I, H), jnp.bfloat16), b2=zeros((L, 1, H)),
        ln2_g=ones((L, 1, H)), ln2_b=zeros((L, 1, H)),
        pool_w=nrm((H, H), jnp.bfloat16), pool_b=zeros((1, H)),
        fc_w=nrm((H, C)), fc_b=zeros((1, C)),
    )


# --------------------------------- forward -----------------------------------
def sentiment_transformer_forward(params, input_ids, attention_mask,
                                  batch_block=None):
    """Equivalent of SentimentTransformer.forward (eval mode)."""
    B, S = input_ids.shape
    H = params['word_emb'].shape[-1]
    C = params['fc_w'].shape[-1]
    CP = 128                               # lane-dense padded logits width

    if batch_block is None:
        batch_block = B                    # one grid step, maximal matmul M
    assert B % batch_block == 0
    G = B // batch_block

    # Embedding gathers are glue (plain JAX); everything downstream is Pallas.
    # TODO(synk): token_type_ids hard-coded to 0 (matches all-zero segment ids).
    emb = (params['word_emb'][input_ids]
           + params['pos_emb'][jnp.arange(S)][None, :, :]
           + params['type_emb'][jnp.zeros((B, S), jnp.int32)])
    add_mask = (1.0 - attention_mask.astype(jnp.float32)) * -10000.0   # (B, S)

    emb_g = emb.reshape(G, batch_block, S, H)
    mask_g = add_mask.reshape(G, batch_block, 1, S)

    # Lane-dense classifier head: pad (H, C) -> (H, 128); slice C afterwards.
    fc_w = jnp.zeros((H, CP), jnp.bfloat16).at[:, :C].set(
        params['fc_w'].astype(jnp.bfloat16))
    fc_b = jnp.zeros((1, CP), jnp.float32).at[:, :C].set(params['fc_b'])

    weights = (params['emb_ln_g'], params['emb_ln_b'],
               params['wqkv'], params['bqkv'], params['wo'], params['bo'],
               params['ln1_g'], params['ln1_b'],
               params['w1'], params['b1'], params['w2'], params['b2'],
               params['ln2_g'], params['ln2_b'],
               params['pool_w'], params['pool_b'], fc_w, fc_b)

    in_specs = [pl.BlockSpec((1, batch_block, S, H), lambda g: (g, 0, 0, 0)),
                pl.BlockSpec((1, batch_block, 1, S), lambda g: (g, 0, 0, 0))]
    # Grid-invariant weights: full-array blocks, constant index map.
    # TODO(synk): mark these pipeline_mode=pl.Buffered(1) if H/I are scaled up
    # (the default second buffer of never-changing weights is wasted VMEM).
    for w in weights:
        in_specs.append(
            pl.BlockSpec(w.shape, (lambda nd: (lambda g: (0,) * nd))(w.ndim)))

    out = pl.pallas_call(
        fused_forward_kernel,
        out_shape=jax.ShapeDtypeStruct((G, batch_block, CP), jnp.float32),
        grid=(G,),
        in_specs=in_specs,
        out_specs=pl.BlockSpec((1, batch_block, CP), lambda g: (g, 0, 0)),
        compiler_params=pltpu.CompilerParams(dimension_semantics=("parallel",)),
    )(emb_g, mask_g, *weights)

    return out.reshape(B, CP)[:, :C]


if __name__ == "__main__":
    key = jax.random.PRNGKey(0)
    pkey, ikey = jax.random.split(key)
    params = init_params(pkey)

    B, S, C = 2, 8, 3
    input_ids = jax.random.randint(ikey, (B, S), 0, 100, dtype=jnp.int32)
    attention_mask = jnp.ones((B, S), jnp.int32).at[1, 6:].set(0)

    fwd = jax.jit(sentiment_transformer_forward)
    logits = fwd(params, input_ids, attention_mask)
    jax.block_until_ready(logits)

    assert logits.shape == (B, C) and logits.dtype == jnp.float32
    assert bool(jnp.all(jnp.isfinite(logits)))
    print("KERNEL_OK")
</pallas_src>

<mosaic_0001>
module attributes {stable_mosaic.version = 11 : i64} {
  func.func @fused_forward_kernel(%arg0: i32, %arg1: memref<1x2x8x32xf32, #tpu.memory_space<vmem>>, %arg2: memref<1x2x1x8xf32, #tpu.memory_space<vmem>>, %arg3: memref<1x32xf32, #tpu.memory_space<vmem>>, %arg4: memref<1x32xf32, #tpu.memory_space<vmem>>, %arg5: memref<2x32x96xbf16, #tpu.memory_space<vmem>>, %arg6: memref<2x1x96xf32, #tpu.memory_space<vmem>>, %arg7: memref<2x4x8x32xbf16, #tpu.memory_space<vmem>>, %arg8: memref<2x1x32xf32, #tpu.memory_space<vmem>>, %arg9: memref<2x1x32xf32, #tpu.memory_space<vmem>>, %arg10: memref<2x1x32xf32, #tpu.memory_space<vmem>>, %arg11: memref<2x32x128xbf16, #tpu.memory_space<vmem>>, %arg12: memref<2x1x128xf32, #tpu.memory_space<vmem>>, %arg13: memref<2x128x32xbf16, #tpu.memory_space<vmem>>, %arg14: memref<2x1x32xf32, #tpu.memory_space<vmem>>, %arg15: memref<2x1x32xf32, #tpu.memory_space<vmem>>, %arg16: memref<2x1x32xf32, #tpu.memory_space<vmem>>, %arg17: memref<32x32xbf16, #tpu.memory_space<vmem>>, %arg18: memref<1x32xf32, #tpu.memory_space<vmem>>, %arg19: memref<32x128xbf16, #tpu.memory_space<vmem>>, %arg20: memref<1x128xf32, #tpu.memory_space<vmem>>, %arg21: memref<1x2x128xf32, #tpu.memory_space<vmem>>) attributes {dimension_semantics = [#tpu.dimension_semantics<parallel>], iteration_bounds = array<i64: 1>, scalar_prefetch = 0 : i64, scratch_operands = 0 : i64, tpu.core_type = #tpu.core_type<tc>, window_params = [{transform_indices = @transform_0, window_bounds = array<i64: 1, 2, 8, 32>}, {transform_indices = @transform_1, window_bounds = array<i64: 1, 2, 1, 8>}, {pipeline_mode = #tpu.pipeline_mode<synchronous>, transform_indices = @transform_2, window_bounds = array<i64: 1, 32>}, {pipeline_mode = #tpu.pipeline_mode<synchronous>, transform_indices = @transform_3, window_bounds = array<i64: 1, 32>}, {pipeline_mode = #tpu.pipeline_mode<synchronous>, transform_indices = @transform_4, window_bounds = array<i64: 2, 32, 96>}, {pipeline_mode = #tpu.pipeline_mode<synchronous>, transform_indices = @transform_5, window_bounds = array<i64: 2, 1, 96>}, {pipeline_mode = #tpu.pipeline_mode<synchronous>, transform_indices = @transform_6, window_bounds = array<i64: 2, 4, 8, 32>}, {pipeline_mode = #tpu.pipeline_mode<synchronous>, transform_indices = @transform_7, window_bounds = array<i64: 2, 1, 32>}, {pipeline_mode = #tpu.pipeline_mode<synchronous>, transform_indices = @transform_8, window_bounds = array<i64: 2, 1, 32>}, {pipeline_mode = #tpu.pipeline_mode<synchronous>, transform_indices = @transform_9, window_bounds = array<i64: 2, 1, 32>}, {pipeline_mode = #tpu.pipeline_mode<synchronous>, transform_indices = @transform_10, window_bounds = array<i64: 2, 32, 128>}, {pipeline_mode = #tpu.pipeline_mode<synchronous>, transform_indices = @transform_11, window_bounds = array<i64: 2, 1, 128>}, {pipeline_mode = #tpu.pipeline_mode<synchronous>, transform_indices = @transform_12, window_bounds = array<i64: 2, 128, 32>}, {pipeline_mode = #tpu.pipeline_mode<synchronous>, transform_indices = @transform_13, window_bounds = array<i64: 2, 1, 32>}, {pipeline_mode = #tpu.pipeline_mode<synchronous>, transform_indices = @transform_14, window_bounds = array<i64: 2, 1, 32>}, {pipeline_mode = #tpu.pipeline_mode<synchronous>, transform_indices = @transform_15, window_bounds = array<i64: 2, 1, 32>}, {pipeline_mode = #tpu.pipeline_mode<synchronous>, transform_indices = @transform_16, window_bounds = array<i64: 32, 32>}, {pipeline_mode = #tpu.pipeline_mode<synchronous>, transform_indices = @transform_17, window_bounds = array<i64: 1, 32>}, {pipeline_mode = #tpu.pipeline_mode<synchronous>, transform_indices = @transform_18, window_bounds = array<i64: 32, 128>}, {pipeline_mode = #tpu.pipeline_mode<synchronous>, transform_indices = @transform_19, window_bounds = array<i64: 1, 128>}, {transform_indices = @transform_20, window_bounds = array<i64: 1, 2, 128>}]} {
    %c0 = arith.constant 0 : index
    %c0_0 = arith.constant 0 : index
    %c0_1 = arith.constant 0 : index
    %c0_2 = arith.constant 0 : index
    %0 = vector.load %arg2[%c0, %c0_0, %c0_1, %c0_2] : memref<1x2x1x8xf32, #tpu.memory_space<vmem>>, vector<1x2x1x8xf32>
    %1 = vector.shape_cast %0 : vector<1x2x1x8xf32> to vector<2x1x8xf32>
    %c0_3 = arith.constant 0 : index
    %c0_4 = arith.constant 0 : index
    %c0_5 = arith.constant 0 : index
    %c0_6 = arith.constant 0 : index
    %2 = vector.load %arg1[%c0_3, %c0_4, %c0_5, %c0_6] : memref<1x2x8x32xf32, #tpu.memory_space<vmem>>, vector<1x2x8x32xf32>
    %3 = vector.shape_cast %2 : vector<1x2x8x32xf32> to vector<2x8x32xf32>
    %4 = vector.shape_cast %3 : vector<2x8x32xf32> to vector<16x32xf32>
    %c0_7 = arith.constant 0 : index
    %c0_8 = arith.constant 0 : index
    %5 = vector.load %arg3[%c0_7, %c0_8] : memref<1x32xf32, #tpu.memory_space<vmem>>, vector<1x32xf32>
    %c0_9 = arith.constant 0 : index
    %c0_10 = arith.constant 0 : index
    %6 = vector.load %arg4[%c0_9, %c0_10] : memref<1x32xf32, #tpu.memory_space<vmem>>, vector<1x32xf32>
    %cst = arith.constant dense<0.000000e+00> : vector<16xf32>
    %7 = vector.multi_reduction <add>, %4, %cst [1] : vector<16x32xf32> to vector<16xf32>
    %8 = vector.shape_cast %7 : vector<16xf32> to vector<16x1xf32>
    %cst_11 = arith.constant 3.200000e+01 : f32
    %9 = vector.broadcast %cst_11 : f32 to vector<16x1xf32>
    %10 = arith.divf %8, %9 : vector<16x1xf32>
    %11 = vector.broadcast %10 : vector<16x1xf32> to vector<16x32xf32>
    %12 = arith.subf %4, %11 : vector<16x32xf32>
    %13 = arith.mulf %12, %12 : vector<16x32xf32>
    %cst_12 = arith.constant dense<0.000000e+00> : vector<16xf32>
    %14 = vector.multi_reduction <add>, %13, %cst_12 [1] : vector<16x32xf32> to vector<16xf32>
    %15 = vector.shape_cast %14 : vector<16xf32> to vector<16x1xf32>
    %cst_13 = arith.constant 3.200000e+01 : f32
    %16 = vector.broadcast %cst_13 : f32 to vector<16x1xf32>
    %17 = arith.divf %15, %16 : vector<16x1xf32>
    %18 = vector.broadcast %10 : vector<16x1xf32> to vector<16x32xf32>
    %19 = arith.subf %4, %18 : vector<16x32xf32>
    %cst_14 = arith.constant 9.99999996E-13 : f32
    %20 = vector.broadcast %cst_14 : f32 to vector<16x1xf32>
    %21 = arith.addf %17, %20 : vector<16x1xf32>
    %22 = math.rsqrt %21 : vector<16x1xf32>
    %23 = vector.broadcast %22 : vector<16x1xf32> to vector<16x32xf32>
    %24 = arith.mulf %19, %23 : vector<16x32xf32>
    %25 = vector.broadcast %5 : vector<1x32xf32> to vector<16x32xf32>
    %26 = arith.mulf %24, %25 : vector<16x32xf32>
    %27 = vector.broadcast %6 : vector<1x32xf32> to vector<16x32xf32>
    %28 = arith.addf %26, %27 : vector<16x32xf32>
    %29 = arith.truncf %28 : vector<16x32xf32> to vector<16x32xbf16>
    %c0_15 = arith.constant 0 : index
    %c0_16 = arith.constant 0 : index
    %c0_17 = arith.constant 0 : index
    %30 = vector.load %arg5[%c0_15, %c0_16, %c0_17] : memref<2x32x96xbf16, #tpu.memory_space<vmem>>, vector<1x32x96xbf16>
    %31 = vector.shape_cast %30 : vector<1x32x96xbf16> to vector<32x96xbf16>
    %cst_18 = arith.constant dense<0.000000e+00> : vector<16x96xf32>
    %32 = tpu.matmul %29, %31, %cst_18 {dimension_numbers = #tpu.dot_dimension_numbers<[1], [0], [0], [1], [0, 0, 1, 1], [], []>} : vector<16x32xbf16>, vector<32x96xbf16>, vector<16x96xf32> -> vector<16x96xf32>
    %c0_19 = arith.constant 0 : index
    %c0_20 = arith.constant 0 : index
    %c0_21 = arith.constant 0 : index
    %33 = vector.load %arg6[%c0_19, %c0_20, %c0_21] : memref<2x1x96xf32, #tpu.memory_space<vmem>>, vector<1x1x96xf32>
    %34 = vector.shape_cast %33 : vector<1x1x96xf32> to vector<1x96xf32>
    %35 = vector.broadcast %34 : vector<1x96xf32> to vector<16x96xf32>
    %36 = arith.addf %32, %35 : vector<16x96xf32>
    %37 = vector.extract_strided_slice %36 {offsets = [0, 0], sizes = [16, 32], strides = [1, 1]} : vector<16x96xf32> to vector<16x32xf32>
    %38 = vector.shape_cast %37 : vector<16x32xf32> to vector<2x8x32xf32>
    %39 = vector.extract_strided_slice %36 {offsets = [0, 32], sizes = [16, 32], strides = [1, 1]} : vector<16x96xf32> to vector<16x32xf32>
    %40 = vector.shape_cast %39 : vector<16x32xf32> to vector<2x8x32xf32>
    %41 = vector.extract_strided_slice %36 {offsets = [0, 64], sizes = [16, 32], strides = [1, 1]} : vector<16x96xf32> to vector<16x32xf32>
    %42 = vector.shape_cast %41 : vector<16x32xf32> to vector<2x8x32xf32>
    %cst_22 = arith.constant 0.000000e+00 : f32
    %43 = vector.broadcast %cst_22 : f32 to vector<16x32xf32>
    %44 = vector.extract_strided_slice %38 {offsets = [0, 0, 0], sizes = [2, 8, 8], strides = [1, 1, 1]} : vector<2x8x32xf32> to vector<2x8x8xf32>
    %45 = arith.truncf %44 : vector<2x8x8xf32> to vector<2x8x8xbf16>
    %46 = vector.extract_strided_slice %40 {offsets = [0, 0, 0], sizes = [2, 8, 8], strides = [1, 1, 1]} : vector<2x8x32xf32> to vector<2x8x8xf32>
    %47 = arith.truncf %46 : vector<2x8x8xf32> to vector<2x8x8xbf16>
    %48 = vector.extract_strided_slice %42 {offsets = [0, 0, 0], sizes = [2, 8, 8], strides = [1, 1, 1]} : vector<2x8x32xf32> to vector<2x8x8xf32>
    %49 = arith.truncf %48 : vector<2x8x8xf32> to vector<2x8x8xbf16>
    "tpu.trace_start"() <{level = 10 : i32, message = "bqd,bkd->bqk"}> : () -> ()
    %cst_23 = arith.constant dense<0.000000e+00> : vector<2x8x8xf32>
    %50 = tpu.matmul %45, %47, %cst_23 {dimension_numbers = #tpu.dot_dimension_numbers<[2], [2], [1], [1], [0, 0, 0, 1, 1, 1], [0], [0]>} : vector<2x8x8xbf16>, vector<2x8x8xbf16>, vector<2x8x8xf32> -> vector<2x8x8xf32>
    "tpu.trace_stop"() : () -> ()
    %cst_24 = arith.constant 0.353553385 : f32
    %51 = vector.broadcast %cst_24 : f32 to vector<2x8x8xf32>
    %52 = arith.mulf %50, %51 : vector<2x8x8xf32>
    %53 = vector.broadcast %1 : vector<2x1x8xf32> to vector<2x8x8xf32>
    %54 = arith.addf %52, %53 : vector<2x8x8xf32>
    %cst_25 = arith.constant dense<0xFF800000> : vector<2x8xf32>
    %55 = vector.multi_reduction <maximumf>, %54, %cst_25 [2] : vector<2x8x8xf32> to vector<2x8xf32>
    %56 = vector.shape_cast %55 : vector<2x8xf32> to vector<2x8x1xf32>
    %57 = vector.broadcast %56 : vector<2x8x1xf32> to vector<2x8x8xf32>
    %58 = arith.subf %54, %57 : vector<2x8x8xf32>
    %59 = math.exp %58 : vector<2x8x8xf32>
    %cst_26 = arith.constant dense<0.000000e+00> : vector<2x8xf32>
    %60 = vector.multi_reduction <add>, %59, %cst_26 [2] : vector<2x8x8xf32> to vector<2x8xf32>
    %61 = vector.shape_cast %60 : vector<2x8xf32> to vector<2x8x1xf32>
    %62 = tpu.reciprocal %61 {approx = true} : vector<2x8x1xf32> -> vector<2x8x1xf32>
    %63 = vector.broadcast %62 : vector<2x8x1xf32> to vector<2x8x8xf32>
    %64 = arith.mulf %59, %63 : vector<2x8x8xf32>
    %65 = arith.truncf %64 : vector<2x8x8xf32> to vector<2x8x8xbf16>
    "tpu.trace_start"() <{level = 10 : i32, message = "bqk,bkd->bqd"}> : () -> ()
    %cst_27 = arith.constant dense<0.000000e+00> : vector<2x8x8xf32>
    %66 = tpu.matmul %65, %49, %cst_27 {dimension_numbers = #tpu.dot_dimension_numbers<[2], [1], [1], [2], [0, 0, 0, 1, 1, 2], [0], [0]>} : vector<2x8x8xbf16>, vector<2x8x8xbf16>, vector<2x8x8xf32> -> vector<2x8x8xf32>
    "tpu.trace_stop"() : () -> ()
    %67 = vector.shape_cast %66 : vector<2x8x8xf32> to vector<16x8xf32>
    %68 = arith.truncf %67 : vector<16x8xf32> to vector<16x8xbf16>
    %c0_28 = arith.constant 0 : index
    %c0_29 = arith.constant 0 : index
    %c0_30 = arith.constant 0 : index
    %c0_31 = arith.constant 0 : index
    %69 = vector.load %arg7[%c0_28, %c0_29, %c0_30, %c0_31] : memref<2x4x8x32xbf16, #tpu.memory_space<vmem>>, vector<1x1x8x32xbf16>
    %70 = vector.shape_cast %69 : vector<1x1x8x32xbf16> to vector<8x32xbf16>
    %cst_32 = arith.constant dense<0.000000e+00> : vector<16x32xf32>
    %71 = tpu.matmul %68, %70, %cst_32 {dimension_numbers = #tpu.dot_dimension_numbers<[1], [0], [0], [1], [0, 0, 1, 1], [], []>} : vector<16x8xbf16>, vector<8x32xbf16>, vector<16x32xf32> -> vector<16x32xf32>
    %72 = arith.addf %43, %71 : vector<16x32xf32>
    %73 = vector.extract_strided_slice %38 {offsets = [0, 0, 8], sizes = [2, 8, 8], strides = [1, 1, 1]} : vector<2x8x32xf32> to vector<2x8x8xf32>
    %74 = arith.truncf %73 : vector<2x8x8xf32> to vector<2x8x8xbf16>
    %75 = vector.extract_strided_slice %40 {offsets = [0, 0, 8], sizes = [2, 8, 8], strides = [1, 1, 1]} : vector<2x8x32xf32> to vector<2x8x8xf32>
    %76 = arith.truncf %75 : vector<2x8x8xf32> to vector<2x8x8xbf16>
    %77 = vector.extract_strided_slice %42 {offsets = [0, 0, 8], sizes = [2, 8, 8], strides = [1, 1, 1]} : vector<2x8x32xf32> to vector<2x8x8xf32>
    %78 = arith.truncf %77 : vector<2x8x8xf32> to vector<2x8x8xbf16>
    "tpu.trace_start"() <{level = 10 : i32, message = "bqd,bkd->bqk"}> : () -> ()
    %cst_33 = arith.constant dense<0.000000e+00> : vector<2x8x8xf32>
    %79 = tpu.matmul %74, %76, %cst_33 {dimension_numbers = #tpu.dot_dimension_numbers<[2], [2], [1], [1], [0, 0, 0, 1, 1, 1], [0], [0]>} : vector<2x8x8xbf16>, vector<2x8x8xbf16>, vector<2x8x8xf32> -> vector<2x8x8xf32>
    "tpu.trace_stop"() : () -> ()
    %cst_34 = arith.constant 0.353553385 : f32
    %80 = vector.broadcast %cst_34 : f32 to vector<2x8x8xf32>
    %81 = arith.mulf %79, %80 : vector<2x8x8xf32>
    %82 = vector.broadcast %1 : vector<2x1x8xf32> to vector<2x8x8xf32>
    %83 = arith.addf %81, %82 : vector<2x8x8xf32>
    %cst_35 = arith.constant dense<0xFF800000> : vector<2x8xf32>
    %84 = vector.multi_reduction <maximumf>, %83, %cst_35 [2] : vector<2x8x8xf32> to vector<2x8xf32>
    %85 = vector.shape_cast %84 : vector<2x8xf32> to vector<2x8x1xf32>
    %86 = vector.broadcast %85 : vector<2x8x1xf32> to vector<2x8x8xf32>
    %87 = arith.subf %83, %86 : vector<2x8x8xf32>
    %88 = math.exp %87 : vector<2x8x8xf32>
    %cst_36 = arith.constant dense<0.000000e+00> : vector<2x8xf32>
    %89 = vector.multi_reduction <add>, %88, %cst_36 [2] : vector<2x8x8xf32> to vector<2x8xf32>
    %90 = vector.shape_cast %89 : vector<2x8xf32> to vector<2x8x1xf32>
    %91 = tpu.reciprocal %90 {approx = true} : vector<2x8x1xf32> -> vector<2x8x1xf32>
    %92 = vector.broadcast %91 : vector<2x8x1xf32> to vector<2x8x8xf32>
    %93 = arith.mulf %88, %92 : vector<2x8x8xf32>
    %94 = arith.truncf %93 : vector<2x8x8xf32> to vector<2x8x8xbf16>
    "tpu.trace_start"() <{level = 10 : i32, message = "bqk,bkd->bqd"}> : () -> ()
    %cst_37 = arith.constant dense<0.000000e+00> : vector<2x8x8xf32>
    %95 = tpu.matmul %94, %78, %cst_37 {dimension_numbers = #tpu.dot_dimension_numbers<[2], [1], [1], [2], [0, 0, 0, 1, 1, 2], [0], [0]>} : vector<2x8x8xbf16>, vector<2x8x8xbf16>, vector<2x8x8xf32> -> vector<2x8x8xf32>
    "tpu.trace_stop"() : () -> ()
    %96 = vector.shape_cast %95 : vector<2x8x8xf32> to vector<16x8xf32>
    %97 = arith.truncf %96 : vector<16x8xf32> to vector<16x8xbf16>
    %c0_38 = arith.constant 0 : index
    %c1 = arith.constant 1 : index
    %c0_39 = arith.constant 0 : index
    %c0_40 = arith.constant 0 : index
    %98 = vector.load %arg7[%c0_38, %c1, %c0_39, %c0_40] : memref<2x4x8x32xbf16, #tpu.memory_space<vmem>>, vector<1x1x8x32xbf16>
    %99 = vector.shape_cast %98 : vector<1x1x8x32xbf16> to vector<8x32xbf16>
    %cst_41 = arith.constant dense<0.000000e+00> : vector<16x32xf32>
    %100 = tpu.matmul %97, %99, %cst_41 {dimension_numbers = #tpu.dot_dimension_numbers<[1], [0], [0], [1], [0, 0, 1, 1], [], []>} : vector<16x8xbf16>, vector<8x32xbf16>, vector<16x32xf32> -> vector<16x32xf32>
    %101 = arith.addf %72, %100 : vector<16x32xf32>
    %102 = vector.extract_strided_slice %38 {offsets = [0, 0, 16], sizes = [2, 8, 8], strides = [1, 1, 1]} : vector<2x8x32xf32> to vector<2x8x8xf32>
    %103 = arith.truncf %102 : vector<2x8x8xf32> to vector<2x8x8xbf16>
    %104 = vector.extract_strided_slice %40 {offsets = [0, 0, 16], sizes = [2, 8, 8], strides = [1, 1, 1]} : vector<2x8x32xf32> to vector<2x8x8xf32>
    %105 = arith.truncf %104 : vector<2x8x8xf32> to vector<2x8x8xbf16>
    %106 = vector.extract_strided_slice %42 {offsets = [0, 0, 16], sizes = [2, 8, 8], strides = [1, 1, 1]} : vector<2x8x32xf32> to vector<2x8x8xf32>
    %107 = arith.truncf %106 : vector<2x8x8xf32> to vector<2x8x8xbf16>
    "tpu.trace_start"() <{level = 10 : i32, message = "bqd,bkd->bqk"}> : () -> ()
    %cst_42 = arith.constant dense<0.000000e+00> : vector<2x8x8xf32>
    %108 = tpu.matmul %103, %105, %cst_42 {dimension_numbers = #tpu.dot_dimension_numbers<[2], [2], [1], [1], [0, 0, 0, 1, 1, 1], [0], [0]>} : vector<2x8x8xbf16>, vector<2x8x8xbf16>, vector<2x8x8xf32> -> vector<2x8x8xf32>
    "tpu.trace_stop"() : () -> ()
    %cst_43 = arith.constant 0.353553385 : f32
    %109 = vector.broadcast %cst_43 : f32 to vector<2x8x8xf32>
    %110 = arith.mulf %108, %109 : vector<2x8x8xf32>
    %111 = vector.broadcast %1 : vector<2x1x8xf32> to vector<2x8x8xf32>
    %112 = arith.addf %110, %111 : vector<2x8x8xf32>
    %cst_44 = arith.constant dense<0xFF800000> : vector<2x8xf32>
    %113 = vector.multi_reduction <maximumf>, %112, %cst_44 [2] : vector<2x8x8xf32> to vector<2x8xf32>
    %114 = vector.shape_cast %113 : vector<2x8xf32> to vector<2x8x1xf32>
    %115 = vector.broadcast %114 : vector<2x8x1xf32> to vector<2x8x8xf32>
    %116 = arith.subf %112, %115 : vector<2x8x8xf32>
    %117 = math.exp %116 : vector<2x8x8xf32>
    %cst_45 = arith.constant dense<0.000000e+00> : vector<2x8xf32>
    %118 = vector.multi_reduction <add>, %117, %cst_45 [2] : vector<2x8x8xf32> to vector<2x8xf32>
    %119 = vector.shape_cast %118 : vector<2x8xf32> to vector<2x8x1xf32>
    %120 = tpu.reciprocal %119 {approx = true} : vector<2x8x1xf32> -> vector<2x8x1xf32>
    %121 = vector.broadcast %120 : vector<2x8x1xf32> to vector<2x8x8xf32>
    %122 = arith.mulf %117, %121 : vector<2x8x8xf32>
    %123 = arith.truncf %122 : vector<2x8x8xf32> to vector<2x8x8xbf16>
    "tpu.trace_start"() <{level = 10 : i32, message = "bqk,bkd->bqd"}> : () -> ()
    %cst_46 = arith.constant dense<0.000000e+00> : vector<2x8x8xf32>
    %124 = tpu.matmul %123, %107, %cst_46 {dimension_numbers = #tpu.dot_dimension_numbers<[2], [1], [1], [2], [0, 0, 0, 1, 1, 2], [0], [0]>} : vector<2x8x8xbf16>, vector<2x8x8xbf16>, vector<2x8x8xf32> -> vector<2x8x8xf32>
    "tpu.trace_stop"() : () -> ()
    %125 = vector.shape_cast %124 : vector<2x8x8xf32> to vector<16x8xf32>
    %126 = arith.truncf %125 : vector<16x8xf32> to vector<16x8xbf16>
    %c0_47 = arith.constant 0 : index
    %c2 = arith.constant 2 : index
    %c0_48 = arith.constant 0 : index
    %c0_49 = arith.constant 0 : index
    %127 = vector.load %arg7[%c0_47, %c2, %c0_48, %c0_49] : memref<2x4x8x32xbf16, #tpu.memory_space<vmem>>, vector<1x1x8x32xbf16>
    %128 = vector.shape_cast %127 : vector<1x1x8x32xbf16> to vector<8x32xbf16>
    %cst_50 = arith.constant dense<0.000000e+00> : vector<16x32xf32>
    %129 = tpu.matmul %126, %128, %cst_50 {dimension_numbers = #tpu.dot_dimension_numbers<[1], [0], [0], [1], [0, 0, 1, 1], [], []>} : vector<16x8xbf16>, vector<8x32xbf16>, vector<16x32xf32> -> vector<16x32xf32>
    %130 = arith.addf %101, %129 : vector<16x32xf32>
    %131 = vector.extract_strided_slice %38 {offsets = [0, 0, 24], sizes = [2, 8, 8], strides = [1, 1, 1]} : vector<2x8x32xf32> to vector<2x8x8xf32>
    %132 = arith.truncf %131 : vector<2x8x8xf32> to vector<2x8x8xbf16>
    %133 = vector.extract_strided_slice %40 {offsets = [0, 0, 24], sizes = [2, 8, 8], strides = [1, 1, 1]} : vector<2x8x32xf32> to vector<2x8x8xf32>
    %134 = arith.truncf %133 : vector<2x8x8xf32> to vector<2x8x8xbf16>
    %135 = vector.extract_strided_slice %42 {offsets = [0, 0, 24], sizes = [2, 8, 8], strides = [1, 1, 1]} : vector<2x8x32xf32> to vector<2x8x8xf32>
    %136 = arith.truncf %135 : vector<2x8x8xf32> to vector<2x8x8xbf16>
    "tpu.trace_start"() <{level = 10 : i32, message = "bqd,bkd->bqk"}> : () -> ()
    %cst_51 = arith.constant dense<0.000000e+00> : vector<2x8x8xf32>
    %137 = tpu.matmul %132, %134, %cst_51 {dimension_numbers = #tpu.dot_dimension_numbers<[2], [2], [1], [1], [0, 0, 0, 1, 1, 1], [0], [0]>} : vector<2x8x8xbf16>, vector<2x8x8xbf16>, vector<2x8x8xf32> -> vector<2x8x8xf32>
    "tpu.trace_stop"() : () -> ()
    %cst_52 = arith.constant 0.353553385 : f32
    %138 = vector.broadcast %cst_52 : f32 to vector<2x8x8xf32>
    %139 = arith.mulf %137, %138 : vector<2x8x8xf32>
    %140 = vector.broadcast %1 : vector<2x1x8xf32> to vector<2x8x8xf32>
    %141 = arith.addf %139, %140 : vector<2x8x8xf32>
    %cst_53 = arith.constant dense<0xFF800000> : vector<2x8xf32>
    %142 = vector.multi_reduction <maximumf>, %141, %cst_53 [2] : vector<2x8x8xf32> to vector<2x8xf32>
    %143 = vector.shape_cast %142 : vector<2x8xf32> to vector<2x8x1xf32>
    %144 = vector.broadcast %143 : vector<2x8x1xf32> to vector<2x8x8xf32>
    %145 = arith.subf %141, %144 : vector<2x8x8xf32>
    %146 = math.exp %145 : vector<2x8x8xf32>
    %cst_54 = arith.constant dense<0.000000e+00> : vector<2x8xf32>
    %147 = vector.multi_reduction <add>, %146, %cst_54 [2] : vector<2x8x8xf32> to vector<2x8xf32>
    %148 = vector.shape_cast %147 : vector<2x8xf32> to vector<2x8x1xf32>
    %149 = tpu.reciprocal %148 {approx = true} : vector<2x8x1xf32> -> vector<2x8x1xf32>
    %150 = vector.broadcast %149 : vector<2x8x1xf32> to vector<2x8x8xf32>
    %151 = arith.mulf %146, %150 : vector<2x8x8xf32>
    %152 = arith.truncf %151 : vector<2x8x8xf32> to vector<2x8x8xbf16>
    "tpu.trace_start"() <{level = 10 : i32, message = "bqk,bkd->bqd"}> : () -> ()
    %cst_55 = arith.constant dense<0.000000e+00> : vector<2x8x8xf32>
    %153 = tpu.matmul %152, %136, %cst_55 {dimension_numbers = #tpu.dot_dimension_numbers<[2], [1], [1], [2], [0, 0, 0, 1, 1, 2], [0], [0]>} : vector<2x8x8xbf16>, vector<2x8x8xbf16>, vector<2x8x8xf32> -> vector<2x8x8xf32>
    "tpu.trace_stop"() : () -> ()
    %154 = vector.shape_cast %153 : vector<2x8x8xf32> to vector<16x8xf32>
    %155 = arith.truncf %154 : vector<16x8xf32> to vector<16x8xbf16>
    %c0_56 = arith.constant 0 : index
    %c3 = arith.constant 3 : index
    %c0_57 = arith.constant 0 : index
    %c0_58 = arith.constant 0 : index
    %156 = vector.load %arg7[%c0_56, %c3, %c0_57, %c0_58] : memref<2x4x8x32xbf16, #tpu.memory_space<vmem>>, vector<1x1x8x32xbf16>
    %157 = vector.shape_cast %156 : vector<1x1x8x32xbf16> to vector<8x32xbf16>
    %cst_59 = arith.constant dense<0.000000e+00> : vector<16x32xf32>
    %158 = tpu.matmul %155, %157, %cst_59 {dimension_numbers = #tpu.dot_dimension_numbers<[1], [0], [0], [1], [0, 0, 1, 1], [], []>} : vector<16x8xbf16>, vector<8x32xbf16>, vector<16x32xf32> -> vector<16x32xf32>
    %159 = arith.addf %130, %158 : vector<16x32xf32>
    %c0_60 = arith.constant 0 : index
    %c0_61 = arith.constant 0 : index
    %c0_62 = arith.constant 0 : index
    %160 = vector.load %arg8[%c0_60, %c0_61, %c0_62] : memref<2x1x32xf32, #tpu.memory_space<vmem>>, vector<1x1x32xf32>
    %161 = vector.shape_cast %160 : vector<1x1x32xf32> to vector<1x32xf32>
    %162 = vector.broadcast %161 : vector<1x32xf32> to vector<16x32xf32>
    %163 = arith.addf %159, %162 : vector<16x32xf32>
    %164 = arith.addf %28, %163 : vector<16x32xf32>
    %c0_63 = arith.constant 0 : index
    %c0_64 = arith.constant 0 : index
    %c0_65 = arith.constant 0 : index
    %165 = vector.load %arg9[%c0_63, %c0_64, %c0_65] : memref<2x1x32xf32, #tpu.memory_space<vmem>>, vector<1x1x32xf32>
    %166 = vector.shape_cast %165 : vector<1x1x32xf32> to vector<1x32xf32>
    %c0_66 = arith.constant 0 : index
    %c0_67 = arith.constant 0 : index
    %c0_68 = arith.constant 0 : index
    %167 = vector.load %arg10[%c0_66, %c0_67, %c0_68] : memref<2x1x32xf32, #tpu.memory_space<vmem>>, vector<1x1x32xf32>
    %168 = vector.shape_cast %167 : vector<1x1x32xf32> to vector<1x32xf32>
    %cst_69 = arith.constant dense<0.000000e+00> : vector<16xf32>
    %169 = vector.multi_reduction <add>, %164, %cst_69 [1] : vector<16x32xf32> to vector<16xf32>
    %170 = vector.shape_cast %169 : vector<16xf32> to vector<16x1xf32>
    %cst_70 = arith.constant 3.200000e+01 : f32
    %171 = vector.broadcast %cst_70 : f32 to vector<16x1xf32>
    %172 = arith.divf %170, %171 : vector<16x1xf32>
    %173 = vector.broadcast %172 : vector<16x1xf32> to vector<16x32xf32>
    %174 = arith.subf %164, %173 : vector<16x32xf32>
    %175 = arith.mulf %174, %174 : vector<16x32xf32>
    %cst_71 = arith.constant dense<0.000000e+00> : vector<16xf32>
    %176 = vector.multi_reduction <add>, %175, %cst_71 [1] : vector<16x32xf32> to vector<16xf32>
    %177 = vector.shape_cast %176 : vector<16xf32> to vector<16x1xf32>
    %cst_72 = arith.constant 3.200000e+01 : f32
    %178 = vector.broadcast %cst_72 : f32 to vector<16x1xf32>
    %179 = arith.divf %177, %178 : vector<16x1xf32>
    %180 = vector.broadcast %172 : vector<16x1xf32> to vector<16x32xf32>
    %181 = arith.subf %164, %180 : vector<16x32xf32>
    %cst_73 = arith.constant 9.99999996E-13 : f32
    %182 = vector.broadcast %cst_73 : f32 to vector<16x1xf32>
    %183 = arith.addf %179, %182 : vector<16x1xf32>
    %184 = math.rsqrt %183 : vector<16x1xf32>
    %185 = vector.broadcast %184 : vector<16x1xf32> to vector<16x32xf32>
    %186 = arith.mulf %181, %185 : vector<16x32xf32>
    %187 = vector.broadcast %166 : vector<1x32xf32> to vector<16x32xf32>
    %188 = arith.mulf %186, %187 : vector<16x32xf32>
    %189 = vector.broadcast %168 : vector<1x32xf32> to vector<16x32xf32>
    %190 = arith.addf %188, %189 : vector<16x32xf32>
    %191 = arith.truncf %190 : vector<16x32xf32> to vector<16x32xbf16>
    %c0_74 = arith.constant 0 : index
    %c0_75 = arith.constant 0 : index
    %c0_76 = arith.constant 0 : index
    %192 = vector.load %arg11[%c0_74, %c0_75, %c0_76] : memref<2x32x128xbf16, #tpu.memory_space<vmem>>, vector<1x32x128xbf16>
    %193 = vector.shape_cast %192 : vector<1x32x128xbf16> to vector<32x128xbf16>
    %cst_77 = arith.constant dense<0.000000e+00> : vector<16x128xf32>
    %194 = tpu.matmul %191, %193, %cst_77 {dimension_numbers = #tpu.dot_dimension_numbers<[1], [0], [0], [1], [0, 0, 1, 1], [], []>} : vector<16x32xbf16>, vector<32x128xbf16>, vector<16x128xf32> -> vector<16x128xf32>
    %c0_78 = arith.constant 0 : index
    %c0_79 = arith.constant 0 : index
    %c0_80 = arith.constant 0 : index
    %195 = vector.load %arg12[%c0_78, %c0_79, %c0_80] : memref<2x1x128xf32, #tpu.memory_space<vmem>>, vector<1x1x128xf32>
    %196 = vector.shape_cast %195 : vector<1x1x128xf32> to vector<1x128xf32>
    %197 = vector.broadcast %196 : vector<1x128xf32> to vector<16x128xf32>
    %198 = arith.addf %194, %197 : vector<16x128xf32>
    %199 = arith.mulf %198, %198 : vector<16x128xf32>
    %200 = arith.mulf %198, %199 : vector<16x128xf32>
    %cst_81 = arith.constant 4.471500e-02 : f32
    %201 = vector.broadcast %cst_81 : f32 to vector<16x128xf32>
    %202 = arith.mulf %201, %200 : vector<16x128xf32>
    %203 = arith.addf %198, %202 : vector<16x128xf32>
    %cst_82 = arith.constant 0.797884583 : f32
    %204 = vector.broadcast %cst_82 : f32 to vector<16x128xf32>
    %205 = arith.mulf %204, %203 : vector<16x128xf32>
    %206 = math.tanh %205 : vector<16x128xf32>
    %cst_83 = arith.constant 1.000000e+00 : f32
    %207 = vector.broadcast %cst_83 : f32 to vector<16x128xf32>
    %208 = arith.addf %207, %206 : vector<16x128xf32>
    %cst_84 = arith.constant 5.000000e-01 : f32
    %209 = vector.broadcast %cst_84 : f32 to vector<16x128xf32>
    %210 = arith.mulf %209, %208 : vector<16x128xf32>
    %211 = arith.mulf %198, %210 : vector<16x128xf32>
    %212 = arith.truncf %211 : vector<16x128xf32> to vector<16x128xbf16>
    %c0_85 = arith.constant 0 : index
    %c0_86 = arith.constant 0 : index
    %c0_87 = arith.constant 0 : index
    %213 = vector.load %arg13[%c0_85, %c0_86, %c0_87] : memref<2x128x32xbf16, #tpu.memory_space<vmem>>, vector<1x128x32xbf16>
    %214 = vector.shape_cast %213 : vector<1x128x32xbf16> to vector<128x32xbf16>
    %cst_88 = arith.constant dense<0.000000e+00> : vector<16x32xf32>
    %215 = tpu.matmul %212, %214, %cst_88 {dimension_numbers = #tpu.dot_dimension_numbers<[1], [0], [0], [1], [0, 0, 1, 1], [], []>} : vector<16x128xbf16>, vector<128x32xbf16>, vector<16x32xf32> -> vector<16x32xf32>
    %c0_89 = arith.constant 0 : index
    %c0_90 = arith.constant 0 : index
    %c0_91 = arith.constant 0 : index
    %216 = vector.load %arg14[%c0_89, %c0_90, %c0_91] : memref<2x1x32xf32, #tpu.memory_space<vmem>>, vector<1x1x32xf32>
    %217 = vector.shape_cast %216 : vector<1x1x32xf32> to vector<1x32xf32>
    %218 = vector.broadcast %217 : vector<1x32xf32> to vector<16x32xf32>
    %219 = arith.addf %215, %218 : vector<16x32xf32>
    %220 = arith.addf %190, %219 : vector<16x32xf32>
    %c0_92 = arith.constant 0 : index
    %c0_93 = arith.constant 0 : index
    %c0_94 = arith.constant 0 : index
    %221 = vector.load %arg15[%c0_92, %c0_93, %c0_94] : memref<2x1x32xf32, #tpu.memory_space<vmem>>, vector<1x1x32xf32>
    %222 = vector.shape_cast %221 : vector<1x1x32xf32> to vector<1x32xf32>
    %c0_95 = arith.constant 0 : index
    %c0_96 = arith.constant 0 : index
    %c0_97 = arith.constant 0 : index
    %223 = vector.load %arg16[%c0_95, %c0_96, %c0_97] : memref<2x1x32xf32, #tpu.memory_space<vmem>>, vector<1x1x32xf32>
    %224 = vector.shape_cast %223 : vector<1x1x32xf32> to vector<1x32xf32>
    %cst_98 = arith.constant dense<0.000000e+00> : vector<16xf32>
    %225 = vector.multi_reduction <add>, %220, %cst_98 [1] : vector<16x32xf32> to vector<16xf32>
    %226 = vector.shape_cast %225 : vector<16xf32> to vector<16x1xf32>
    %cst_99 = arith.constant 3.200000e+01 : f32
    %227 = vector.broadcast %cst_99 : f32 to vector<16x1xf32>
    %228 = arith.divf %226, %227 : vector<16x1xf32>
    %229 = vector.broadcast %228 : vector<16x1xf32> to vector<16x32xf32>
    %230 = arith.subf %220, %229 : vector<16x32xf32>
    %231 = arith.mulf %230, %230 : vector<16x32xf32>
    %cst_100 = arith.constant dense<0.000000e+00> : vector<16xf32>
    %232 = vector.multi_reduction <add>, %231, %cst_100 [1] : vector<16x32xf32> to vector<16xf32>
    %233 = vector.shape_cast %232 : vector<16xf32> to vector<16x1xf32>
    %cst_101 = arith.constant 3.200000e+01 : f32
    %234 = vector.broadcast %cst_101 : f32 to vector<16x1xf32>
    %235 = arith.divf %233, %234 : vector<16x1xf32>
    %236 = vector.broadcast %228 : vector<16x1xf32> to vector<16x32xf32>
    %237 = arith.subf %220, %236 : vector<16x32xf32>
    %cst_102 = arith.constant 9.99999996E-13 : f32
    %238 = vector.broadcast %cst_102 : f32 to vector<16x1xf32>
    %239 = arith.addf %235, %238 : vector<16x1xf32>
    %240 = math.rsqrt %239 : vector<16x1xf32>
    %241 = vector.broadcast %240 : vector<16x1xf32> to vector<16x32xf32>
    %242 = arith.mulf %237, %241 : vector<16x32xf32>
    %243 = vector.broadcast %222 : vector<1x32xf32> to vector<16x32xf32>
    %244 = arith.mulf %242, %243 : vector<16x32xf32>
    %245 = vector.broadcast %224 : vector<1x32xf32> to vector<16x32xf32>
    %246 = arith.addf %244, %245 : vector<16x32xf32>
    %247 = arith.truncf %246 : vector<16x32xf32> to vector<16x32xbf16>
    %c1_103 = arith.constant 1 : index
    %c0_104 = arith.constant 0 : index
    %c0_105 = arith.constant 0 : index
    %248 = vector.load %arg5[%c1_103, %c0_104, %c0_105] : memref<2x32x96xbf16, #tpu.memory_space<vmem>>, vector<1x32x96xbf16>
    %249 = vector.shape_cast %248 : vector<1x32x96xbf16> to vector<32x96xbf16>
    %cst_106 = arith.constant dense<0.000000e+00> : vector<16x96xf32>
    %250 = tpu.matmul %247, %249, %cst_106 {dimension_numbers = #tpu.dot_dimension_numbers<[1], [0], [0], [1], [0, 0, 1, 1], [], []>} : vector<16x32xbf16>, vector<32x96xbf16>, vector<16x96xf32> -> vector<16x96xf32>
    %c1_107 = arith.constant 1 : index
    %c0_108 = arith.constant 0 : index
    %c0_109 = arith.constant 0 : index
    %251 = vector.load %arg6[%c1_107, %c0_108, %c0_109] : memref<2x1x96xf32, #tpu.memory_space<vmem>>, vector<1x1x96xf32>
    %252 = vector.shape_cast %251 : vector<1x1x96xf32> to vector<1x96xf32>
    %253 = vector.broadcast %252 : vector<1x96xf32> to vector<16x96xf32>
    %254 = arith.addf %250, %253 : vector<16x96xf32>
    %255 = vector.extract_strided_slice %254 {offsets = [0, 0], sizes = [16, 32], strides = [1, 1]} : vector<16x96xf32> to vector<16x32xf32>
    %256 = vector.shape_cast %255 : vector<16x32xf32> to vector<2x8x32xf32>
    %257 = vector.extract_strided_slice %254 {offsets = [0, 32], sizes = [16, 32], strides = [1, 1]} : vector<16x96xf32> to vector<16x32xf32>
    %258 = vector.shape_cast %257 : vector<16x32xf32> to vector<2x8x32xf32>
    %259 = vector.extract_strided_slice %254 {offsets = [0, 64], sizes = [16, 32], strides = [1, 1]} : vector<16x96xf32> to vector<16x32xf32>
    %260 = vector.shape_cast %259 : vector<16x32xf32> to vector<2x8x32xf32>
    %cst_110 = arith.constant 0.000000e+00 : f32
    %261 = vector.broadcast %cst_110 : f32 to vector<16x32xf32>
    %262 = vector.extract_strided_slice %256 {offsets = [0, 0, 0], sizes = [2, 8, 8], strides = [1, 1, 1]} : vector<2x8x32xf32> to vector<2x8x8xf32>
    %263 = arith.truncf %262 : vector<2x8x8xf32> to vector<2x8x8xbf16>
    %264 = vector.extract_strided_slice %258 {offsets = [0, 0, 0], sizes = [2, 8, 8], strides = [1, 1, 1]} : vector<2x8x32xf32> to vector<2x8x8xf32>
    %265 = arith.truncf %264 : vector<2x8x8xf32> to vector<2x8x8xbf16>
    %266 = vector.extract_strided_slice %260 {offsets = [0, 0, 0], sizes = [2, 8, 8], strides = [1, 1, 1]} : vector<2x8x32xf32> to vector<2x8x8xf32>
    %267 = arith.truncf %266 : vector<2x8x8xf32> to vector<2x8x8xbf16>
    "tpu.trace_start"() <{level = 10 : i32, message = "bqd,bkd->bqk"}> : () -> ()
    %cst_111 = arith.constant dense<0.000000e+00> : vector<2x8x8xf32>
    %268 = tpu.matmul %263, %265, %cst_111 {dimension_numbers = #tpu.dot_dimension_numbers<[2], [2], [1], [1], [0, 0, 0, 1, 1, 1], [0], [0]>} : vector<2x8x8xbf16>, vector<2x8x8xbf16>, vector<2x8x8xf32> -> vector<2x8x8xf32>
    "tpu.trace_stop"() : () -> ()
    %cst_112 = arith.constant 0.353553385 : f32
    %269 = vector.broadcast %cst_112 : f32 to vector<2x8x8xf32>
    %270 = arith.mulf %268, %269 : vector<2x8x8xf32>
    %271 = vector.broadcast %1 : vector<2x1x8xf32> to vector<2x8x8xf32>
    %272 = arith.addf %270, %271 : vector<2x8x8xf32>
    %cst_113 = arith.constant dense<0xFF800000> : vector<2x8xf32>
    %273 = vector.multi_reduction <maximumf>, %272, %cst_113 [2] : vector<2x8x8xf32> to vector<2x8xf32>
    %274 = vector.shape_cast %273 : vector<2x8xf32> to vector<2x8x1xf32>
    %275 = vector.broadcast %274 : vector<2x8x1xf32> to vector<2x8x8xf32>
    %276 = arith.subf %272, %275 : vector<2x8x8xf32>
    %277 = math.exp %276 : vector<2x8x8xf32>
    %cst_114 = arith.constant dense<0.000000e+00> : vector<2x8xf32>
    %278 = vector.multi_reduction <add>, %277, %cst_114 [2] : vector<2x8x8xf32> to vector<2x8xf32>
    %279 = vector.shape_cast %278 : vector<2x8xf32> to vector<2x8x1xf32>
    %280 = tpu.reciprocal %279 {approx = true} : vector<2x8x1xf32> -> vector<2x8x1xf32>
    %281 = vector.broadcast %280 : vector<2x8x1xf32> to vector<2x8x8xf32>
    %282 = arith.mulf %277, %281 : vector<2x8x8xf32>
    %283 = arith.truncf %282 : vector<2x8x8xf32> to vector<2x8x8xbf16>
    "tpu.trace_start"() <{level = 10 : i32, message = "bqk,bkd->bqd"}> : () -> ()
    %cst_115 = arith.constant dense<0.000000e+00> : vector<2x8x8xf32>
    %284 = tpu.matmul %283, %267, %cst_115 {dimension_numbers = #tpu.dot_dimension_numbers<[2], [1], [1], [2], [0, 0, 0, 1, 1, 2], [0], [0]>} : vector<2x8x8xbf16>, vector<2x8x8xbf16>, vector<2x8x8xf32> -> vector<2x8x8xf32>
    "tpu.trace_stop"() : () -> ()
    %285 = vector.shape_cast %284 : vector<2x8x8xf32> to vector<16x8xf32>
    %286 = arith.truncf %285 : vector<16x8xf32> to vector<16x8xbf16>
    %c1_116 = arith.constant 1 : index
    %c0_117 = arith.constant 0 : index
    %c0_118 = arith.constant 0 : index
    %c0_119 = arith.constant 0 : index
    %287 = vector.load %arg7[%c1_116, %c0_117, %c0_118, %c0_119] : memref<2x4x8x32xbf16, #tpu.memory_space<vmem>>, vector<1x1x8x32xbf16>
    %288 = vector.shape_cast %287 : vector<1x1x8x32xbf16> to vector<8x32xbf16>
    %cst_120 = arith.constant dense<0.000000e+00> : vector<16x32xf32>
    %289 = tpu.matmul %286, %288, %cst_120 {dimension_numbers = #tpu.dot_dimension_numbers<[1], [0], [0], [1], [0, 0, 1, 1], [], []>} : vector<16x8xbf16>, vector<8x32xbf16>, vector<16x32xf32> -> vector<16x32xf32>
    %290 = arith.addf %261, %289 : vector<16x32xf32>
    %291 = vector.extract_strided_slice %256 {offsets = [0, 0, 8], sizes = [2, 8, 8], strides = [1, 1, 1]} : vector<2x8x32xf32> to vector<2x8x8xf32>
    %292 = arith.truncf %291 : vector<2x8x8xf32> to vector<2x8x8xbf16>
    %293 = vector.extract_strided_slice %258 {offsets = [0, 0, 8], sizes = [2, 8, 8], strides = [1, 1, 1]} : vector<2x8x32xf32> to vector<2x8x8xf32>
    %294 = arith.truncf %293 : vector<2x8x8xf32> to vector<2x8x8xbf16>
    %295 = vector.extract_strided_slice %260 {offsets = [0, 0, 8], sizes = [2, 8, 8], strides = [1, 1, 1]} : vector<2x8x32xf32> to vector<2x8x8xf32>
    %296 = arith.truncf %295 : vector<2x8x8xf32> to vector<2x8x8xbf16>
    "tpu.trace_start"() <{level = 10 : i32, message = "bqd,bkd->bqk"}> : () -> ()
    %cst_121 = arith.constant dense<0.000000e+00> : vector<2x8x8xf32>
    %297 = tpu.matmul %292, %294, %cst_121 {dimension_numbers = #tpu.dot_dimension_numbers<[2], [2], [1], [1], [0, 0, 0, 1, 1, 1], [0], [0]>} : vector<2x8x8xbf16>, vector<2x8x8xbf16>, vector<2x8x8xf32> -> vector<2x8x8xf32>
    "tpu.trace_stop"() : () -> ()
    %cst_122 = arith.constant 0.353553385 : f32
    %298 = vector.broadcast %cst_122 : f32 to vector<2x8x8xf32>
    %299 = arith.mulf %297, %298 : vector<2x8x8xf32>
    %300 = vector.broadcast %1 : vector<2x1x8xf32> to vector<2x8x8xf32>
    %301 = arith.addf %299, %300 : vector<2x8x8xf32>
    %cst_123 = arith.constant dense<0xFF800000> : vector<2x8xf32>
    %302 = vector.multi_reduction <maximumf>, %301, %cst_123 [2] : vector<2x8x8xf32> to vector<2x8xf32>
    %303 = vector.shape_cast %302 : vector<2x8xf32> to vector<2x8x1xf32>
    %304 = vector.broadcast %303 : vector<2x8x1xf32> to vector<2x8x8xf32>
    %305 = arith.subf %301, %304 : vector<2x8x8xf32>
    %306 = math.exp %305 : vector<2x8x8xf32>
    %cst_124 = arith.constant dense<0.000000e+00> : vector<2x8xf32>
    %307 = vector.multi_reduction <add>, %306, %cst_124 [2] : vector<2x8x8xf32> to vector<2x8xf32>
    %308 = vector.shape_cast %307 : vector<2x8xf32> to vector<2x8x1xf32>
    %309 = tpu.reciprocal %308 {approx = true} : vector<2x8x1xf32> -> vector<2x8x1xf32>
    %310 = vector.broadcast %309 : vector<2x8x1xf32> to vector<2x8x8xf32>
    %311 = arith.mulf %306, %310 : vector<2x8x8xf32>
    %312 = arith.truncf %311 : vector<2x8x8xf32> to vector<2x8x8xbf16>
    "tpu.trace_start"() <{level = 10 : i32, message = "bqk,bkd->bqd"}> : () -> ()
    %cst_125 = arith.constant dense<0.000000e+00> : vector<2x8x8xf32>
    %313 = tpu.matmul %312, %296, %cst_125 {dimension_numbers = #tpu.dot_dimension_numbers<[2], [1], [1], [2], [0, 0, 0, 1, 1, 2], [0], [0]>} : vector<2x8x8xbf16>, vector<2x8x8xbf16>, vector<2x8x8xf32> -> vector<2x8x8xf32>
    "tpu.trace_stop"() : () -> ()
    %314 = vector.shape_cast %313 : vector<2x8x8xf32> to vector<16x8xf32>
    %315 = arith.truncf %314 : vector<16x8xf32> to vector<16x8xbf16>
    %c1_126 = arith.constant 1 : index
    %c1_127 = arith.constant 1 : index
    %c0_128 = arith.constant 0 : index
    %c0_129 = arith.constant 0 : index
    %316 = vector.load %arg7[%c1_126, %c1_127, %c0_128, %c0_129] : memref<2x4x8x32xbf16, #tpu.memory_space<vmem>>, vector<1x1x8x32xbf16>
    %317 = vector.shape_cast %316 : vector<1x1x8x32xbf16> to vector<8x32xbf16>
    %cst_130 = arith.constant dense<0.000000e+00> : vector<16x32xf32>
    %318 = tpu.matmul %315, %317, %cst_130 {dimension_numbers = #tpu.dot_dimension_numbers<[1], [0], [0], [1], [0, 0, 1, 1], [], []>} : vector<16x8xbf16>, vector<8x32xbf16>, vector<16x32xf32> -> vector<16x32xf32>
    %319 = arith.addf %290, %318 : vector<16x32xf32>
    %320 = vector.extract_strided_slice %256 {offsets = [0, 0, 16], sizes = [2, 8, 8], strides = [1, 1, 1]} : vector<2x8x32xf32> to vector<2x8x8xf32>
    %321 = arith.truncf %320 : vector<2x8x8xf32> to vector<2x8x8xbf16>
    %322 = vector.extract_strided_slice %258 {offsets = [0, 0, 16], sizes = [2, 8, 8], strides = [1, 1, 1]} : vector<2x8x32xf32> to vector<2x8x8xf32>
    %323 = arith.truncf %322 : vector<2x8x8xf32> to vector<2x8x8xbf16>
    %324 = vector.extract_strided_slice %260 {offsets = [0, 0, 16], sizes = [2, 8, 8], strides = [1, 1, 1]} : vector<2x8x32xf32> to vector<2x8x8xf32>
    %325 = arith.truncf %324 : vector<2x8x8xf32> to vector<2x8x8xbf16>
    "tpu.trace_start"() <{level = 10 : i32, message = "bqd,bkd->bqk"}> : () -> ()
    %cst_131 = arith.constant dense<0.000000e+00> : vector<2x8x8xf32>
    %326 = tpu.matmul %321, %323, %cst_131 {dimension_numbers = #tpu.dot_dimension_numbers<[2], [2], [1], [1], [0, 0, 0, 1, 1, 1], [0], [0]>} : vector<2x8x8xbf16>, vector<2x8x8xbf16>, vector<2x8x8xf32> -> vector<2x8x8xf32>
    "tpu.trace_stop"() : () -> ()
    %cst_132 = arith.constant 0.353553385 : f32
    %327 = vector.broadcast %cst_132 : f32 to vector<2x8x8xf32>
    %328 = arith.mulf %326, %327 : vector<2x8x8xf32>
    %329 = vector.broadcast %1 : vector<2x1x8xf32> to vector<2x8x8xf32>
    %330 = arith.addf %328, %329 : vector<2x8x8xf32>
    %cst_133 = arith.constant dense<0xFF800000> : vector<2x8xf32>
    %331 = vector.multi_reduction <maximumf>, %330, %cst_133 [2] : vector<2x8x8xf32> to vector<2x8xf32>
    %332 = vector.shape_cast %331 : vector<2x8xf32> to vector<2x8x1xf32>
    %333 = vector.broadcast %332 : vector<2x8x1xf32> to vector<2x8x8xf32>
    %334 = arith.subf %330, %333 : vector<2x8x8xf32>
    %335 = math.exp %334 : vector<2x8x8xf32>
    %cst_134 = arith.constant dense<0.000000e+00> : vector<2x8xf32>
    %336 = vector.multi_reduction <add>, %335, %cst_134 [2] : vector<2x8x8xf32> to vector<2x8xf32>
    %337 = vector.shape_cast %336 : vector<2x8xf32> to vector<2x8x1xf32>
    %338 = tpu.reciprocal %337 {approx = true} : vector<2x8x1xf32> -> vector<2x8x1xf32>
    %339 = vector.broadcast %338 : vector<2x8x1xf32> to vector<2x8x8xf32>
    %340 = arith.mulf %335, %339 : vector<2x8x8xf32>
    %341 = arith.truncf %340 : vector<2x8x8xf32> to vector<2x8x8xbf16>
    "tpu.trace_start"() <{level = 10 : i32, message = "bqk,bkd->bqd"}> : () -> ()
    %cst_135 = arith.constant dense<0.000000e+00> : vector<2x8x8xf32>
    %342 = tpu.matmul %341, %325, %cst_135 {dimension_numbers = #tpu.dot_dimension_numbers<[2], [1], [1], [2], [0, 0, 0, 1, 1, 2], [0], [0]>} : vector<2x8x8xbf16>, vector<2x8x8xbf16>, vector<2x8x8xf32> -> vector<2x8x8xf32>
    "tpu.trace_stop"() : () -> ()
    %343 = vector.shape_cast %342 : vector<2x8x8xf32> to vector<16x8xf32>
    %344 = arith.truncf %343 : vector<16x8xf32> to vector<16x8xbf16>
    %c1_136 = arith.constant 1 : index
    %c2_137 = arith.constant 2 : index
    %c0_138 = arith.constant 0 : index
    %c0_139 = arith.constant 0 : index
    %345 = vector.load %arg7[%c1_136, %c2_137, %c0_138, %c0_139] : memref<2x4x8x32xbf16, #tpu.memory_space<vmem>>, vector<1x1x8x32xbf16>
    %346 = vector.shape_cast %345 : vector<1x1x8x32xbf16> to vector<8x32xbf16>
    %cst_140 = arith.constant dense<0.000000e+00> : vector<16x32xf32>
    %347 = tpu.matmul %344, %346, %cst_140 {dimension_numbers = #tpu.dot_dimension_numbers<[1], [0], [0], [1], [0, 0, 1, 1], [], []>} : vector<16x8xbf16>, vector<8x32xbf16>, vector<16x32xf32> -> vector<16x32xf32>
    %348 = arith.addf %319, %347 : vector<16x32xf32>
    %349 = vector.extract_strided_slice %256 {offsets = [0, 0, 24], sizes = [2, 8, 8], strides = [1, 1, 1]} : vector<2x8x32xf32> to vector<2x8x8xf32>
    %350 = arith.truncf %349 : vector<2x8x8xf32> to vector<2x8x8xbf16>
    %351 = vector.extract_strided_slice %258 {offsets = [0, 0, 24], sizes = [2, 8, 8], strides = [1, 1, 1]} : vector<2x8x32xf32> to vector<2x8x8xf32>
    %352 = arith.truncf %351 : vector<2x8x8xf32> to vector<2x8x8xbf16>
    %353 = vector.extract_strided_slice %260 {offsets = [0, 0, 24], sizes = [2, 8, 8], strides = [1, 1, 1]} : vector<2x8x32xf32> to vector<2x8x8xf32>
    %354 = arith.truncf %353 : vector<2x8x8xf32> to vector<2x8x8xbf16>
    "tpu.trace_start"() <{level = 10 : i32, message = "bqd,bkd->bqk"}> : () -> ()
    %cst_141 = arith.constant dense<0.000000e+00> : vector<2x8x8xf32>
    %355 = tpu.matmul %350, %352, %cst_141 {dimension_numbers = #tpu.dot_dimension_numbers<[2], [2], [1], [1], [0, 0, 0, 1, 1, 1], [0], [0]>} : vector<2x8x8xbf16>, vector<2x8x8xbf16>, vector<2x8x8xf32> -> vector<2x8x8xf32>
    "tpu.trace_stop"() : () -> ()
    %cst_142 = arith.constant 0.353553385 : f32
    %356 = vector.broadcast %cst_142 : f32 to vector<2x8x8xf32>
    %357 = arith.mulf %355, %356 : vector<2x8x8xf32>
    %358 = vector.broadcast %1 : vector<2x1x8xf32> to vector<2x8x8xf32>
    %359 = arith.addf %357, %358 : vector<2x8x8xf32>
    %cst_143 = arith.constant dense<0xFF800000> : vector<2x8xf32>
    %360 = vector.multi_reduction <maximumf>, %359, %cst_143 [2] : vector<2x8x8xf32> to vector<2x8xf32>
    %361 = vector.shape_cast %360 : vector<2x8xf32> to vector<2x8x1xf32>
    %362 = vector.broadcast %361 : vector<2x8x1xf32> to vector<2x8x8xf32>
    %363 = arith.subf %359, %362 : vector<2x8x8xf32>
    %364 = math.exp %363 : vector<2x8x8xf32>
    %cst_144 = arith.constant dense<0.000000e+00> : vector<2x8xf32>
    %365 = vector.multi_reduction <add>, %364, %cst_144 [2] : vector<2x8x8xf32> to vector<2x8xf32>
    %366 = vector.shape_cast %365 : vector<2x8xf32> to vector<2x8x1xf32>
    %367 = tpu.reciprocal %366 {approx = true} : vector<2x8x1xf32> -> vector<2x8x1xf32>
    %368 = vector.broadcast %367 : vector<2x8x1xf32> to vector<2x8x8xf32>
    %369 = arith.mulf %364, %368 : vector<2x8x8xf32>
    %370 = arith.truncf %369 : vector<2x8x8xf32> to vector<2x8x8xbf16>
    "tpu.trace_start"() <{level = 10 : i32, message = "bqk,bkd->bqd"}> : () -> ()
    %cst_145 = arith.constant dense<0.000000e+00> : vector<2x8x8xf32>
    %371 = tpu.matmul %370, %354, %cst_145 {dimension_numbers = #tpu.dot_dimension_numbers<[2], [1], [1], [2], [0, 0, 0, 1, 1, 2], [0], [0]>} : vector<2x8x8xbf16>, vector<2x8x8xbf16>, vector<2x8x8xf32> -> vector<2x8x8xf32>
    "tpu.trace_stop"() : () -> ()
    %372 = vector.shape_cast %371 : vector<2x8x8xf32> to vector<16x8xf32>
    %373 = arith.truncf %372 : vector<16x8xf32> to vector<16x8xbf16>
    %c1_146 = arith.constant 1 : index
    %c3_147 = arith.constant 3 : index
    %c0_148 = arith.constant 0 : index
    %c0_149 = arith.constant 0 : index
    %374 = vector.load %arg7[%c1_146, %c3_147, %c0_148, %c0_149] : memref<2x4x8x32xbf16, #tpu.memory_space<vmem>>, vector<1x1x8x32xbf16>
    %375 = vector.shape_cast %374 : vector<1x1x8x32xbf16> to vector<8x32xbf16>
    %cst_150 = arith.constant dense<0.000000e+00> : vector<16x32xf32>
    %376 = tpu.matmul %373, %375, %cst_150 {dimension_numbers = #tpu.dot_dimension_numbers<[1], [0], [0], [1], [0, 0, 1, 1], [], []>} : vector<16x8xbf16>, vector<8x32xbf16>, vector<16x32xf32> -> vector<16x32xf32>
    %377 = arith.addf %348, %376 : vector<16x32xf32>
    %c1_151 = arith.constant 1 : index
    %c0_152 = arith.constant 0 : index
    %c0_153 = arith.constant 0 : index
    %378 = vector.load %arg8[%c1_151, %c0_152, %c0_153] : memref<2x1x32xf32, #tpu.memory_space<vmem>>, vector<1x1x32xf32>
    %379 = vector.shape_cast %378 : vector<1x1x32xf32> to vector<1x32xf32>
    %380 = vector.broadcast %379 : vector<1x32xf32> to vector<16x32xf32>
    %381 = arith.addf %377, %380 : vector<16x32xf32>
    %382 = arith.addf %246, %381 : vector<16x32xf32>
    %c1_154 = arith.constant 1 : index
    %c0_155 = arith.constant 0 : index
    %c0_156 = arith.constant 0 : index
    %383 = vector.load %arg9[%c1_154, %c0_155, %c0_156] : memref<2x1x32xf32, #tpu.memory_space<vmem>>, vector<1x1x32xf32>
    %384 = vector.shape_cast %383 : vector<1x1x32xf32> to vector<1x32xf32>
    %c1_157 = arith.constant 1 : index
    %c0_158 = arith.constant 0 : index
    %c0_159 = arith.constant 0 : index
    %385 = vector.load %arg10[%c1_157, %c0_158, %c0_159] : memref<2x1x32xf32, #tpu.memory_space<vmem>>, vector<1x1x32xf32>
    %386 = vector.shape_cast %385 : vector<1x1x32xf32> to vector<1x32xf32>
    %cst_160 = arith.constant dense<0.000000e+00> : vector<16xf32>
    %387 = vector.multi_reduction <add>, %382, %cst_160 [1] : vector<16x32xf32> to vector<16xf32>
    %388 = vector.shape_cast %387 : vector<16xf32> to vector<16x1xf32>
    %cst_161 = arith.constant 3.200000e+01 : f32
    %389 = vector.broadcast %cst_161 : f32 to vector<16x1xf32>
    %390 = arith.divf %388, %389 : vector<16x1xf32>
    %391 = vector.broadcast %390 : vector<16x1xf32> to vector<16x32xf32>
    %392 = arith.subf %382, %391 : vector<16x32xf32>
    %393 = arith.mulf %392, %392 : vector<16x32xf32>
    %cst_162 = arith.constant dense<0.000000e+00> : vector<16xf32>
    %394 = vector.multi_reduction <add>, %393, %cst_162 [1] : vector<16x32xf32> to vector<16xf32>
    %395 = vector.shape_cast %394 : vector<16xf32> to vector<16x1xf32>
    %cst_163 = arith.constant 3.200000e+01 : f32
    %396 = vector.broadcast %cst_163 : f32 to vector<16x1xf32>
    %397 = arith.divf %395, %396 : vector<16x1xf32>
    %398 = vector.broadcast %390 : vector<16x1xf32> to vector<16x32xf32>
    %399 = arith.subf %382, %398 : vector<16x32xf32>
    %cst_164 = arith.constant 9.99999996E-13 : f32
    %400 = vector.broadcast %cst_164 : f32 to vector<16x1xf32>
    %401 = arith.addf %397, %400 : vector<16x1xf32>
    %402 = math.rsqrt %401 : vector<16x1xf32>
    %403 = vector.broadcast %402 : vector<16x1xf32> to vector<16x32xf32>
    %404 = arith.mulf %399, %403 : vector<16x32xf32>
    %405 = vector.broadcast %384 : vector<1x32xf32> to vector<16x32xf32>
    %406 = arith.mulf %404, %405 : vector<16x32xf32>
    %407 = vector.broadcast %386 : vector<1x32xf32> to vector<16x32xf32>
    %408 = arith.addf %406, %407 : vector<16x32xf32>
    %409 = arith.truncf %408 : vector<16x32xf32> to vector<16x32xbf16>
    %c1_165 = arith.constant 1 : index
    %c0_166 = arith.constant 0 : index
    %c0_167 = arith.constant 0 : index
    %410 = vector.load %arg11[%c1_165, %c0_166, %c0_167] : memref<2x32x128xbf16, #tpu.memory_space<vmem>>, vector<1x32x128xbf16>
    %411 = vector.shape_cast %410 : vector<1x32x128xbf16> to vector<32x128xbf16>
    %cst_168 = arith.constant dense<0.000000e+00> : vector<16x128xf32>
    %412 = tpu.matmul %409, %411, %cst_168 {dimension_numbers = #tpu.dot_dimension_numbers<[1], [0], [0], [1], [0, 0, 1, 1], [], []>} : vector<16x32xbf16>, vector<32x128xbf16>, vector<16x128xf32> -> vector<16x128xf32>
    %c1_169 = arith.constant 1 : index
    %c0_170 = arith.constant 0 : index
    %c0_171 = arith.constant 0 : index
    %413 = vector.load %arg12[%c1_169, %c0_170, %c0_171] : memref<2x1x128xf32, #tpu.memory_space<vmem>>, vector<1x1x128xf32>
    %414 = vector.shape_cast %413 : vector<1x1x128xf32> to vector<1x128xf32>
    %415 = vector.broadcast %414 : vector<1x128xf32> to vector<16x128xf32>
    %416 = arith.addf %412, %415 : vector<16x128xf32>
    %417 = arith.mulf %416, %416 : vector<16x128xf32>
    %418 = arith.mulf %416, %417 : vector<16x128xf32>
    %cst_172 = arith.constant 4.471500e-02 : f32
    %419 = vector.broadcast %cst_172 : f32 to vector<16x128xf32>
    %420 = arith.mulf %419, %418 : vector<16x128xf32>
    %421 = arith.addf %416, %420 : vector<16x128xf32>
    %cst_173 = arith.constant 0.797884583 : f32
    %422 = vector.broadcast %cst_173 : f32 to vector<16x128xf32>
    %423 = arith.mulf %422, %421 : vector<16x128xf32>
    %424 = math.tanh %423 : vector<16x128xf32>
    %cst_174 = arith.constant 1.000000e+00 : f32
    %425 = vector.broadcast %cst_174 : f32 to vector<16x128xf32>
    %426 = arith.addf %425, %424 : vector<16x128xf32>
    %cst_175 = arith.constant 5.000000e-01 : f32
    %427 = vector.broadcast %cst_175 : f32 to vector<16x128xf32>
    %428 = arith.mulf %427, %426 : vector<16x128xf32>
    %429 = arith.mulf %416, %428 : vector<16x128xf32>
    %430 = arith.truncf %429 : vector<16x128xf32> to vector<16x128xbf16>
    %c1_176 = arith.constant 1 : index
    %c0_177 = arith.constant 0 : index
    %c0_178 = arith.constant 0 : index
    %431 = vector.load %arg13[%c1_176, %c0_177, %c0_178] : memref<2x128x32xbf16, #tpu.memory_space<vmem>>, vector<1x128x32xbf16>
    %432 = vector.shape_cast %431 : vector<1x128x32xbf16> to vector<128x32xbf16>
    %cst_179 = arith.constant dense<0.000000e+00> : vector<16x32xf32>
    %433 = tpu.matmul %430, %432, %cst_179 {dimension_numbers = #tpu.dot_dimension_numbers<[1], [0], [0], [1], [0, 0, 1, 1], [], []>} : vector<16x128xbf16>, vector<128x32xbf16>, vector<16x32xf32> -> vector<16x32xf32>
    %c1_180 = arith.constant 1 : index
    %c0_181 = arith.constant 0 : index
    %c0_182 = arith.constant 0 : index
    %434 = vector.load %arg14[%c1_180, %c0_181, %c0_182] : memref<2x1x32xf32, #tpu.memory_space<vmem>>, vector<1x1x32xf32>
    %435 = vector.shape_cast %434 : vector<1x1x32xf32> to vector<1x32xf32>
    %436 = vector.broadcast %435 : vector<1x32xf32> to vector<16x32xf32>
    %437 = arith.addf %433, %436 : vector<16x32xf32>
    %438 = arith.addf %408, %437 : vector<16x32xf32>
    %c1_183 = arith.constant 1 : index
    %c0_184 = arith.constant 0 : index
    %c0_185 = arith.constant 0 : index
    %439 = vector.load %arg15[%c1_183, %c0_184, %c0_185] : memref<2x1x32xf32, #tpu.memory_space<vmem>>, vector<1x1x32xf32>
    %440 = vector.shape_cast %439 : vector<1x1x32xf32> to vector<1x32xf32>
    %c1_186 = arith.constant 1 : index
    %c0_187 = arith.constant 0 : index
    %c0_188 = arith.constant 0 : index
    %441 = vector.load %arg16[%c1_186, %c0_187, %c0_188] : memref<2x1x32xf32, #tpu.memory_space<vmem>>, vector<1x1x32xf32>
    %442 = vector.shape_cast %441 : vector<1x1x32xf32> to vector<1x32xf32>
    %cst_189 = arith.constant dense<0.000000e+00> : vector<16xf32>
    %443 = vector.multi_reduction <add>, %438, %cst_189 [1] : vector<16x32xf32> to vector<16xf32>
    %444 = vector.shape_cast %443 : vector<16xf32> to vector<16x1xf32>
    %cst_190 = arith.constant 3.200000e+01 : f32
    %445 = vector.broadcast %cst_190 : f32 to vector<16x1xf32>
    %446 = arith.divf %444, %445 : vector<16x1xf32>
    %447 = vector.broadcast %446 : vector<16x1xf32> to vector<16x32xf32>
    %448 = arith.subf %438, %447 : vector<16x32xf32>
    %449 = arith.mulf %448, %448 : vector<16x32xf32>
    %cst_191 = arith.constant dense<0.000000e+00> : vector<16xf32>
    %450 = vector.multi_reduction <add>, %449, %cst_191 [1] : vector<16x32xf32> to vector<16xf32>
    %451 = vector.shape_cast %450 : vector<16xf32> to vector<16x1xf32>
    %cst_192 = arith.constant 3.200000e+01 : f32
    %452 = vector.broadcast %cst_192 : f32 to vector<16x1xf32>
    %453 = arith.divf %451, %452 : vector<16x1xf32>
    %454 = vector.broadcast %446 : vector<16x1xf32> to vector<16x32xf32>
    %455 = arith.subf %438, %454 : vector<16x32xf32>
    %cst_193 = arith.constant 9.99999996E-13 : f32
    %456 = vector.broadcast %cst_193 : f32 to vector<16x1xf32>
    %457 = arith.addf %453, %456 : vector<16x1xf32>
    %458 = math.rsqrt %457 : vector<16x1xf32>
    %459 = vector.broadcast %458 : vector<16x1xf32> to vector<16x32xf32>
    %460 = arith.mulf %455, %459 : vector<16x32xf32>
    %461 = vector.broadcast %440 : vector<1x32xf32> to vector<16x32xf32>
    %462 = arith.mulf %460, %461 : vector<16x32xf32>
    %463 = vector.broadcast %442 : vector<1x32xf32> to vector<16x32xf32>
    %464 = arith.addf %462, %463 : vector<16x32xf32>
    %465 = vector.shape_cast %464 : vector<16x32xf32> to vector<2x8x32xf32>
    %466 = vector.extract_strided_slice %465 {offsets = [0, 0, 0], sizes = [2, 1, 32], strides = [1, 1, 1]} : vector<2x8x32xf32> to vector<2x1x32xf32>
    %467 = vector.shape_cast %466 : vector<2x1x32xf32> to vector<2x32xf32>
    %468 = arith.truncf %467 : vector<2x32xf32> to vector<2x32xbf16>
    %c0_194 = arith.constant 0 : index
    %c0_195 = arith.constant 0 : index
    %469 = vector.load %arg17[%c0_194, %c0_195] : memref<32x32xbf16, #tpu.memory_space<vmem>>, vector<32x32xbf16>
    %cst_196 = arith.constant dense<0.000000e+00> : vector<2x32xf32>
    %470 = tpu.matmul %468, %469, %cst_196 {dimension_numbers = #tpu.dot_dimension_numbers<[1], [0], [0], [1], [0, 0, 1, 1], [], []>} : vector<2x32xbf16>, vector<32x32xbf16>, vector<2x32xf32> -> vector<2x32xf32>
    %c0_197 = arith.constant 0 : index
    %c0_198 = arith.constant 0 : index
    %471 = vector.load %arg18[%c0_197, %c0_198] : memref<1x32xf32, #tpu.memory_space<vmem>>, vector<1x32xf32>
    %472 = vector.broadcast %471 : vector<1x32xf32> to vector<2x32xf32>
    %473 = arith.addf %470, %472 : vector<2x32xf32>
    %474 = math.tanh %473 : vector<2x32xf32>
    %475 = arith.truncf %474 : vector<2x32xf32> to vector<2x32xbf16>
    %c0_199 = arith.constant 0 : index
    %c0_200 = arith.constant 0 : index
    %476 = vector.load %arg19[%c0_199, %c0_200] : memref<32x128xbf16, #tpu.memory_space<vmem>>, vector<32x128xbf16>
    %cst_201 = arith.constant dense<0.000000e+00> : vector<2x128xf32>
    %477 = tpu.matmul %475, %476, %cst_201 {dimension_numbers = #tpu.dot_dimension_numbers<[1], [0], [0], [1], [0, 0, 1, 1], [], []>} : vector<2x32xbf16>, vector<32x128xbf16>, vector<2x128xf32> -> vector<2x128xf32>
    %c0_202 = arith.constant 0 : index
    %c0_203 = arith.constant 0 : index
    %478 = vector.load %arg20[%c0_202, %c0_203] : memref<1x128xf32, #tpu.memory_space<vmem>>, vector<1x128xf32>
    %479 = vector.broadcast %478 : vector<1x128xf32> to vector<2x128xf32>
    %480 = arith.addf %477, %479 : vector<2x128xf32>
    %c0_204 = arith.constant 0 : index
    %c0_205 = arith.constant 0 : index
    %c0_206 = arith.constant 0 : index
    %481 = vector.load %arg21[%c0_204, %c0_205, %c0_206] : memref<1x2x128xf32, #tpu.memory_space<vmem>>, vector<1x2x128xf32>
    %482 = vector.shape_cast %481 : vector<1x2x128xf32> to vector<2x128xf32>
    %483 = vector.shape_cast %480 : vector<2x128xf32> to vector<1x2x128xf32>
    tpu.vector_store %arg21[%c0_204, %c0_205, %c0_206], %483 {strides = array<i32>} : memref<1x2x128xf32, #tpu.memory_space<vmem>>, vector<1x2x128xf32>,
    return
  }
  func.func @transform_0(%arg0: i32) -> (i32, i32, i32, i32) {
    %c0_i32 = arith.constant 0 : i32
    %c0_i32_0 = arith.constant 0 : i32
    %c0_i32_1 = arith.constant 0 : i32
    %c0_i32_2 = arith.constant 0 : i32
    return %arg0, %c0_i32, %c0_i32_0, %c0_i32_1 : i32, i32, i32, i32
  }
  func.func @transform_1(%arg0: i32) -> (i32, i32, i32, i32) {
    %c0_i32 = arith.constant 0 : i32
    %c0_i32_0 = arith.constant 0 : i32
    %c0_i32_1 = arith.constant 0 : i32
    %c0_i32_2 = arith.constant 0 : i32
    return %arg0, %c0_i32, %c0_i32_0, %c0_i32_1 : i32, i32, i32, i32
  }
  func.func @transform_2(%arg0: i32) -> (i32, i32) {
    %c0_i32 = arith.constant 0 : i32
    %c0_i32_0 = arith.constant 0 : i32
    %c0_i32_1 = arith.constant 0 : i32
    return %c0_i32, %c0_i32_0 : i32, i32
  }
  func.func @transform_3(%arg0: i32) -> (i32, i32) {
    %c0_i32 = arith.constant 0 : i32
    %c0_i32_0 = arith.constant 0 : i32
    %c0_i32_1 = arith.constant 0 : i32
    return %c0_i32, %c0_i32_0 : i32, i32
  }
  func.func @transform_4(%arg0: i32) -> (i32, i32, i32) {
    %c0_i32 = arith.constant 0 : i32
    %c0_i32_0 = arith.constant 0 : i32
    %c0_i32_1 = arith.constant 0 : i32
    %c0_i32_2 = arith.constant 0 : i32
    return %c0_i32, %c0_i32_0, %c0_i32_1 : i32, i32, i32
  }
  func.func @transform_5(%arg0: i32) -> (i32, i32, i32) {
    %c0_i32 = arith.constant 0 : i32
    %c0_i32_0 = arith.constant 0 : i32
    %c0_i32_1 = arith.constant 0 : i32
    %c0_i32_2 = arith.constant 0 : i32
    return %c0_i32, %c0_i32_0, %c0_i32_1 : i32, i32, i32
  }
  func.func @transform_6(%arg0: i32) -> (i32, i32, i32, i32) {
    %c0_i32 = arith.constant 0 : i32
    %c0_i32_0 = arith.constant 0 : i32
    %c0_i32_1 = arith.constant 0 : i32
    %c0_i32_2 = arith.constant 0 : i32
    %c0_i32_3 = arith.constant 0 : i32
    return %c0_i32, %c0_i32_0, %c0_i32_1, %c0_i32_2 : i32, i32, i32, i32
  }
  func.func @transform_7(%arg0: i32) -> (i32, i32, i32) {
    %c0_i32 = arith.constant 0 : i32
    %c0_i32_0 = arith.constant 0 : i32
    %c0_i32_1 = arith.constant 0 : i32
    %c0_i32_2 = arith.constant 0 : i32
    return %c0_i32, %c0_i32_0, %c0_i32_1 : i32, i32, i32
  }
  func.func @transform_8(%arg0: i32) -> (i32, i32, i32) {
    %c0_i32 = arith.constant 0 : i32
    %c0_i32_0 = arith.constant 0 : i32
    %c0_i32_1 = arith.constant 0 : i32
    %c0_i32_2 = arith.constant 0 : i32
    return %c0_i32, %c0_i32_0, %c0_i32_1 : i32, i32, i32
  }
  func.func @transform_9(%arg0: i32) -> (i32, i32, i32) {
    %c0_i32 = arith.constant 0 : i32
    %c0_i32_0 = arith.constant 0 : i32
    %c0_i32_1 = arith.constant 0 : i32
    %c0_i32_2 = arith.constant 0 : i32
    return %c0_i32, %c0_i32_0, %c0_i32_1 : i32, i32, i32
  }
  func.func @transform_10(%arg0: i32) -> (i32, i32, i32) {
    %c0_i32 = arith.constant 0 : i32
    %c0_i32_0 = arith.constant 0 : i32
    %c0_i32_1 = arith.constant 0 : i32
    %c0_i32_2 = arith.constant 0 : i32
    return %c0_i32, %c0_i32_0, %c0_i32_1 : i32, i32, i32
  }
  func.func @transform_11(%arg0: i32) -> (i32, i32, i32) {
    %c0_i32 = arith.constant 0 : i32
    %c0_i32_0 = arith.constant 0 : i32
    %c0_i32_1 = arith.constant 0 : i32
    %c0_i32_2 = arith.constant 0 : i32
    return %c0_i32, %c0_i32_0, %c0_i32_1 : i32, i32, i32
  }
  func.func @transform_12(%arg0: i32) -> (i32, i32, i32) {
    %c0_i32 = arith.constant 0 : i32
    %c0_i32_0 = arith.constant 0 : i32
    %c0_i32_1 = arith.constant 0 : i32
    %c0_i32_2 = arith.constant 0 : i32
    return %c0_i32, %c0_i32_0, %c0_i32_1 : i32, i32, i32
  }
  func.func @transform_13(%arg0: i32) -> (i32, i32, i32) {
    %c0_i32 = arith.constant 0 : i32
    %c0_i32_0 = arith.constant 0 : i32
    %c0_i32_1 = arith.constant 0 : i32
    %c0_i32_2 = arith.constant 0 : i32
    return %c0_i32, %c0_i32_0, %c0_i32_1 : i32, i32, i32
  }
  func.func @transform_14(%arg0: i32) -> (i32, i32, i32) {
    %c0_i32 = arith.constant 0 : i32
    %c0_i32_0 = arith.constant 0 : i32
    %c0_i32_1 = arith.constant 0 : i32
    %c0_i32_2 = arith.constant 0 : i32
    return %c0_i32, %c0_i32_0, %c0_i32_1 : i32, i32, i32
  }
  func.func @transform_15(%arg0: i32) -> (i32, i32, i32) {
    %c0_i32 = arith.constant 0 : i32
    %c0_i32_0 = arith.constant 0 : i32
    %c0_i32_1 = arith.constant 0 : i32
    %c0_i32_2 = arith.constant 0 : i32
    return %c0_i32, %c0_i32_0, %c0_i32_1 : i32, i32, i32
  }
  func.func @transform_16(%arg0: i32) -> (i32, i32) {
    %c0_i32 = arith.constant 0 : i32
    %c0_i32_0 = arith.constant 0 : i32
    %c0_i32_1 = arith.constant 0 : i32
    return %c0_i32, %c0_i32_0 : i32, i32
  }
  func.func @transform_17(%arg0: i32) -> (i32, i32) {
    %c0_i32 = arith.constant 0 : i32
    %c0_i32_0 = arith.constant 0 : i32
    %c0_i32_1 = arith.constant 0 : i32
    return %c0_i32, %c0_i32_0 : i32, i32
  }
  func.func @transform_18(%arg0: i32) -> (i32, i32) {
    %c0_i32 = arith.constant 0 : i32
    %c0_i32_0 = arith.constant 0 : i32
    %c0_i32_1 = arith.constant 0 : i32
    return %c0_i32, %c0_i32_0 : i32, i32
  }
  func.func @transform_19(%arg0: i32) -> (i32, i32) {
    %c0_i32 = arith.constant 0 : i32
    %c0_i32_0 = arith.constant 0 : i32
    %c0_i32_1 = arith.constant 0 : i32
    return %c0_i32, %c0_i32_0 : i32, i32
  }
  func.func @transform_20(%arg0: i32) -> (i32, i32, i32) {
    %c0_i32 = arith.constant 0 : i32
    %c0_i32_0 = arith.constant 0 : i32
    %c0_i32_1 = arith.constant 0 : i32
    return %arg0, %c0_i32, %c0_i32_0 : i32, i32, i32
  }
}

</mosaic_0001>

<llo_original>
// kernel: sentiment_transformer_forward.1
$region0: #{sentiment_transformer_forward.1}
  #allocation0 [shape = 'u32[]', space=smem, size = 0x4, offset = 0x4, fixed_abs, tag = 'smem constant byte address 0x4 - core index']
  #allocation1 [shape = 'u32[144,128]{1,0:T(1,128)}', space=vmem, size = 0x12000, scoped, tag = 'internal scratch']
  %s0 = inlined_call_operand.vmem [shape: f32[1,2,8,32], index: 0, kind: input, shape index: {}]
  %s1 = inlined_call_operand.vmem [shape: f32[1,2,1,8], index: 1, kind: input, shape index: {}]
  %s2 = inlined_call_operand.vmem [shape: f32[1,32], index: 2, kind: input, shape index: {}]
  %s3 = inlined_call_operand.vmem [shape: f32[1,32], index: 3, kind: input, shape index: {}]
  %s4 = inlined_call_operand.vmem [shape: bf16[2,32,96], index: 4, kind: input, shape index: {}]
  %s5 = inlined_call_operand.vmem [shape: f32[2,1,96], index: 5, kind: input, shape index: {}]
  %s6 = inlined_call_operand.vmem [shape: bf16[2,4,8,32], index: 6, kind: input, shape index: {}]
  %s7 = inlined_call_operand.vmem [shape: f32[2,1,32], index: 7, kind: input, shape index: {}]
  %s8 = inlined_call_operand.vmem [shape: f32[2,1,32], index: 8, kind: input, shape index: {}]
  %s9 = inlined_call_operand.vmem [shape: f32[2,1,32], index: 9, kind: input, shape index: {}]
  %s10 = inlined_call_operand.vmem [shape: bf16[2,32,128], index: 10, kind: input, shape index: {}]
  %s11 = inlined_call_operand.vmem [shape: f32[2,1,128], index: 11, kind: input, shape index: {}]
  %s12 = inlined_call_operand.vmem [shape: bf16[2,128,32], index: 12, kind: input, shape index: {}]
  %s13 = inlined_call_operand.vmem [shape: f32[2,1,32], index: 13, kind: input, shape index: {}]
  %s14 = inlined_call_operand.vmem [shape: f32[2,1,32], index: 14, kind: input, shape index: {}]
  %s15 = inlined_call_operand.vmem [shape: f32[2,1,32], index: 15, kind: input, shape index: {}]
  %s16 = inlined_call_operand.vmem [shape: bf16[32,32], index: 16, kind: input, shape index: {}]
  %s17 = inlined_call_operand.vmem [shape: f32[1,32], index: 17, kind: input, shape index: {}]
  %s18 = inlined_call_operand.vmem [shape: bf16[32,128], index: 18, kind: input, shape index: {}]
  %s19 = inlined_call_operand.vmem [shape: f32[1,128], index: 19, kind: input, shape index: {}]
  %s20 = inlined_call_operand.hbm [shape: f32[1,2,128], index: 20, kind: output, shape index: {}]
  %s21 = sld [smem:[#allocation0]]
  $region90: #{sentiment_transformer_forward.1} parent=0
    _
  %s23 = ssub.s32 1, %s21
  %s24 = scalar_select 0, %s23, %s21
  $region1: #{sentiment_transformer_forward.1} parent=0
    #allocation2 [shape = 'u8[1024]{0}', space=vmem, size = 0x400, scoped, tag = 'output window, operand 0, single buffered']
    #allocation3 [shape = 's32[1]{0}', space=sflag, size = 0x4, scoped, tag = 'scoped memory for sentiment_transformer_forward.1']
    %25 = vsyncpa [#allocation3], 0
    // Predicated region
    $region2: #{sentiment_transformer_forward.1} parent=1 // pred_check
      _
    $region3: #{sentiment_transformer_forward.1} parent=1 // pred_check_branch
      %27 = sbr.rel (0) target = $region5
    $region4: #{sentiment_transformer_forward.1} parent=1 // pred_region
      _
    $region5: #{sentiment_transformer_forward.1} parent=1 // pred_fallthru
      _
    // Predicated region
    $region6: #{sentiment_transformer_forward.1} parent=1 // pred_check
      _
    $region7: #{sentiment_transformer_forward.1} parent=1 // pred_check_branch
      %29 = sbr.rel (0) target = $region9
    $region8: #{sentiment_transformer_forward.1} parent=1 // pred_region
      _
    $region9: #{sentiment_transformer_forward.1} parent=1 // pred_fallthru
      _
    // Predicated region
    $region10: #{sentiment_transformer_forward.1} parent=1 // pred_check
      _
    $region11: #{sentiment_transformer_forward.1} parent=1 // pred_check_branch
      %31 = sbr.rel (0) target = $region13
    $region12: #{sentiment_transformer_forward.1} parent=1 // pred_region
      _
    $region13: #{sentiment_transformer_forward.1} parent=1 // pred_fallthru
      _
    // Predicated region
    $region14: #{sentiment_transformer_forward.1} parent=1 // pred_check
      _
    $region15: #{sentiment_transformer_forward.1} parent=1 // pred_check_branch
      %33 = sbr.rel (0) target = $region17
    $region16: #{sentiment_transformer_forward.1} parent=1 // pred_region
      _
    $region17: #{sentiment_transformer_forward.1} parent=1 // pred_fallthru
      _
    // Predicated region
    $region18: #{sentiment_transformer_forward.1} parent=1 // pred_check
      _
    $region19: #{sentiment_transformer_forward.1} parent=1 // pred_check_branch
      %35 = sbr.rel (0) target = $region21
    $region20: #{sentiment_transformer_forward.1} parent=1 // pred_region
      _
    $region21: #{sentiment_transformer_forward.1} parent=1 // pred_fallthru
      _
    // Predicated region
    $region22: #{sentiment_transformer_forward.1} parent=1 // pred_check
      _
    $region23: #{sentiment_transformer_forward.1} parent=1 // pred_check_branch
      %37 = sbr.rel (0) target = $region25
    $region24: #{sentiment_transformer_forward.1} parent=1 // pred_region
      _
    $region25: #{sentiment_transformer_forward.1} parent=1 // pred_fallthru
      _
    // Predicated region
    $region26: #{sentiment_transformer_forward.1} parent=1 // pred_check
      _
    $region27: #{sentiment_transformer_forward.1} parent=1 // pred_check_branch
      %39 = sbr.rel (0) target = $region29
    $region28: #{sentiment_transformer_forward.1} parent=1 // pred_region
      _
    $region29: #{sentiment_transformer_forward.1} parent=1 // pred_fallthru
      _
    // Predicated region
    $region30: #{sentiment_transformer_forward.1} parent=1 // pred_check
      _
    $region31: #{sentiment_transformer_forward.1} parent=1 // pred_check_branch
      %41 = sbr.rel (0) target = $region33
    $region32: #{sentiment_transformer_forward.1} parent=1 // pred_region
      _
    $region33: #{sentiment_transformer_forward.1} parent=1 // pred_fallthru
      _
    // Predicated region
    $region34: #{sentiment_transformer_forward.1} parent=1 // pred_check
      _
    $region35: #{sentiment_transformer_forward.1} parent=1 // pred_check_branch
      %43 = sbr.rel (0) target = $region37
    $region36: #{sentiment_transformer_forward.1} parent=1 // pred_region
      _
    $region37: #{sentiment_transformer_forward.1} parent=1 // pred_fallthru
      _
    // Predicated region
    $region38: #{sentiment_transformer_forward.1} parent=1 // pred_check
      _
    $region39: #{sentiment_transformer_forward.1} parent=1 // pred_check_branch
      %45 = sbr.rel (0) target = $region41
    $region40: #{sentiment_transformer_forward.1} parent=1 // pred_region
      _
    $region41: #{sentiment_transformer_forward.1} parent=1 // pred_fallthru
      _
    // Predicated region
    $region42: #{sentiment_transformer_forward.1} parent=1 // pred_check
      _
    $region43: #{sentiment_transformer_forward.1} parent=1 // pred_check_branch
      %47 = sbr.rel (0) target = $region45
    $region44: #{sentiment_transformer_forward.1} parent=1 // pred_region
      _
    $region45: #{sentiment_transformer_forward.1} parent=1 // pred_fallthru
      _
    // Predicated region
    $region46: #{sentiment_transformer_forward.1} parent=1 // pred_check
      _
    $region47: #{sentiment_transformer_forward.1} parent=1 // pred_check_branch
      %49 = sbr.rel (0) target = $region49
    $region48: #{sentiment_transformer_forward.1} parent=1 // pred_region
      _
    $region49: #{sentiment_transformer_forward.1} parent=1 // pred_fallthru
      _
    // Predicated region
    $region50: #{sentiment_transformer_forward.1} parent=1 // pred_check
      _
    $region51: #{sentiment_transformer_forward.1} parent=1 // pred_check_branch
      %51 = sbr.rel (0) target = $region53
    $region52: #{sentiment_transformer_forward.1} parent=1 // pred_region
      _
    $region53: #{sentiment_transformer_forward.1} parent=1 // pred_fallthru
      _
    // Predicated region
    $region54: #{sentiment_transformer_forward.1} parent=1 // pred_check
      _
    $region55: #{sentiment_transformer_forward.1} parent=1 // pred_check_branch
      %53 = sbr.rel (0) target = $region57
    $region56: #{sentiment_transformer_forward.1} parent=1 // pred_region
      _
    $region57: #{sentiment_transformer_forward.1} parent=1 // pred_fallthru
      _
    // Predicated region
    $region58: #{sentiment_transformer_forward.1} parent=1 // pred_check
      _
    $region59: #{sentiment_transformer_forward.1} parent=1 // pred_check_branch
      %55 = sbr.rel (0) target = $region61
    $region60: #{sentiment_transformer_forward.1} parent=1 // pred_region
      _
    $region61: #{sentiment_transformer_forward.1} parent=1 // pred_fallthru
      _
    // Predicated region
    $region62: #{sentiment_transformer_forward.1} parent=1 // pred_check
      _
    $region63: #{sentiment_transformer_forward.1} parent=1 // pred_check_branch
      %57 = sbr.rel (0) target = $region65
    $region64: #{sentiment_transformer_forward.1} parent=1 // pred_region
      _
    $region65: #{sentiment_transformer_forward.1} parent=1 // pred_fallthru
      _
    // Predicated region
    $region66: #{sentiment_transformer_forward.1} parent=1 // pred_check
      _
    $region67: #{sentiment_transformer_forward.1} parent=1 // pred_check_branch
      %59 = sbr.rel (0) target = $region69
    $region68: #{sentiment_transformer_forward.1} parent=1 // pred_region
      _
    $region69: #{sentiment_transformer_forward.1} parent=1 // pred_fallthru
      _
    // Predicated region
    $region70: #{sentiment_transformer_forward.1} parent=1 // pred_check
      _
    $region71: #{sentiment_transformer_forward.1} parent=1 // pred_check_branch
      %61 = sbr.rel (0) target = $region73
    $region72: #{sentiment_transformer_forward.1} parent=1 // pred_region
      _
    $region73: #{sentiment_transformer_forward.1} parent=1 // pred_fallthru
      _
    // Predicated region
    $region74: #{sentiment_transformer_forward.1} parent=1 // pred_check
      _
    $region75: #{sentiment_transformer_forward.1} parent=1 // pred_check_branch
      %63 = sbr.rel (0) target = $region77
    $region76: #{sentiment_transformer_forward.1} parent=1 // pred_region
      _
    $region77: #{sentiment_transformer_forward.1} parent=1 // pred_fallthru
      _
    // Predicated region
    $region78: #{sentiment_transformer_forward.1} parent=1 // pred_check
      _
    $region79: #{sentiment_transformer_forward.1} parent=1 // pred_check_branch
      %65 = sbr.rel (0) target = $region81
    $region80: #{sentiment_transformer_forward.1} parent=1 // pred_region
      _
    $region81: #{sentiment_transformer_forward.1} parent=1 // pred_fallthru
      _
    %v67 = vld [vmem:[%s1] sm:$0x1]
    %v68 = vld [vmem:[%s1 + $0x1] sm:$0x1]
    %v69 = vld [vmem:[%s0] sm:$0xff]
    %v70 = vld [vmem:[%s0 + $0x8] sm:$0xff]
    %v71 = vld [vmem:[%s2] sm:$0x1]
    %v72 = vld [vmem:[%s3] sm:$0x1]
    %vm73 = vcmask 261120
    %v74 = vsel %vm73, %v69, 0.0
    %75 = vadd.xlane.f32.xlu0 %v74
    %v76 = vpop.xlane.xlu0 %75
    %v77 = vsel %vm73, %v70, 0.0
    %78 = vadd.xlane.f32.xlu0 %v77
    %v79 = vpop.xlane.xlu0 %78
    %v80 = vrcp.pop 32.0
    %v81 = vmul.f32 %v76, %v80
    %v82 = vmul.f32 %v79, %v80
    %v83 = vsub.f32 %v69, %v81
    %v84 = vsub.f32 %v70, %v82
    %v85 = vmul.f32 %v83, %v83
    %v86 = vmul.f32 %v84, %v84
    %v87 = vsel %vm73, %v85, 0.0
    %88 = vadd.xlane.f32.xlu0 %v87
    %v89 = vpop.xlane.xlu0 %88
    %v90 = vsel %vm73, %v86, 0.0
    %91 = vadd.xlane.f32.xlu0 %v90
    %v92 = vpop.xlane.xlu0 %91
    %v93 = vmul.f32 %v89, %v80
    %v94 = vmul.f32 %v92, %v80
    %v95 = vadd.f32 %v93, 1e-12
    %v96 = vadd.f32 %v94, 1e-12
    %v97 = vrsqrt.pop %v95
    %v98 = vrsqrt.pop %v96
    %v99 = vmul.f32 %v83, %v97
    %v100 = vmul.f32 %v84, %v98
    %v102 = vlaneseq
    %v103 = vshrl.u32 %v102, 7
    %v104 = vsub.s32 0, %v103
    %v105 = vrot.slane %v71, %v104
    %v107 = vmul.f32 %v99, %v105
    %v108 = vmul.f32 %v100, %v105
    %v110 = vlaneseq
    %v111 = vshrl.u32 %v110, 7
    %v112 = vsub.s32 0, %v111
    %v113 = vrot.slane %v72, %v112
    %v115 = vadd.f32 %v107, %v113
    %v116 = vadd.f32 %v108, %v113
    %v117 = vpack.c.bf16 %v116, %v115
    %v118 = vld [vmem:[%s4] sm:$0xf]
    %v119 = vld [vmem:[%s4 + $0x4] sm:$0xf]
    %v120 = vld [vmem:[%s4 + $0x8] sm:$0xf]
    %v121 = vld [vmem:[%s4 + $0xc] sm:$0xf]
    %v122 = vld [vmem:[%s5] sm:$0x1]
    %v124 = vlaneseq
    %v125 = vshrl.u32 %v124, 7
    %v126 = vsub.s32 0, %v125
    %v127 = vrot.slane %v122, %v126
    %v133 = vunpack.c.l.b16 %v118
    %v134 = vunpack.c.l.b16 %v119
    %v135 = vunpack.c.l.b16 %v120
    %v136 = vunpack.c.l.b16 %v121
    %v137 = vpack.c.b16 %v134, %v133
    %v138 = vpack.c.b16 %v136, %v135
    %v142 = vsel %vm73, %v117, 0
    %144 = vmatprep.subr.bf16.mxu0 0
    %145 = vmatpush1.bf16.msra.mxu0 %v137
    %146 = vmatprep.subr.bf16.mxu0 0
    %147 = vmatpush1.bf16.msra.mxu0 %v138
    %148 = vmatprep.subr.bf16.mxu0 0
    %149 = vmatpush1.bf16.msra.mxu0 0
    %150 = vmatprep.subr.bf16.mxu0 0
    %151 = vmatpush1.bf16.msra.mxu0 0
    %152 = vmatprep.subr.bf16.mxu0 0
    %153 = vmatpush1.bf16.msra.mxu0 0
    %154 = vmatprep.subr.bf16.mxu0 0
    %155 = vmatpush1.bf16.msra.mxu0 0
    %156 = vmatprep.subr.bf16.mxu0 0
    %157 = vmatpush1.bf16.msra.mxu0 0
    %158 = vmatprep.subr.bf16.mxu0 0
    %159 = vmatpush1.bf16.msra.mxu0 0
    %160 = vmatprep.subr.bf16.mxu0 0
    %161 = vmatpush1.bf16.msra.mxu0 0
    %162 = vmatprep.subr.bf16.mxu0 0
    %163 = vmatpush1.bf16.msra.mxu0 0
    %164 = vmatprep.subr.bf16.mxu0 0
    %165 = vmatpush1.bf16.msra.mxu0 0
    %166 = vmatprep.subr.bf16.mxu0 0
    %167 = vmatpush1.bf16.msra.mxu0 0
    %168 = vmatprep.subr.bf16.mxu0 0
    %169 = vmatpush1.bf16.msra.mxu0 0
    %170 = vmatprep.subr.bf16.mxu0 0
    %171 = vmatpush1.bf16.msra.mxu0 0
    %172 = vmatprep.subr.bf16.mxu0 0
    %173 = vmatpush1.bf16.msra.mxu0 0
    %174 = vmatprep.subr.bf16.mxu0 0
    %175 = vmatpush1.bf16.msra.mxu0 0
    %176 = vmatprep.mubr.bf16.mxu0 0
    %177 = vmatmul.mubr.bf16.gmra.mrb[0].mxu0 %v142
    %v178 = vpop.f32.mrb[0].mxu0
    %v179 = vadd.f32 %v127, %v178
    %v180 = vpop.f32.mrb[0].mxu0
    %v181 = vpop.f32.mrb[0].mxu0
    %v182 = vadd.f32 %v127, %v181
    %v183 = vpop.f32.mrb[0].mxu0
    %184 = vdwg.mxu0
    %v185 = vpack.c.bf16 %v179, %v179
    %v186 = vpack.c.bf16 %v182, %v182
    %188 = vrot.lane.b32.xlu0 %v185, 96
    %v189 = vpop.permute.xlu0 %188
    %vm190 = vcmask 64512
    %v192 = vsel %vm190, %v185, 0
    %v195 = vsel %vm190, %v189, 0
    %197 = vmatprep.subr.bf16.mxu0 0
    %198 = vmatpush1.bf16.xpose.msra.mxu0 %v195
    %199 = vmatprep.subr.bf16.mxu0 0
    %200 = vmatpush1.bf16.xpose.msra.mxu0 0
    %201 = vmatprep.subr.bf16.mxu0 0
    %202 = vmatpush1.bf16.xpose.msra.mxu0 0
    %203 = vmatprep.subr.bf16.mxu0 0
    %204 = vmatpush1.bf16.xpose.msra.mxu0 0
    %205 = vmatprep.subr.bf16.mxu0 0
    %206 = vmatpush1.bf16.xpose.msra.mxu0 0
    %207 = vmatprep.subr.bf16.mxu0 0
    %208 = vmatpush1.bf16.xpose.msra.mxu0 0
    %209 = vmatprep.subr.bf16.mxu0 0
    %210 = vmatpush1.bf16.xpose.msra.mxu0 0
    %211 = vmatprep.subr.bf16.mxu0 0
    %212 = vmatpush1.bf16.xpose.msra.mxu0 0
    %213 = vmatprep.subr.bf16.mxu0 0
    %214 = vmatpush1.bf16.xpose.msra.mxu0 0
    %215 = vmatprep.subr.bf16.mxu0 0
    %216 = vmatpush1.bf16.xpose.msra.mxu0 0
    %217 = vmatprep.subr.bf16.mxu0 0
    %218 = vmatpush1.bf16.xpose.msra.mxu0 0
    %219 = vmatprep.subr.bf16.mxu0 0
    %220 = vmatpush1.bf16.xpose.msra.mxu0 0
    %221 = vmatprep.subr.bf16.mxu0 0
    %222 = vmatpush1.bf16.xpose.msra.mxu0 0
    %223 = vmatprep.subr.bf16.mxu0 0
    %224 = vmatpush1.bf16.xpose.msra.mxu0 0
    %225 = vmatprep.subr.bf16.mxu0 0
    %226 = vmatpush1.bf16.xpose.msra.mxu0 0
    %227 = vmatprep.subr.bf16.mxu0 0
    %228 = vmatpush1.bf16.xpose.msra.mxu0 0
    %229 = vmatprep.mubr.bf16.mxu0 0
    %230 = vmatmul.mubr.bf16.gmra.mrb[0].mxu0 %v192
    %v231 = vpop.f32.mrb[0].mxu0
    %v232 = vadd.f32 0.0, %v231
    %v233 = vpop.f32.mrb[0].mxu0
    %v234 = vpop.f32.mrb[0].mxu0
    %v235 = vpop.f32.mrb[0].mxu0
    %236 = vdwg.mxu0
    %238 = vrot.lane.b32.xlu0 %v186, 96
    %v239 = vpop.permute.xlu0 %238
    %v241 = vsel %vm190, %v186, 0
    %v244 = vsel %vm190, %v239, 0
    %246 = vmatprep.subr.bf16.mxu0 0
    %247 = vmatpush1.bf16.xpose.msra.mxu0 %v244
    %248 = vmatprep.subr.bf16.mxu0 0
    %249 = vmatpush1.bf16.xpose.msra.mxu0 0
    %250 = vmatprep.subr.bf16.mxu0 0
    %251 = vmatpush1.bf16.xpose.msra.mxu0 0
    %252 = vmatprep.subr.bf16.mxu0 0
    %253 = vmatpush1.bf16.xpose.msra.mxu0 0
    %254 = vmatprep.subr.bf16.mxu0 0
    %255 = vmatpush1.bf16.xpose.msra.mxu0 0
    %256 = vmatprep.subr.bf16.mxu0 0
    %257 = vmatpush1.bf16.xpose.msra.mxu0 0
    %258 = vmatprep.subr.bf16.mxu0 0
    %259 = vmatpush1.bf16.xpose.msra.mxu0 0
    %260 = vmatprep.subr.bf16.mxu0 0
    %261 = vmatpush1.bf16.xpose.msra.mxu0 0
    %262 = vmatprep.subr.bf16.mxu0 0
    %263 = vmatpush1.bf16.xpose.msra.mxu0 0
    %264 = vmatprep.subr.bf16.mxu0 0
    %265 = vmatpush1.bf16.xpose.msra.mxu0 0
    %266 = vmatprep.subr.bf16.mxu0 0
    %267 = vmatpush1.bf16.xpose.msra.mxu0 0
    %268 = vmatprep.subr.bf16.mxu0 0
    %269 = vmatpush1.bf16.xpose.msra.mxu0 0
    %270 = vmatprep.subr.bf16.mxu0 0
    %271 = vmatpush1.bf16.xpose.msra.mxu0 0
    %272 = vmatprep.subr.bf16.mxu0 0
    %273 = vmatpush1.bf16.xpose.msra.mxu0 0
    %274 = vmatprep.subr.bf16.mxu0 0
    %275 = vmatpush1.bf16.xpose.msra.mxu0 0
    %276 = vmatprep.subr.bf16.mxu0 0
    %277 = vmatpush1.bf16.xpose.msra.mxu0 0
    %278 = vmatprep.mubr.bf16.mxu0 0
    %279 = vmatmul.mubr.bf16.gmra.mrb[0].mxu0 %v241
    %v280 = vpop.f32.mrb[0].mxu0
    %v281 = vadd.f32 0.0, %v280
    %v282 = vpop.f32.mrb[0].mxu0
    %v283 = vpop.f32.mrb[0].mxu0
    %v284 = vpop.f32.mrb[0].mxu0
    %285 = vdwg.mxu0
    %v286 = vmul.f32 %v232, 0.35355338
    %v287 = vmul.f32 %v281, 0.35355338
    %v290 = vlaneseq
    %v291 = vshrl.u32 %v290, 7
    %v292 = vsub.s32 0, %v291
    %v293 = vrot.slane %v67, %v292
    %v294 = vlaneseq
    %v295 = vshrl.u32 %v294, 7
    %v296 = vsub.s32 0, %v295
    %v297 = vrot.slane %v68, %v296
    %v300 = vadd.f32 %v286, %v293
    %v301 = vadd.f32 %v287, %v297
    %v302 = vsel %vm190, %v300, -inf
    %303 = vmax.xlane.f32.xlu0 %v302
    %v304 = vpop.xlane.xlu0 %303
    %v305 = vsel %vm190, %v301, -inf
    %306 = vmax.xlane.f32.xlu0 %v305
    %v307 = vpop.xlane.xlu0 %306
    %v308 = vsub.f32 %v300, %v304
    %v309 = vsub.f32 %v301, %v307
    %v310 = vmul.f32 %v308, 1.442695
    %v311 = vpow.pop %v310
    %v312 = vmul.f32 %v309, 1.442695
    %v313 = vpow.pop %v312
    %v314 = vsel %vm190, %v311, 0.0
    %315 = vadd.xlane.f32.xlu0 %v314
    %v316 = vpop.xlane.xlu0 %315
    %v317 = vsel %vm190, %v313, 0.0
    %318 = vadd.xlane.f32.xlu0 %v317
    %v319 = vpop.xlane.xlu0 %318
    %v320 = vrcp.pop %v316
    %v321 = vrcp.pop %v319
    %v322 = vmul.f32 %v311, %v320
    %v323 = vmul.f32 %v313, %v321
    %v324 = vpack.c.bf16 %v322, %v322
    %v325 = vpack.c.bf16 %v323, %v323
    %326 = vrot.lane.b32.xlu0 %v185, 64
    %v327 = vpop.permute.xlu0 %326
    %v329 = vsel %vm190, %v324, 0
    %vm331 = vcmask 1043456
    %v333 = vsel %vm331, %v327, 0
    %335 = vmatprep.subr.bf16.mxu0 0
    %336 = vmatpush1.bf16.msra.mxu0 %v333
    %337 = vmatprep.subr.bf16.mxu0 0
    %338 = vmatpush1.bf16.msra.mxu0 0
    %339 = vmatprep.subr.bf16.mxu0 0
    %340 = vmatpush1.bf16.msra.mxu0 0
    %341 = vmatprep.subr.bf16.mxu0 0
    %342 = vmatpush1.bf16.msra.mxu0 0
    %343 = vmatprep.subr.bf16.mxu0 0
    %344 = vmatpush1.bf16.msra.mxu0 0
    %345 = vmatprep.subr.bf16.mxu0 0
    %346 = vmatpush1.bf16.msra.mxu0 0
    %347 = vmatprep.subr.bf16.mxu0 0
    %348 = vmatpush1.bf16.msra.mxu0 0
    %349 = vmatprep.subr.bf16.mxu0 0
    %350 = vmatpush1.bf16.msra.mxu0 0
    %351 = vmatprep.subr.bf16.mxu0 0
    %352 = vmatpush1.bf16.msra.mxu0 0
    %353 = vmatprep.subr.bf16.mxu0 0
    %354 = vmatpush1.bf16.msra.mxu0 0
    %355 = vmatprep.subr.bf16.mxu0 0
    %356 = vmatpush1.bf16.msra.mxu0 0
    %357 = vmatprep.subr.bf16.mxu0 0
    %358 = vmatpush1.bf16.msra.mxu0 0
    %359 = vmatprep.subr.bf16.mxu0 0
    %360 = vmatpush1.bf16.msra.mxu0 0
    %361 = vmatprep.subr.bf16.mxu0 0
    %362 = vmatpush1.bf16.msra.mxu0 0
    %363 = vmatprep.subr.bf16.mxu0 0
    %364 = vmatpush1.bf16.msra.mxu0 0
    %365 = vmatprep.subr.bf16.mxu0 0
    %366 = vmatpush1.bf16.msra.mxu0 0
    %367 = vmatprep.mubr.bf16.mxu0 0
    %368 = vmatmul.mubr.bf16.gmra.mrb[0].mxu0 %v329
    %v369 = vpop.f32.mrb[0].mxu0
    %v370 = vadd.f32 0.0, %v369
    %v371 = vpop.f32.mrb[0].mxu0
    %v372 = vpop.f32.mrb[0].mxu0
    %v373 = vpop.f32.mrb[0].mxu0
    %374 = vdwg.mxu0
    %375 = vrot.lane.b32.xlu0 %v186, 64
    %v376 = vpop.permute.xlu0 %375
    %v378 = vsel %vm190, %v325, 0
    %v381 = vsel %vm331, %v376, 0
    %383 = vmatprep.subr.bf16.mxu0 0
    %384 = vmatpush1.bf16.msra.mxu0 %v381
    %385 = vmatprep.subr.bf16.mxu0 0
    %386 = vmatpush1.bf16.msra.mxu0 0
    %387 = vmatprep.subr.bf16.mxu0 0
    %388 = vmatpush1.bf16.msra.mxu0 0
    %389 = vmatprep.subr.bf16.mxu0 0
    %390 = vmatpush1.bf16.msra.mxu0 0
    %391 = vmatprep.subr.bf16.mxu0 0
    %392 = vmatpush1.bf16.msra.mxu0 0
    %393 = vmatprep.subr.bf16.mxu0 0
    %394 = vmatpush1.bf16.msra.mxu0 0
    %395 = vmatprep.subr.bf16.mxu0 0
    %396 = vmatpush1.bf16.msra.mxu0 0
    %397 = vmatprep.subr.bf16.mxu0 0
    %398 = vmatpush1.bf16.msra.mxu0 0
    %399 = vmatprep.subr.bf16.mxu0 0
    %400 = vmatpush1.bf16.msra.mxu0 0
    %401 = vmatprep.subr.bf16.mxu0 0
    %402 = vmatpush1.bf16.msra.mxu0 0
    %403 = vmatprep.subr.bf16.mxu0 0
    %404 = vmatpush1.bf16.msra.mxu0 0
    %405 = vmatprep.subr.bf16.mxu0 0
    %406 = vmatpush1.bf16.msra.mxu0 0
    %407 = vmatprep.subr.bf16.mxu0 0
    %408 = vmatpush1.bf16.msra.mxu0 0
    %409 = vmatprep.subr.bf16.mxu0 0
    %410 = vmatpush1.bf16.msra.mxu0 0
    %411 = vmatprep.subr.bf16.mxu0 0
    %412 = vmatpush1.bf16.msra.mxu0 0
    %413 = vmatprep.subr.bf16.mxu0 0
    %414 = vmatpush1.bf16.msra.mxu0 0
    %415 = vmatprep.mubr.bf16.mxu0 0
    %416 = vmatmul.mubr.bf16.gmra.mrb[0].mxu0 %v378
    %v417 = vpop.f32.mrb[0].mxu0
    %v418 = vadd.f32 0.0, %v417
    %v419 = vpop.f32.mrb[0].mxu0
    %v420 = vpop.f32.mrb[0].mxu0
    %v421 = vpop.f32.mrb[0].mxu0
    %422 = vdwg.mxu0
    %v423 = vpack.c.bf16 %v418, %v370
    %v424 = vld [vmem:[%s6] sm:$0xf]
    %425 = vrot.lane.b32.xlu0 %v185, 120
    %v426 = vpop.permute.xlu0 %425
    %427 = vrot.lane.b32.xlu0 %v185, 88
    %v428 = vpop.permute.xlu0 %427
    %v430 = vsel %vm190, %v426, 0
    %v433 = vsel %vm190, %v428, 0
    %435 = vmatprep.subr.bf16.mxu0 0
    %436 = vmatpush1.bf16.xpose.msra.mxu0 %v433
    %437 = vmatprep.subr.bf16.mxu0 0
    %438 = vmatpush1.bf16.xpose.msra.mxu0 0
    %439 = vmatprep.subr.bf16.mxu0 0
    %440 = vmatpush1.bf16.xpose.msra.mxu0 0
    %441 = vmatprep.subr.bf16.mxu0 0
    %442 = vmatpush1.bf16.xpose.msra.mxu0 0
    %443 = vmatprep.subr.bf16.mxu0 0
    %444 = vmatpush1.bf16.xpose.msra.mxu0 0
    %445 = vmatprep.subr.bf16.mxu0 0
    %446 = vmatpush1.bf16.xpose.msra.mxu0 0
    %447 = vmatprep.subr.bf16.mxu0 0
    %448 = vmatpush1.bf16.xpose.msra.mxu0 0
    %449 = vmatprep.subr.bf16.mxu0 0
    %450 = vmatpush1.bf16.xpose.msra.mxu0 0
    %451 = vmatprep.subr.bf16.mxu0 0
    %452 = vmatpush1.bf16.xpose.msra.mxu0 0
    %453 = vmatprep.subr.bf16.mxu0 0
    %454 = vmatpush1.bf16.xpose.msra.mxu0 0
    %455 = vmatprep.subr.bf16.mxu0 0
    %456 = vmatpush1.bf16.xpose.msra.mxu0 0
    %457 = vmatprep.subr.bf16.mxu0 0
    %458 = vmatpush1.bf16.xpose.msra.mxu0 0
    %459 = vmatprep.subr.bf16.mxu0 0
    %460 = vmatpush1.bf16.xpose.msra.mxu0 0
    %461 = vmatprep.subr.bf16.mxu0 0
    %462 = vmatpush1.bf16.xpose.msra.mxu0 0
    %463 = vmatprep.subr.bf16.mxu0 0
    %464 = vmatpush1.bf16.xpose.msra.mxu0 0
    %465 = vmatprep.subr.bf16.mxu0 0
    %466 = vmatpush1.bf16.xpose.msra.mxu0 0
    %467 = vmatprep.mubr.bf16.mxu0 0
    %468 = vmatmul.mubr.bf16.gmra.mrb[0].mxu0 %v430
    %v469 = vpop.f32.mrb[0].mxu0
    %v470 = vadd.f32 0.0, %v469
    %v471 = vpop.f32.mrb[0].mxu0
    %v472 = vpop.f32.mrb[0].mxu0
    %v473 = vpop.f32.mrb[0].mxu0
    %474 = vdwg.mxu0
    %475 = vrot.lane.b32.xlu0 %v186, 120
    %v476 = vpop.permute.xlu0 %475
    %477 = vrot.lane.b32.xlu0 %v186, 88
    %v478 = vpop.permute.xlu0 %477
    %v480 = vsel %vm190, %v476, 0
    %v483 = vsel %vm190, %v478, 0
    %485 = vmatprep.subr.bf16.mxu0 0
    %486 = vmatpush1.bf16.xpose.msra.mxu0 %v483
    %487 = vmatprep.subr.bf16.mxu0 0
    %488 = vmatpush1.bf16.xpose.msra.mxu0 0
    %489 = vmatprep.subr.bf16.mxu0 0
    %490 = vmatpush1.bf16.xpose.msra.mxu0 0
    %491 = vmatprep.subr.bf16.mxu0 0
    %492 = vmatpush1.bf16.xpose.msra.mxu0 0
    %493 = vmatprep.subr.bf16.mxu0 0
    %494 = vmatpush1.bf16.xpose.msra.mxu0 0
    %495 = vmatprep.subr.bf16.mxu0 0
    %496 = vmatpush1.bf16.xpose.msra.mxu0 0
    %497 = vmatprep.subr.bf16.mxu0 0
    %498 = vmatpush1.bf16.xpose.msra.mxu0 0
    %499 = vmatprep.subr.bf16.mxu0 0
    %500 = vmatpush1.bf16.xpose.msra.mxu0 0
    %501 = vmatprep.subr.bf16.mxu0 0
    %502 = vmatpush1.bf16.xpose.msra.mxu0 0
    %503 = vmatprep.subr.bf16.mxu0 0
    %504 = vmatpush1.bf16.xpose.msra.mxu0 0
    %505 = vmatprep.subr.bf16.mxu0 0
    %506 = vmatpush1.bf16.xpose.msra.mxu0 0
    %507 = vmatprep.subr.bf16.mxu0 0
    %508 = vmatpush1.bf16.xpose.msra.mxu0 0
    %509 = vmatprep.subr.bf16.mxu0 0
    %510 = vmatpush1.bf16.xpose.msra.mxu0 0
    %511 = vmatprep.subr.bf16.mxu0 0
    %512 = vmatpush1.bf16.xpose.msra.mxu0 0
    %513 = vmatprep.subr.bf16.mxu0 0
    %514 = vmatpush1.bf16.xpose.msra.mxu0 0
    %515 = vmatprep.subr.bf16.mxu0 0
    %516 = vmatpush1.bf16.xpose.msra.mxu0 0
    %517 = vmatprep.mubr.bf16.mxu0 0
    %518 = vmatmul.mubr.bf16.gmra.mrb[0].mxu0 %v480
    %v519 = vpop.f32.mrb[0].mxu0
    %v520 = vadd.f32 0.0, %v519
    %v521 = vpop.f32.mrb[0].mxu0
    %v522 = vpop.f32.mrb[0].mxu0
    %v523 = vpop.f32.mrb[0].mxu0
    %524 = vdwg.mxu0
    %v525 = vmul.f32 %v470, 0.35355338
    %v526 = vmul.f32 %v520, 0.35355338
    %v527 = vadd.f32 %v525, %v293
    %v528 = vadd.f32 %v526, %v297
    %v529 = vsel %vm190, %v527, -inf
    %530 = vmax.xlane.f32.xlu0 %v529
    %v531 = vpop.xlane.xlu0 %530
    %v532 = vsel %vm190, %v528, -inf
    %533 = vmax.xlane.f32.xlu0 %v532
    %v534 = vpop.xlane.xlu0 %533
    %v535 = vsub.f32 %v527, %v531
    %v536 = vsub.f32 %v528, %v534
    %v537 = vmul.f32 %v535, 1.442695
    %v538 = vpow.pop %v537
    %v539 = vmul.f32 %v536, 1.442695
    %v540 = vpow.pop %v539
    %v541 = vsel %vm190, %v538, 0.0
    %542 = vadd.xlane.f32.xlu0 %v541
    %v543 = vpop.xlane.xlu0 %542
    %v544 = vsel %vm190, %v540, 0.0
    %545 = vadd.xlane.f32.xlu0 %v544
    %v546 = vpop.xlane.xlu0 %545
    %v547 = vrcp.pop %v543
    %v548 = vrcp.pop %v546
    %v549 = vmul.f32 %v538, %v547
    %v550 = vmul.f32 %v540, %v548
    %v551 = vpack.c.bf16 %v549, %v549
    %v552 = vpack.c.bf16 %v550, %v550
    %553 = vrot.lane.b32.xlu0 %v185, 56
    %v554 = vpop.permute.xlu0 %553
    %v556 = vsel %vm190, %v551, 0
    %v559 = vsel %vm331, %v554, 0
    %561 = vmatprep.subr.bf16.mxu0 0
    %562 = vmatpush1.bf16.msra.mxu0 %v559
    %563 = vmatprep.subr.bf16.mxu0 0
    %564 = vmatpush1.bf16.msra.mxu0 0
    %565 = vmatprep.subr.bf16.mxu0 0
    %566 = vmatpush1.bf16.msra.mxu0 0
    %567 = vmatprep.subr.bf16.mxu0 0
    %568 = vmatpush1.bf16.msra.mxu0 0
    %569 = vmatprep.subr.bf16.mxu0 0
    %570 = vmatpush1.bf16.msra.mxu0 0
    %571 = vmatprep.subr.bf16.mxu0 0
    %572 = vmatpush1.bf16.msra.mxu0 0
    %573 = vmatprep.subr.bf16.mxu0 0
    %574 = vmatpush1.bf16.msra.mxu0 0
    %575 = vmatprep.subr.bf16.mxu0 0
    %576 = vmatpush1.bf16.msra.mxu0 0
    %577 = vmatprep.subr.bf16.mxu0 0
    %578 = vmatpush1.bf16.msra.mxu0 0
    %579 = vmatprep.subr.bf16.mxu0 0
    %580 = vmatpush1.bf16.msra.mxu0 0
    %581 = vmatprep.subr.bf16.mxu0 0
    %582 = vmatpush1.bf16.msra.mxu0 0
    %583 = vmatprep.subr.bf16.mxu0 0
    %584 = vmatpush1.bf16.msra.mxu0 0
    %585 = vmatprep.subr.bf16.mxu0 0
    %586 = vmatpush1.bf16.msra.mxu0 0
    %587 = vmatprep.subr.bf16.mxu0 0
    %588 = vmatpush1.bf16.msra.mxu0 0
    %589 = vmatprep.subr.bf16.mxu0 0
    %590 = vmatpush1.bf16.msra.mxu0 0
    %591 = vmatprep.subr.bf16.mxu0 0
    %592 = vmatpush1.bf16.msra.mxu0 0
    %593 = vmatprep.mubr.bf16.mxu0 0
    %594 = vmatmul.mubr.bf16.gmra.mrb[0].mxu0 %v556
    %v595 = vpop.f32.mrb[0].mxu0
    %v596 = vadd.f32 0.0, %v595
    %v597 = vpop.f32.mrb[0].mxu0
    %v598 = vpop.f32.mrb[0].mxu0
    %v599 = vpop.f32.mrb[0].mxu0
    %600 = vdwg.mxu0
    %601 = vrot.lane.b32.xlu0 %v186, 56
    %v602 = vpop.permute.xlu0 %601
    %v604 = vsel %vm190, %v552, 0
    %v607 = vsel %vm331, %v602, 0
    %609 = vmatprep.subr.bf16.mxu0 0
    %610 = vmatpush1.bf16.msra.mxu0 %v607
    %611 = vmatprep.subr.bf16.mxu0 0
    %612 = vmatpush1.bf16.msra.mxu0 0
    %613 = vmatprep.subr.bf16.mxu0 0
    %614 = vmatpush1.bf16.msra.mxu0 0
    %615 = vmatprep.subr.bf16.mxu0 0
    %616 = vmatpush1.bf16.msra.mxu0 0
    %617 = vmatprep.subr.bf16.mxu0 0
    %618 = vmatpush1.bf16.msra.mxu0 0
    %619 = vmatprep.subr.bf16.mxu0 0
    %620 = vmatpush1.bf16.msra.mxu0 0
    %621 = vmatprep.subr.bf16.mxu0 0
    %622 = vmatpush1.bf16.msra.mxu0 0
    %623 = vmatprep.subr.bf16.mxu0 0
    %624 = vmatpush1.bf16.msra.mxu0 0
    %625 = vmatprep.subr.bf16.mxu0 0
    %626 = vmatpush1.bf16.msra.mxu0 0
    %627 = vmatprep.subr.bf16.mxu0 0
    %628 = vmatpush1.bf16.msra.mxu0 0
    %629 = vmatprep.subr.bf16.mxu0 0
    %630 = vmatpush1.bf16.msra.mxu0 0
    %631 = vmatprep.subr.bf16.mxu0 0
    %632 = vmatpush1.bf16.msra.mxu0 0
    %633 = vmatprep.subr.bf16.mxu0 0
    %634 = vmatpush1.bf16.msra.mxu0 0
    %635 = vmatprep.subr.bf16.mxu0 0
    %636 = vmatpush1.bf16.msra.mxu0 0
    %637 = vmatprep.subr.bf16.mxu0 0
    %638 = vmatpush1.bf16.msra.mxu0 0
    %639 = vmatprep.subr.bf16.mxu0 0
    %640 = vmatpush1.bf16.msra.mxu0 0
    %641 = vmatprep.mubr.bf16.mxu0 0
    %642 = vmatmul.mubr.bf16.gmra.mrb[0].mxu0 %v604
    %v643 = vpop.f32.mrb[0].mxu0
    %v644 = vadd.f32 0.0, %v643
    %v645 = vpop.f32.mrb[0].mxu0
    %v646 = vpop.f32.mrb[0].mxu0
    %v647 = vpop.f32.mrb[0].mxu0
    %648 = vdwg.mxu0
    %v649 = vpack.c.bf16 %v644, %v596
    %s650 = scalar_lea.vmem %s6, 4
    %v651 = vld [vmem:[%s650] sm:$0xf]
    %v653 = vsel %vm190, %v649, 0
    %v656 = vsel %vm331, %v651, 0
    %658 = vmatprep.subr.bf16.mxu0 0
    %659 = vmatpush1.bf16.msra.mxu0 %v656
    %660 = vmatprep.subr.bf16.mxu0 0
    %661 = vmatpush1.bf16.msra.mxu0 0
    %662 = vmatprep.subr.bf16.mxu0 0
    %663 = vmatpush1.bf16.msra.mxu0 0
    %664 = vmatprep.subr.bf16.mxu0 0
    %665 = vmatpush1.bf16.msra.mxu0 0
    %666 = vmatprep.subr.bf16.mxu0 0
    %667 = vmatpush1.bf16.msra.mxu0 0
    %668 = vmatprep.subr.bf16.mxu0 0
    %669 = vmatpush1.bf16.msra.mxu0 0
    %670 = vmatprep.subr.bf16.mxu0 0
    %671 = vmatpush1.bf16.msra.mxu0 0
    %672 = vmatprep.subr.bf16.mxu0 0
    %673 = vmatpush1.bf16.msra.mxu0 0
    %674 = vmatprep.subr.bf16.mxu0 0
    %675 = vmatpush1.bf16.msra.mxu0 0
    %676 = vmatprep.subr.bf16.mxu0 0
    %677 = vmatpush1.bf16.msra.mxu0 0
    %678 = vmatprep.subr.bf16.mxu0 0
    %679 = vmatpush1.bf16.msra.mxu0 0
    %680 = vmatprep.subr.bf16.mxu0 0
    %681 = vmatpush1.bf16.msra.mxu0 0
    %682 = vmatprep.subr.bf16.mxu0 0
    %683 = vmatpush1.bf16.msra.mxu0 0
    %684 = vmatprep.subr.bf16.mxu0 0
    %685 = vmatpush1.bf16.msra.mxu0 0
    %686 = vmatprep.subr.bf16.mxu0 0
    %687 = vmatpush1.bf16.msra.mxu0 0
    %688 = vmatprep.subr.bf16.mxu0 0
    %689 = vmatpush1.bf16.msra.mxu0 0
    %690 = vmatprep.mubr.bf16.mxu0 0
    %691 = vmatmul.mubr.bf16.gmra.mrb[0].mxu0 %v653
    %v692 = vpop.f32.mrb[0].mxu0
    %v693 = vadd.f32 0.0, %v692
    %v694 = vpop.f32.mrb[0].mxu0
    %v695 = vpop.f32.mrb[0].mxu0
    %v696 = vadd.f32 0.0, %v695
    %v697 = vpop.f32.mrb[0].mxu0
    %698 = vdwg.mxu0
    %v700 = vsel %vm190, %v423, 0
    %v703 = vsel %vm331, %v424, 0
    %705 = vmatprep.subr.bf16.mxu0 0
    %706 = vmatpush1.bf16.msra.mxu0 %v703
    %707 = vmatprep.subr.bf16.mxu0 0
    %708 = vmatpush1.bf16.msra.mxu0 0
    %709 = vmatprep.subr.bf16.mxu0 0
    %710 = vmatpush1.bf16.msra.mxu0 0
    %711 = vmatprep.subr.bf16.mxu0 0
    %712 = vmatpush1.bf16.msra.mxu0 0
    %713 = vmatprep.subr.bf16.mxu0 0
    %714 = vmatpush1.bf16.msra.mxu0 0
    %715 = vmatprep.subr.bf16.mxu0 0
    %716 = vmatpush1.bf16.msra.mxu0 0
    %717 = vmatprep.subr.bf16.mxu0 0
    %718 = vmatpush1.bf16.msra.mxu0 0
    %719 = vmatprep.subr.bf16.mxu0 0
    %720 = vmatpush1.bf16.msra.mxu0 0
    %721 = vmatprep.subr.bf16.mxu0 0
    %722 = vmatpush1.bf16.msra.mxu0 0
    %723 = vmatprep.subr.bf16.mxu0 0
    %724 = vmatpush1.bf16.msra.mxu0 0
    %725 = vmatprep.subr.bf16.mxu0 0
    %726 = vmatpush1.bf16.msra.mxu0 0
    %727 = vmatprep.subr.bf16.mxu0 0
    %728 = vmatpush1.bf16.msra.mxu0 0
    %729 = vmatprep.subr.bf16.mxu0 0
    %730 = vmatpush1.bf16.msra.mxu0 0
    %731 = vmatprep.subr.bf16.mxu0 0
    %732 = vmatpush1.bf16.msra.mxu0 0
    %733 = vmatprep.subr.bf16.mxu0 0
    %734 = vmatpush1.bf16.msra.mxu0 0
    %735 = vmatprep.subr.bf16.mxu0 0
    %736 = vmatpush1.bf16.msra.mxu0 0
    %737 = vmatprep.mubr.bf16.mxu0 0
    %738 = vmatmul.mubr.bf16.gmra.mrb[0].mxu0 %v700
    %v739 = vpop.f32.mrb[0].mxu0
    %v740 = vadd.f32 %v693, %v739
    %v741 = vpop.f32.mrb[0].mxu0
    %v742 = vpop.f32.mrb[0].mxu0
    %v743 = vadd.f32 %v696, %v742
    %v744 = vpop.f32.mrb[0].mxu0
    %745 = vdwg.mxu0
    %746 = vrot.lane.b32.xlu0 %v185, 112
    %v747 = vpop.permute.xlu0 %746
    %748 = vrot.lane.b32.xlu0 %v185, 80
    %v749 = vpop.permute.xlu0 %748
    %v751 = vsel %vm190, %v747, 0
    %v754 = vsel %vm190, %v749, 0
    %756 = vmatprep.subr.bf16.mxu0 0
    %757 = vmatpush1.bf16.xpose.msra.mxu0 %v754
    %758 = vmatprep.subr.bf16.mxu0 0
    %759 = vmatpush1.bf16.xpose.msra.mxu0 0
    %760 = vmatprep.subr.bf16.mxu0 0
    %761 = vmatpush1.bf16.xpose.msra.mxu0 0
    %762 = vmatprep.subr.bf16.mxu0 0
    %763 = vmatpush1.bf16.xpose.msra.mxu0 0
    %764 = vmatprep.subr.bf16.mxu0 0
    %765 = vmatpush1.bf16.xpose.msra.mxu0 0
    %766 = vmatprep.subr.bf16.mxu0 0
    %767 = vmatpush1.bf16.xpose.msra.mxu0 0
    %768 = vmatprep.subr.bf16.mxu0 0
    %769 = vmatpush1.bf16.xpose.msra.mxu0 0
    %770 = vmatprep.subr.bf16.mxu0 0
    %771 = vmatpush1.bf16.xpose.msra.mxu0 0
    %772 = vmatprep.subr.bf16.mxu0 0
    %773 = vmatpush1.bf16.xpose.msra.mxu0 0
    %774 = vmatprep.subr.bf16.mxu0 0
    %775 = vmatpush1.bf16.xpose.msra.mxu0 0
    %776 = vmatprep.subr.bf16.mxu0 0
    %777 = vmatpush1.bf16.xpose.msra.mxu0 0
    %778 = vmatprep.subr.bf16.mxu0 0
    %779 = vmatpush1.bf16.xpose.msra.mxu0 0
    %780 = vmatprep.subr.bf16.mxu0 0
    %781 = vmatpush1.bf16.xpose.msra.mxu0 0
    %782 = vmatprep.subr.bf16.mxu0 0
    %783 = vmatpush1.bf16.xpose.msra.mxu0 0
    %784 = vmatprep.subr.bf16.mxu0 0
    %785 = vmatpush1.bf16.xpose.msra.mxu0 0
    %786 = vmatprep.subr.bf16.mxu0 0
    %787 = vmatpush1.bf16.xpose.msra.mxu0 0
    %788 = vmatprep.mubr.bf16.mxu0 0
    %789 = vmatmul.mubr.bf16.gmra.mrb[0].mxu0 %v751
    %v790 = vpop.f32.mrb[0].mxu0
    %v791 = vadd.f32 0.0, %v790
    %v792 = vpop.f32.mrb[0].mxu0
    %v793 = vpop.f32.mrb[0].mxu0
    %v794 = vpop.f32.mrb[0].mxu0
    %795 = vdwg.mxu0
    %796 = vrot.lane.b32.xlu0 %v186, 112
    %v797 = vpop.permute.xlu0 %796
    %798 = vrot.lane.b32.xlu0 %v186, 80
    %v799 = vpop.permute.xlu0 %798
    %v801 = vsel %vm190, %v797, 0
    %v804 = vsel %vm190, %v799, 0
    %806 = vmatprep.subr.bf16.mxu0 0
    %807 = vmatpush1.bf16.xpose.msra.mxu0 %v804
    %808 = vmatprep.subr.bf16.mxu0 0
    %809 = vmatpush1.bf16.xpose.msra.mxu0 0
    %810 = vmatprep.subr.bf16.mxu0 0
    %811 = vmatpush1.bf16.xpose.msra.mxu0 0
    %812 = vmatprep.subr.bf16.mxu0 0
    %813 = vmatpush1.bf16.xpose.msra.mxu0 0
    %814 = vmatprep.subr.bf16.mxu0 0
    %815 = vmatpush1.bf16.xpose.msra.mxu0 0
    %816 = vmatprep.subr.bf16.mxu0 0
    %817 = vmatpush1.bf16.xpose.msra.mxu0 0
    %818 = vmatprep.subr.bf16.mxu0 0
    %819 = vmatpush1.bf16.xpose.msra.mxu0 0
    %820 = vmatprep.subr.bf16.mxu0 0
    %821 = vmatpush1.bf16.xpose.msra.mxu0 0
    %822 = vmatprep.subr.bf16.mxu0 0
    %823 = vmatpush1.bf16.xpose.msra.mxu0 0
    %824 = vmatprep.subr.bf16.mxu0 0
    %825 = vmatpush1.bf16.xpose.msra.mxu0 0
    %826 = vmatprep.subr.bf16.mxu0 0
    %827 = vmatpush1.bf16.xpose.msra.mxu0 0
    %828 = vmatprep.subr.bf16.mxu0 0
    %829 = vmatpush1.bf16.xpose.msra.mxu0 0
    %830 = vmatprep.subr.bf16.mxu0 0
    %831 = vmatpush1.bf16.xpose.msra.mxu0 0
    %832 = vmatprep.subr.bf16.mxu0 0
    %833 = vmatpush1.bf16.xpose.msra.mxu0 0
    %834 = vmatprep.subr.bf16.mxu0 0
    %835 = vmatpush1.bf16.xpose.msra.mxu0 0
    %836 = vmatprep.subr.bf16.mxu0 0
    %837 = vmatpush1.bf16.xpose.msra.mxu0 0
    %838 = vmatprep.mubr.bf16.mxu0 0
    %839 = vmatmul.mubr.bf16.gmra.mrb[0].mxu0 %v801
    %v840 = vpop.f32.mrb[0].mxu0
    %v841 = vadd.f32 0.0, %v840
    %v842 = vpop.f32.mrb[0].mxu0
    %v843 = vpop.f32.mrb[0].mxu0
    %v844 = vpop.f32.mrb[0].mxu0
    %845 = vdwg.mxu0
    %v846 = vmul.f32 %v791, 0.35355338
    %v847 = vmul.f32 %v841, 0.35355338
    %v848 = vadd.f32 %v846, %v293
    %v849 = vadd.f32 %v847, %v297
    %v850 = vsel %vm190, %v848, -inf
    %851 = vmax.xlane.f32.xlu0 %v850
    %v852 = vpop.xlane.xlu0 %851
    %v853 = vsel %vm190, %v849, -inf
    %854 = vmax.xlane.f32.xlu0 %v853
    %v855 = vpop.xlane.xlu0 %854
    %v856 = vsub.f32 %v848, %v852
    %v857 = vsub.f32 %v849, %v855
    %v858 = vmul.f32 %v856, 1.442695
    %v859 = vpow.pop %v858
    %v860 = vmul.f32 %v857, 1.442695
    %v861 = vpow.pop %v860
    %v862 = vsel %vm190, %v859, 0.0
    %863 = vadd.xlane.f32.xlu0 %v862
    %v864 = vpop.xlane.xlu0 %863
    %v865 = vsel %vm190, %v861, 0.0
    %866 = vadd.xlane.f32.xlu0 %v865
    %v867 = vpop.xlane.xlu0 %866
    %v868 = vrcp.pop %v864
    %v869 = vrcp.pop %v867
    %v870 = vmul.f32 %v859, %v868
    %v871 = vmul.f32 %v861, %v869
    %v872 = vpack.c.bf16 %v870, %v870
    %v873 = vpack.c.bf16 %v871, %v871
    %874 = vrot.lane.b32.xlu0 %v185, 48
    %v875 = vpop.permute.xlu0 %874
    %v877 = vsel %vm190, %v872, 0
    %v880 = vsel %vm331, %v875, 0
    %882 = vmatprep.subr.bf16.mxu0 0
    %883 = vmatpush1.bf16.msra.mxu0 %v880
    %884 = vmatprep.subr.bf16.mxu0 0
    %885 = vmatpush1.bf16.msra.mxu0 0
    %886 = vmatprep.subr.bf16.mxu0 0
    %887 = vmatpush1.bf16.msra.mxu0 0
    %888 = vmatprep.subr.bf16.mxu0 0
    %889 = vmatpush1.bf16.msra.mxu0 0
    %890 = vmatprep.subr.bf16.mxu0 0
    %891 = vmatpush1.bf16.msra.mxu0 0
    %892 = vmatprep.subr.bf16.mxu0 0
    %893 = vmatpush1.bf16.msra.mxu0 0
    %894 = vmatprep.subr.bf16.mxu0 0
    %895 = vmatpush1.bf16.msra.mxu0 0
    %896 = vmatprep.subr.bf16.mxu0 0
    %897 = vmatpush1.bf16.msra.mxu0 0
    %898 = vmatprep.subr.bf16.mxu0 0
    %899 = vmatpush1.bf16.msra.mxu0 0
    %900 = vmatprep.subr.bf16.mxu0 0
    %901 = vmatpush1.bf16.msra.mxu0 0
    %902 = vmatprep.subr.bf16.mxu0 0
    %903 = vmatpush1.bf16.msra.mxu0 0
    %904 = vmatprep.subr.bf16.mxu0 0
    %905 = vmatpush1.bf16.msra.mxu0 0
    %906 = vmatprep.subr.bf16.mxu0 0
    %907 = vmatpush1.bf16.msra.mxu0 0
    %908 = vmatprep.subr.bf16.mxu0 0
    %909 = vmatpush1.bf16.msra.mxu0 0
    %910 = vmatprep.subr.bf16.mxu0 0
    %911 = vmatpush1.bf16.msra.mxu0 0
    %912 = vmatprep.subr.bf16.mxu0 0
    %913 = vmatpush1.bf16.msra.mxu0 0
    %914 = vmatprep.mubr.bf16.mxu0 0
    %915 = vmatmul.mubr.bf16.gmra.mrb[0].mxu0 %v877
    %v916 = vpop.f32.mrb[0].mxu0
    %v917 = vadd.f32 0.0, %v916
    %v918 = vpop.f32.mrb[0].mxu0
    %v919 = vpop.f32.mrb[0].mxu0
    %v920 = vpop.f32.mrb[0].mxu0
    %921 = vdwg.mxu0
    %922 = vrot.lane.b32.xlu0 %v186, 48
    %v923 = vpop.permute.xlu0 %922
    %v925 = vsel %vm190, %v873, 0
    %v928 = vsel %vm331, %v923, 0
    %930 = vmatprep.subr.bf16.mxu0 0
    %931 = vmatpush1.bf16.msra.mxu0 %v928
    %932 = vmatprep.subr.bf16.mxu0 0
    %933 = vmatpush1.bf16.msra.mxu0 0
    %934 = vmatprep.subr.bf16.mxu0 0
    %935 = vmatpush1.bf16.msra.mxu0 0
    %936 = vmatprep.subr.bf16.mxu0 0
    %937 = vmatpush1.bf16.msra.mxu0 0
    %938 = vmatprep.subr.bf16.mxu0 0
    %939 = vmatpush1.bf16.msra.mxu0 0
    %940 = vmatprep.subr.bf16.mxu0 0
    %941 = vmatpush1.bf16.msra.mxu0 0
    %942 = vmatprep.subr.bf16.mxu0 0
    %943 = vmatpush1.bf16.msra.mxu0 0
    %944 = vmatprep.subr.bf16.mxu0 0
    %945 = vmatpush1.bf16.msra.mxu0 0
    %946 = vmatprep.subr.bf16.mxu0 0
    %947 = vmatpush1.bf16.msra.mxu0 0
    %948 = vmatprep.subr.bf16.mxu0 0
    %949 = vmatpush1.bf16.msra.mxu0 0
    %950 = vmatprep.subr.bf16.mxu0 0
    %951 = vmatpush1.bf16.msra.mxu0 0
    %952 = vmatprep.subr.bf16.mxu0 0
    %953 = vmatpush1.bf16.msra.mxu0 0
    %954 = vmatprep.subr.bf16.mxu0 0
    %955 = vmatpush1.bf16.msra.mxu0 0
    %956 = vmatprep.subr.bf16.mxu0 0
    %957 = vmatpush1.bf16.msra.mxu0 0
    %958 = vmatprep.subr.bf16.mxu0 0
    %959 = vmatpush1.bf16.msra.mxu0 0
    %960 = vmatprep.subr.bf16.mxu0 0
    %961 = vmatpush1.bf16.msra.mxu0 0
    %962 = vmatprep.mubr.bf16.mxu0 0
    %963 = vmatmul.mubr.bf16.gmra.mrb[0].mxu0 %v925
    %v964 = vpop.f32.mrb[0].mxu0
    %v965 = vadd.f32 0.0, %v964
    %v966 = vpop.f32.mrb[0].mxu0
    %v967 = vpop.f32.mrb[0].mxu0
    %v968 = vpop.f32.mrb[0].mxu0
    %969 = vdwg.mxu0
    %v970 = vpack.c.bf16 %v965, %v917
    %s971 = scalar_lea.vmem %s6, 8
    %v972 = vld [vmem:[%s971] sm:$0xf]
    %v974 = vsel %vm190, %v970, 0
    %v977 = vsel %vm331, %v972, 0
    %979 = vmatprep.subr.bf16.mxu0 0
    %980 = vmatpush1.bf16.msra.mxu0 %v977
    %981 = vmatprep.subr.bf16.mxu0 0
    %982 = vmatpush1.bf16.msra.mxu0 0
    %983 = vmatprep.subr.bf16.mxu0 0
    %984 = vmatpush1.bf16.msra.mxu0 0
    %985 = vmatprep.subr.bf16.mxu0 0
    %986 = vmatpush1.bf16.msra.mxu0 0
    %987 = vmatprep.subr.bf16.mxu0 0
    %988 = vmatpush1.bf16.msra.mxu0 0
    %989 = vmatprep.subr.bf16.mxu0 0
    %990 = vmatpush1.bf16.msra.mxu0 0
    %991 = vmatprep.subr.bf16.mxu0 0
    %992 = vmatpush1.bf16.msra.mxu0 0
    %993 = vmatprep.subr.bf16.mxu0 0
    %994 = vmatpush1.bf16.msra.mxu0 0
    %995 = vmatprep.subr.bf16.mxu0 0
    %996 = vmatpush1.bf16.msra.mxu0 0
    %997 = vmatprep.subr.bf16.mxu0 0
    %998 = vmatpush1.bf16.msra.mxu0 0
    %999 = vmatprep.subr.bf16.mxu0 0
    %1000 = vmatpush1.bf16.msra.mxu0 0
    %1001 = vmatprep.subr.bf16.mxu0 0
    %1002 = vmatpush1.bf16.msra.mxu0 0
    %1003 = vmatprep.subr.bf16.mxu0 0
    %1004 = vmatpush1.bf16.msra.mxu0 0
    %1005 = vmatprep.subr.bf16.mxu0 0
    %1006 = vmatpush1.bf16.msra.mxu0 0
    %1007 = vmatprep.subr.bf16.mxu0 0
    %1008 = vmatpush1.bf16.msra.mxu0 0
    %1009 = vmatprep.subr.bf16.mxu0 0
    %1010 = vmatpush1.bf16.msra.mxu0 0
    %1011 = vmatprep.mubr.bf16.mxu0 0
    %1012 = vmatmul.mubr.bf16.gmra.mrb[0].mxu0 %v974
    %v1013 = vpop.f32.mrb[0].mxu0
    %v1014 = vadd.f32 0.0, %v1013
    %v1015 = vpop.f32.mrb[0].mxu0
    %v1016 = vpop.f32.mrb[0].mxu0
    %v1017 = vadd.f32 0.0, %v1016
    %v1018 = vpop.f32.mrb[0].mxu0
    %1019 = vdwg.mxu0
    %v1020 = vadd.f32 %v740, %v1014
    %v1021 = vadd.f32 %v743, %v1017
    %1022 = vrot.lane.b32.xlu0 %v185, 104
    %v1023 = vpop.permute.xlu0 %1022
    %1024 = vrot.lane.b32.xlu0 %v185, 72
    %v1025 = vpop.permute.xlu0 %1024
    %v1027 = vsel %vm190, %v1023, 0
    %v1030 = vsel %vm190, %v1025, 0
    %1032 = vmatprep.subr.bf16.mxu0 0
    %1033 = vmatpush1.bf16.xpose.msra.mxu0 %v1030
    %1034 = vmatprep.subr.bf16.mxu0 0
    %1035 = vmatpush1.bf16.xpose.msra.mxu0 0
    %1036 = vmatprep.subr.bf16.mxu0 0
    %1037 = vmatpush1.bf16.xpose.msra.mxu0 0
    %1038 = vmatprep.subr.bf16.mxu0 0
    %1039 = vmatpush1.bf16.xpose.msra.mxu0 0
    %1040 = vmatprep.subr.bf16.mxu0 0
    %1041 = vmatpush1.bf16.xpose.msra.mxu0 0
    %1042 = vmatprep.subr.bf16.mxu0 0
    %1043 = vmatpush1.bf16.xpose.msra.mxu0 0
    %1044 = vmatprep.subr.bf16.mxu0 0
    %1045 = vmatpush1.bf16.xpose.msra.mxu0 0
    %1046 = vmatprep.subr.bf16.mxu0 0
    %1047 = vmatpush1.bf16.xpose.msra.mxu0 0
    %1048 = vmatprep.subr.bf16.mxu0 0
    %1049 = vmatpush1.bf16.xpose.msra.mxu0 0
    %1050 = vmatprep.subr.bf16.mxu0 0
    %1051 = vmatpush1.bf16.xpose.msra.mxu0 0
    %1052 = vmatprep.subr.bf16.mxu0 0
    %1053 = vmatpush1.bf16.xpose.msra.mxu0 0
    %1054 = vmatprep.subr.bf16.mxu0 0
    %1055 = vmatpush1.bf16.xpose.msra.mxu0 0
    %1056 = vmatprep.subr.bf16.mxu0 0
    %1057 = vmatpush1.bf16.xpose.msra.mxu0 0
    %1058 = vmatprep.subr.bf16.mxu0 0
    %1059 = vmatpush1.bf16.xpose.msra.mxu0 0
    %1060 = vmatprep.subr.bf16.mxu0 0
    %1061 = vmatpush1.bf16.xpose.msra.mxu0 0
    %1062 = vmatprep.subr.bf16.mxu0 0
    %1063 = vmatpush1.bf16.xpose.msra.mxu0 0
    %1064 = vmatprep.mubr.bf16.mxu0 0
    %1065 = vmatmul.mubr.bf16.gmra.mrb[0].mxu0 %v1027
    %v1066 = vpop.f32.mrb[0].mxu0
    %v1067 = vadd.f32 0.0, %v1066
    %v1068 = vpop.f32.mrb[0].mxu0
    %v1069 = vpop.f32.mrb[0].mxu0
    %v1070 = vpop.f32.mrb[0].mxu0
    %1071 = vdwg.mxu0
    %1072 = vrot.lane.b32.xlu0 %v186, 104
    %v1073 = vpop.permute.xlu0 %1072
    %1074 = vrot.lane.b32.xlu0 %v186, 72
    %v1075 = vpop.permute.xlu0 %1074
    %v1077 = vsel %vm190, %v1073, 0
    %v1080 = vsel %vm190, %v1075, 0
    %1082 = vmatprep.subr.bf16.mxu0 0
    %1083 = vmatpush1.bf16.xpose.msra.mxu0 %v1080
    %1084 = vmatprep.subr.bf16.mxu0 0
    %1085 = vmatpush1.bf16.xpose.msra.mxu0 0
    %1086 = vmatprep.subr.bf16.mxu0 0
    %1087 = vmatpush1.bf16.xpose.msra.mxu0 0
    %1088 = vmatprep.subr.bf16.mxu0 0
    %1089 = vmatpush1.bf16.xpose.msra.mxu0 0
    %1090 = vmatprep.subr.bf16.mxu0 0
    %1091 = vmatpush1.bf16.xpose.msra.mxu0 0
    %1092 = vmatprep.subr.bf16.mxu0 0
    %1093 = vmatpush1.bf16.xpose.msra.mxu0 0
    %1094 = vmatprep.subr.bf16.mxu0 0
    %1095 = vmatpush1.bf16.xpose.msra.mxu0 0
    %1096 = vmatprep.subr.bf16.mxu0 0
    %1097 = vmatpush1.bf16.xpose.msra.mxu0 0
    %1098 = vmatprep.subr.bf16.mxu0 0
    %1099 = vmatpush1.bf16.xpose.msra.mxu0 0
    %1100 = vmatprep.subr.bf16.mxu0 0
    %1101 = vmatpush1.bf16.xpose.msra.mxu0 0
    %1102 = vmatprep.subr.bf16.mxu0 0
    %1103 = vmatpush1.bf16.xpose.msra.mxu0 0
    %1104 = vmatprep.subr.bf16.mxu0 0
    %1105 = vmatpush1.bf16.xpose.msra.mxu0 0
    %1106 = vmatprep.subr.bf16.mxu0 0
    %1107 = vmatpush1.bf16.xpose.msra.mxu0 0
    %1108 = vmatprep.subr.bf16.mxu0 0
    %1109 = vmatpush1.bf16.xpose.msra.mxu0 0
    %1110 = vmatprep.subr.bf16.mxu0 0
    %1111 = vmatpush1.bf16.xpose.msra.mxu0 0
    %1112 = vmatprep.subr.bf16.mxu0 0
    %1113 = vmatpush1.bf16.xpose.msra.mxu0 0
    %1114 = vmatprep.mubr.bf16.mxu0 0
    %1115 = vmatmul.mubr.bf16.gmra.mrb[0].mxu0 %v1077
    %v1116 = vpop.f32.mrb[0].mxu0
    %v1117 = vadd.f32 0.0, %v1116
    %v1118 = vpop.f32.mrb[0].mxu0
    %v1119 = vpop.f32.mrb[0].mxu0
    %v1120 = vpop.f32.mrb[0].mxu0
    %1121 = vdwg.mxu0
    %v1122 = vmul.f32 %v1067, 0.35355338
    %v1123 = vmul.f32 %v1117, 0.35355338
    %v1124 = vadd.f32 %v1122, %v293
    %v1125 = vadd.f32 %v1123, %v297
    %v1126 = vsel %vm190, %v1124, -inf
    %1127 = vmax.xlane.f32.xlu0 %v1126
    %v1128 = vpop.xlane.xlu0 %1127
    %v1129 = vsel %vm190, %v1125, -inf
    %1130 = vmax.xlane.f32.xlu0 %v1129
    %v1131 = vpop.xlane.xlu0 %1130
    %v1132 = vsub.f32 %v1124, %v1128
    %v1133 = vsub.f32 %v1125, %v1131
    %v1134 = vmul.f32 %v1132, 1.442695
    %v1135 = vpow.pop %v1134
    %v1136 = vmul.f32 %v1133, 1.442695
    %v1137 = vpow.pop %v1136
    %v1138 = vsel %vm190, %v1135, 0.0
    %1139 = vadd.xlane.f32.xlu0 %v1138
    %v1140 = vpop.xlane.xlu0 %1139
    %v1141 = vsel %vm190, %v1137, 0.0
    %1142 = vadd.xlane.f32.xlu0 %v1141
    %v1143 = vpop.xlane.xlu0 %1142
    %v1144 = vrcp.pop %v1140
    %v1145 = vrcp.pop %v1143
    %v1146 = vmul.f32 %v1135, %v1144
    %v1147 = vmul.f32 %v1137, %v1145
    %v1148 = vpack.c.bf16 %v1146, %v1146
    %v1149 = vpack.c.bf16 %v1147, %v1147
    %1150 = vrot.lane.b32.xlu0 %v185, 40
    %v1151 = vpop.permute.xlu0 %1150
    %v1153 = vsel %vm190, %v1148, 0
    %v1156 = vsel %vm331, %v1151, 0
    %1158 = vmatprep.subr.bf16.mxu0 0
    %1159 = vmatpush1.bf16.msra.mxu0 %v1156
    %1160 = vmatprep.subr.bf16.mxu0 0
    %1161 = vmatpush1.bf16.msra.mxu0 0
    %1162 = vmatprep.subr.bf16.mxu0 0
    %1163 = vmatpush1.bf16.msra.mxu0 0
    %1164 = vmatprep.subr.bf16.mxu0 0
    %1165 = vmatpush1.bf16.msra.mxu0 0
    %1166 = vmatprep.subr.bf16.mxu0 0
    %1167 = vmatpush1.bf16.msra.mxu0 0
    %1168 = vmatprep.subr.bf16.mxu0 0
    %1169 = vmatpush1.bf16.msra.mxu0 0
    %1170 = vmatprep.subr.bf16.mxu0 0
    %1171 = vmatpush1.bf16.msra.mxu0 0
    %1172 = vmatprep.subr.bf16.mxu0 0
    %1173 = vmatpush1.bf16.msra.mxu0 0
    %1174 = vmatprep.subr.bf16.mxu0 0
    %1175 = vmatpush1.bf16.msra.mxu0 0
    %1176 = vmatprep.subr.bf16.mxu0 0
    %1177 = vmatpush1.bf16.msra.mxu0 0
    %1178 = vmatprep.subr.bf16.mxu0 0
    %1179 = vmatpush1.bf16.msra.mxu0 0
    %1180 = vmatprep.subr.bf16.mxu0 0
    %1181 = vmatpush1.bf16.msra.mxu0 0
    %1182 = vmatprep.subr.bf16.mxu0 0
    %1183 = vmatpush1.bf16.msra.mxu0 0
    %1184 = vmatprep.subr.bf16.mxu0 0
    %1185 = vmatpush1.bf16.msra.mxu0 0
    %1186 = vmatprep.subr.bf16.mxu0 0
    %1187 = vmatpush1.bf16.msra.mxu0 0
    %1188 = vmatprep.subr.bf16.mxu0 0
    %1189 = vmatpush1.bf16.msra.mxu0 0
    %1190 = vmatprep.mubr.bf16.mxu0 0
    %1191 = vmatmul.mubr.bf16.gmra.mrb[0].mxu0 %v1153
    %v1192 = vpop.f32.mrb[0].mxu0
    %v1193 = vadd.f32 0.0, %v1192
    %v1194 = vpop.f32.mrb[0].mxu0
    %v1195 = vpop.f32.mrb[0].mxu0
    %v1196 = vpop.f32.mrb[0].mxu0
    %1197 = vdwg.mxu0
    %1198 = vrot.lane.b32.xlu0 %v186, 40
    %v1199 = vpop.permute.xlu0 %1198
    %v1201 = vsel %vm190, %v1149, 0
    %v1204 = vsel %vm331, %v1199, 0
    %1206 = vmatprep.subr.bf16.mxu0 0
    %1207 = vmatpush1.bf16.msra.mxu0 %v1204
    %1208 = vmatprep.subr.bf16.mxu0 0
    %1209 = vmatpush1.bf16.msra.mxu0 0
    %1210 = vmatprep.subr.bf16.mxu0 0
    %1211 = vmatpush1.bf16.msra.mxu0 0
    %1212 = vmatprep.subr.bf16.mxu0 0
    %1213 = vmatpush1.bf16.msra.mxu0 0
    %1214 = vmatprep.subr.bf16.mxu0 0
    %1215 = vmatpush1.bf16.msra.mxu0 0
    %1216 = vmatprep.subr.bf16.mxu0 0
    %1217 = vmatpush1.bf16.msra.mxu0 0
    %1218 = vmatprep.subr.bf16.mxu0 0
    %1219 = vmatpush1.bf16.msra.mxu0 0
    %1220 = vmatprep.subr.bf16.mxu0 0
    %1221 = vmatpush1.bf16.msra.mxu0 0
    %1222 = vmatprep.subr.bf16.mxu0 0
    %1223 = vmatpush1.bf16.msra.mxu0 0
    %1224 = vmatprep.subr.bf16.mxu0 0
    %1225 = vmatpush1.bf16.msra.mxu0 0
    %1226 = vmatprep.subr.bf16.mxu0 0
    %1227 = vmatpush1.bf16.msra.mxu0 0
    %1228 = vmatprep.subr.bf16.mxu0 0
    %1229 = vmatpush1.bf16.msra.mxu0 0
    %1230 = vmatprep.subr.bf16.mxu0 0
    %1231 = vmatpush1.bf16.msra.mxu0 0
    %1232 = vmatprep.subr.bf16.mxu0 0
    %1233 = vmatpush1.bf16.msra.mxu0 0
    %1234 = vmatprep.subr.bf16.mxu0 0
    %1235 = vmatpush1.bf16.msra.mxu0 0
    %1236 = vmatprep.subr.bf16.mxu0 0
    %1237 = vmatpush1.bf16.msra.mxu0 0
    %1238 = vmatprep.mubr.bf16.mxu0 0
    %1239 = vmatmul.mubr.bf16.gmra.mrb[0].mxu0 %v1201
    %v1240 = vpop.f32.mrb[0].mxu0
    %v1241 = vadd.f32 0.0, %v1240
    %v1242 = vpop.f32.mrb[0].mxu0
    %v1243 = vpop.f32.mrb[0].mxu0
    %v1244 = vpop.f32.mrb[0].mxu0
    %1245 = vdwg.mxu0
    %v1246 = vpack.c.bf16 %v1241, %v1193
    %s1247 = scalar_lea.vmem %s6, 12
    %v1248 = vld [vmem:[%s1247] sm:$0xf]
    %v1250 = vsel %vm190, %v1246, 0
    %v1253 = vsel %vm331, %v1248, 0
    %1255 = vmatprep.subr.bf16.mxu0 0
    %1256 = vmatpush1.bf16.msra.mxu0 %v1253
    %1257 = vmatprep.subr.bf16.mxu0 0
    %1258 = vmatpush1.bf16.msra.mxu0 0
    %1259 = vmatprep.subr.bf16.mxu0 0
    %1260 = vmatpush1.bf16.msra.mxu0 0
    %1261 = vmatprep.subr.bf16.mxu0 0
    %1262 = vmatpush1.bf16.msra.mxu0 0
    %1263 = vmatprep.subr.bf16.mxu0 0
    %1264 = vmatpush1.bf16.msra.mxu0 0
    %1265 = vmatprep.subr.bf16.mxu0 0
    %1266 = vmatpush1.bf16.msra.mxu0 0
    %1267 = vmatprep.subr.bf16.mxu0 0
    %1268 = vmatpush1.bf16.msra.mxu0 0
    %1269 = vmatprep.subr.bf16.mxu0 0
    %1270 = vmatpush1.bf16.msra.mxu0 0
    %1271 = vmatprep.subr.bf16.mxu0 0
    %1272 = vmatpush1.bf16.msra.mxu0 0
    %1273 = vmatprep.subr.bf16.mxu0 0
    %1274 = vmatpush1.bf16.msra.mxu0 0
    %1275 = vmatprep.subr.bf16.mxu0 0
    %1276 = vmatpush1.bf16.msra.mxu0 0
    %1277 = vmatprep.subr.bf16.mxu0 0
    %1278 = vmatpush1.bf16.msra.mxu0 0
    %1279 = vmatprep.subr.bf16.mxu0 0
    %1280 = vmatpush1.bf16.msra.mxu0 0
    %1281 = vmatprep.subr.bf16.mxu0 0
    %1282 = vmatpush1.bf16.msra.mxu0 0
    %1283 = vmatprep.subr.bf16.mxu0 0
    %1284 = vmatpush1.bf16.msra.mxu0 0
    %1285 = vmatprep.subr.bf16.mxu0 0
    %1286 = vmatpush1.bf16.msra.mxu0 0
    %1287 = vmatprep.mubr.bf16.mxu0 0
    %1288 = vmatmul.mubr.bf16.gmra.mrb[0].mxu0 %v1250
    %v1289 = vpop.f32.mrb[0].mxu0
    %v1290 = vadd.f32 0.0, %v1289
    %v1291 = vpop.f32.mrb[0].mxu0
    %v1292 = vpop.f32.mrb[0].mxu0
    %v1293 = vadd.f32 0.0, %v1292
    %v1294 = vpop.f32.mrb[0].mxu0
    %1295 = vdwg.mxu0
    %v1296 = vadd.f32 %v1020, %v1290
    %v1297 = vadd.f32 %v1021, %v1293
    %v1298 = vld [vmem:[%s7] sm:$0x1]
    %v1300 = vlaneseq
    %v1301 = vshrl.u32 %v1300, 7
    %v1302 = vsub.s32 0, %v1301
    %v1303 = vrot.slane %v1298, %v1302
    %v1305 = vadd.f32 %v1296, %v1303
    %v1306 = vadd.f32 %v1297, %v1303
    %v1307 = vadd.f32 %v115, %v1305
    %v1308 = vadd.f32 %v116, %v1306
    %v1309 = vld [vmem:[%s8] sm:$0x1]
    %v1310 = vld [vmem:[%s9] sm:$0x1]
    %v1311 = vsel %vm73, %v1307, 0.0
    %1312 = vadd.xlane.f32.xlu0 %v1311
    %v1313 = vpop.xlane.xlu0 %1312
    %v1314 = vsel %vm73, %v1308, 0.0
    %1315 = vadd.xlane.f32.xlu0 %v1314
    %v1316 = vpop.xlane.xlu0 %1315
    %v1317 = vmul.f32 %v1313, %v80
    %v1318 = vmul.f32 %v1316, %v80
    %v1319 = vsub.f32 %v1307, %v1317
    %v1320 = vsub.f32 %v1308, %v1318
    %v1321 = vmul.f32 %v1319, %v1319
    %v1322 = vmul.f32 %v1320, %v1320
    %v1323 = vsel %vm73, %v1321, 0.0
    %1324 = vadd.xlane.f32.xlu0 %v1323
    %v1325 = vpop.xlane.xlu0 %1324
    %v1326 = vsel %vm73, %v1322, 0.0
    %1327 = vadd.xlane.f32.xlu0 %v1326
    %v1328 = vpop.xlane.xlu0 %1327
    %v1329 = vmul.f32 %v1325, %v80
    %v1330 = vmul.f32 %v1328, %v80
    %v1331 = vadd.f32 %v1329, 1e-12
    %v1332 = vadd.f32 %v1330, 1e-12
    %v1333 = vrsqrt.pop %v1331
    %v1334 = vrsqrt.pop %v1332
    %v1335 = vmul.f32 %v1319, %v1333
    %v1336 = vmul.f32 %v1320, %v1334
    %v1338 = vlaneseq
    %v1339 = vshrl.u32 %v1338, 7
    %v1340 = vsub.s32 0, %v1339
    %v1341 = vrot.slane %v1309, %v1340
    %v1343 = vmul.f32 %v1335, %v1341
    %v1344 = vmul.f32 %v1336, %v1341
    %v1346 = vlaneseq
    %v1347 = vshrl.u32 %v1346, 7
    %v1348 = vsub.s32 0, %v1347
    %v1349 = vrot.slane %v1310, %v1348
    %v1351 = vadd.f32 %v1343, %v1349
    %v1352 = vadd.f32 %v1344, %v1349
    %v1353 = vpack.c.bf16 %v1352, %v1351
    %v1354 = vld [vmem:[%s10] sm:$0xf]
    %v1355 = vld [vmem:[%s10 + $0x4] sm:$0xf]
    %v1356 = vld [vmem:[%s10 + $0x8] sm:$0xf]
    %v1357 = vld [vmem:[%s10 + $0xc] sm:$0xf]
    %v1358 = vld [vmem:[%s11] sm:$0x1]
    %v1360 = vlaneseq
    %v1361 = vshrl.u32 %v1360, 7
    %v1362 = vsub.s32 0, %v1361
    %v1363 = vrot.slane %v1358, %v1362
    %v1369 = vunpack.c.l.b16 %v1354
    %v1370 = vunpack.c.l.b16 %v1355
    %v1371 = vunpack.c.l.b16 %v1356
    %v1372 = vunpack.c.l.b16 %v1357
    %v1373 = vpack.c.b16 %v1370, %v1369
    %v1374 = vpack.c.b16 %v1372, %v1371
    %v1378 = vsel %vm73, %v1353, 0
    %1380 = vmatprep.subr.bf16.mxu0 0
    %1381 = vmatpush1.bf16.msra.mxu0 %v1373
    %1382 = vmatprep.subr.bf16.mxu0 0
    %1383 = vmatpush1.bf16.msra.mxu0 %v1374
    %1384 = vmatprep.subr.bf16.mxu0 0
    %1385 = vmatpush1.bf16.msra.mxu0 0
    %1386 = vmatprep.subr.bf16.mxu0 0
    %1387 = vmatpush1.bf16.msra.mxu0 0
    %1388 = vmatprep.subr.bf16.mxu0 0
    %1389 = vmatpush1.bf16.msra.mxu0 0
    %1390 = vmatprep.subr.bf16.mxu0 0
    %1391 = vmatpush1.bf16.msra.mxu0 0
    %1392 = vmatprep.subr.bf16.mxu0 0
    %1393 = vmatpush1.bf16.msra.mxu0 0
    %1394 = vmatprep.subr.bf16.mxu0 0
    %1395 = vmatpush1.bf16.msra.mxu0 0
    %1396 = vmatprep.subr.bf16.mxu0 0
    %1397 = vmatpush1.bf16.msra.mxu0 0
    %1398 = vmatprep.subr.bf16.mxu0 0
    %1399 = vmatpush1.bf16.msra.mxu0 0
    %1400 = vmatprep.subr.bf16.mxu0 0
    %1401 = vmatpush1.bf16.msra.mxu0 0
    %1402 = vmatprep.subr.bf16.mxu0 0
    %1403 = vmatpush1.bf16.msra.mxu0 0
    %1404 = vmatprep.subr.bf16.mxu0 0
    %1405 = vmatpush1.bf16.msra.mxu0 0
    %1406 = vmatprep.subr.bf16.mxu0 0
    %1407 = vmatpush1.bf16.msra.mxu0 0
    %1408 = vmatprep.subr.bf16.mxu0 0
    %1409 = vmatpush1.bf16.msra.mxu0 0
    %1410 = vmatprep.subr.bf16.mxu0 0
    %1411 = vmatpush1.bf16.msra.mxu0 0
    %1412 = vmatprep.mubr.bf16.mxu0 0
    %1413 = vmatmul.mubr.bf16.gmra.mrb[0].mxu0 %v1378
    %v1414 = vpop.f32.mrb[0].mxu0
    %v1415 = vadd.f32 %v1363, %v1414
    %v1416 = vpop.f32.mrb[0].mxu0
    %v1417 = vpop.f32.mrb[0].mxu0
    %v1418 = vadd.f32 %v1363, %v1417
    %v1419 = vpop.f32.mrb[0].mxu0
    %1420 = vdwg.mxu0
    %v1421 = vmul.f32 %v1415, %v1415
    %v1422 = vmul.f32 %v1418, %v1418
    %v1423 = vmul.f32 %v1415, %v1421
    %v1424 = vmul.f32 %v1418, %v1422
    %v1425 = vmul.f32 %v1423, 0.044715
    %v1426 = vmul.f32 %v1424, 0.044715
    %v1427 = vadd.f32 %v1415, %v1425
    %v1428 = vadd.f32 %v1418, %v1426
    %v1429 = vmul.f32 %v1427, 0.7978846
    %v1430 = vmul.f32 %v1428, 0.7978846
    %v1431 = vtanh.pop %v1429
    %v1432 = vtanh.pop %v1430
    %v1433 = vadd.f32 %v1431, 1.0
    %v1434 = vadd.f32 %v1432, 1.0
    %v1435 = vmul.f32 %v1433, 0.5
    %v1436 = vmul.f32 %v1434, 0.5
    %v1437 = vmul.f32 %v1415, %v1435
    %v1438 = vmul.f32 %v1418, %v1436
    %v1439 = vpack.c.bf16 %v1438, %v1437
    %v1440 = vld [vmem:[%s12] sm:$0xf]
    %v1441 = vld [vmem:[%s12 + $0x4] sm:$0xf]
    %v1442 = vld [vmem:[%s12 + $0x8] sm:$0xf]
    %v1443 = vld [vmem:[%s12 + $0xc] sm:$0xf]
    %v1444 = vld [vmem:[%s12 + $0x10] sm:$0xf]
    %v1445 = vld [vmem:[%s12 + $0x14] sm:$0xf]
    %v1446 = vld [vmem:[%s12 + $0x18] sm:$0xf]
    %v1447 = vld [vmem:[%s12 + $0x1c] sm:$0xf]
    %v1448 = vld [vmem:[%s12 + $0x20] sm:$0xf]
    %v1449 = vld [vmem:[%s12 + $0x24] sm:$0xf]
    %v1450 = vld [vmem:[%s12 + $0x28] sm:$0xf]
    %v1451 = vld [vmem:[%s12 + $0x2c] sm:$0xf]
    %v1452 = vld [vmem:[%s12 + $0x30] sm:$0xf]
    %v1453 = vld [vmem:[%s12 + $0x34] sm:$0xf]
    %v1454 = vld [vmem:[%s12 + $0x38] sm:$0xf]
    %v1455 = vld [vmem:[%s12 + $0x3c] sm:$0xf]
    %v1456 = vld [vmem:[%s13] sm:$0x1]
    %v1458 = vlaneseq
    %v1459 = vshrl.u32 %v1458, 7
    %v1460 = vsub.s32 0, %v1459
    %v1461 = vrot.slane %v1456, %v1460
    %v1479 = vunpack.c.l.b16 %v1440
    %v1480 = vunpack.c.l.b16 %v1441
    %v1481 = vunpack.c.l.b16 %v1442
    %v1482 = vunpack.c.l.b16 %v1443
    %v1483 = vunpack.c.l.b16 %v1444
    %v1484 = vunpack.c.l.b16 %v1445
    %v1485 = vunpack.c.l.b16 %v1446
    %v1486 = vunpack.c.l.b16 %v1447
    %v1487 = vunpack.c.l.b16 %v1448
    %v1488 = vunpack.c.l.b16 %v1449
    %v1489 = vunpack.c.l.b16 %v1450
    %v1490 = vunpack.c.l.b16 %v1451
    %v1491 = vunpack.c.l.b16 %v1452
    %v1492 = vunpack.c.l.b16 %v1453
    %v1493 = vunpack.c.l.b16 %v1454
    %v1494 = vunpack.c.l.b16 %v1455
    %v1495 = vpack.c.b16 %v1480, %v1479
    %v1496 = vpack.c.b16 %v1482, %v1481
    %v1497 = vpack.c.b16 %v1484, %v1483
    %v1498 = vpack.c.b16 %v1486, %v1485
    %v1499 = vpack.c.b16 %v1488, %v1487
    %v1500 = vpack.c.b16 %v1490, %v1489
    %v1501 = vpack.c.b16 %v1492, %v1491
    %v1502 = vpack.c.b16 %v1494, %v1493
    %1511 = vmatprep.subr.bf16.mxu0 0
    %1512 = vmatpush1.bf16.msra.mxu0 %v1495
    %1513 = vmatprep.subr.bf16.mxu0 0
    %1514 = vmatpush1.bf16.msra.mxu0 %v1496
    %1515 = vmatprep.subr.bf16.mxu0 0
    %1516 = vmatpush1.bf16.msra.mxu0 %v1497
    %1517 = vmatprep.subr.bf16.mxu0 0
    %1518 = vmatpush1.bf16.msra.mxu0 %v1498
    %1519 = vmatprep.subr.bf16.mxu0 0
    %1520 = vmatpush1.bf16.msra.mxu0 %v1499
    %1521 = vmatprep.subr.bf16.mxu0 0
    %1522 = vmatpush1.bf16.msra.mxu0 %v1500
    %1523 = vmatprep.subr.bf16.mxu0 0
    %1524 = vmatpush1.bf16.msra.mxu0 %v1501
    %1525 = vmatprep.subr.bf16.mxu0 0
    %1526 = vmatpush1.bf16.msra.mxu0 %v1502
    %1527 = vmatprep.subr.bf16.mxu0 0
    %1528 = vmatpush1.bf16.msra.mxu0 0
    %1529 = vmatprep.subr.bf16.mxu0 0
    %1530 = vmatpush1.bf16.msra.mxu0 0
    %1531 = vmatprep.subr.bf16.mxu0 0
    %1532 = vmatpush1.bf16.msra.mxu0 0
    %1533 = vmatprep.subr.bf16.mxu0 0
    %1534 = vmatpush1.bf16.msra.mxu0 0
    %1535 = vmatprep.subr.bf16.mxu0 0
    %1536 = vmatpush1.bf16.msra.mxu0 0
    %1537 = vmatprep.subr.bf16.mxu0 0
    %1538 = vmatpush1.bf16.msra.mxu0 0
    %1539 = vmatprep.subr.bf16.mxu0 0
    %1540 = vmatpush1.bf16.msra.mxu0 0
    %1541 = vmatprep.subr.bf16.mxu0 0
    %1542 = vmatpush1.bf16.msra.mxu0 0
    %1543 = vmatprep.mubr.bf16.mxu0 0
    %1544 = vmatmul.mubr.bf16.gmra.mrb[0].mxu0 %v1439
    %v1545 = vpop.f32.mrb[0].mxu0
    %v1546 = vadd.f32 %v1461, %v1545
    %v1547 = vpop.f32.mrb[0].mxu0
    %v1548 = vpop.f32.mrb[0].mxu0
    %v1549 = vadd.f32 %v1461, %v1548
    %v1550 = vpop.f32.mrb[0].mxu0
    %1551 = vdwg.mxu0
    %v1552 = vadd.f32 %v1351, %v1546
    %v1553 = vadd.f32 %v1352, %v1549
    %v1554 = vld [vmem:[%s14] sm:$0x1]
    %v1555 = vld [vmem:[%s15] sm:$0x1]
    %v1556 = vsel %vm73, %v1552, 0.0
    %1557 = vadd.xlane.f32.xlu0 %v1556
    %v1558 = vpop.xlane.xlu0 %1557
    %v1559 = vsel %vm73, %v1553, 0.0
    %1560 = vadd.xlane.f32.xlu0 %v1559
    %v1561 = vpop.xlane.xlu0 %1560
    %v1562 = vmul.f32 %v1558, %v80
    %v1563 = vmul.f32 %v1561, %v80
    %v1564 = vsub.f32 %v1552, %v1562
    %v1565 = vsub.f32 %v1553, %v1563
    %v1566 = vmul.f32 %v1564, %v1564
    %v1567 = vmul.f32 %v1565, %v1565
    %v1568 = vsel %vm73, %v1566, 0.0
    %1569 = vadd.xlane.f32.xlu0 %v1568
    %v1570 = vpop.xlane.xlu0 %1569
    %v1571 = vsel %vm73, %v1567, 0.0
    %1572 = vadd.xlane.f32.xlu0 %v1571
    %v1573 = vpop.xlane.xlu0 %1572
    %v1574 = vmul.f32 %v1570, %v80
    %v1575 = vmul.f32 %v1573, %v80
    %v1576 = vadd.f32 %v1574, 1e-12
    %v1577 = vadd.f32 %v1575, 1e-12
    %v1578 = vrsqrt.pop %v1576
    %v1579 = vrsqrt.pop %v1577
    %v1580 = vmul.f32 %v1564, %v1578
    %v1581 = vmul.f32 %v1565, %v1579
    %v1583 = vlaneseq
    %v1584 = vshrl.u32 %v1583, 7
    %v1585 = vsub.s32 0, %v1584
    %v1586 = vrot.slane %v1554, %v1585
    %v1588 = vmul.f32 %v1580, %v1586
    %v1589 = vmul.f32 %v1581, %v1586
    %v1591 = vlaneseq
    %v1592 = vshrl.u32 %v1591, 7
    %v1593 = vsub.s32 0, %v1592
    %v1594 = vrot.slane %v1555, %v1593
    %v1596 = vadd.f32 %v1588, %v1594
    %v1597 = vadd.f32 %v1589, %v1594
    %v1598 = vpack.c.bf16 %v1597, %v1596
    %s1599 = scalar_lea.vmem %s4, 16
    %v1600 = vld [vmem:[%s1599] sm:$0xf]
    %v1601 = vld [vmem:[%s1599 + $0x4] sm:$0xf]
    %v1602 = vld [vmem:[%s1599 + $0x8] sm:$0xf]
    %v1603 = vld [vmem:[%s1599 + $0xc] sm:$0xf]
    %s1604 = scalar_lea.vmem %s5, 1
    %v1605 = vld [vmem:[%s1604] sm:$0x1]
    %v1607 = vlaneseq
    %v1608 = vshrl.u32 %v1607, 7
    %v1609 = vsub.s32 0, %v1608
    %v1610 = vrot.slane %v1605, %v1609
    %v1616 = vunpack.c.l.b16 %v1600
    %v1617 = vunpack.c.l.b16 %v1601
    %v1618 = vunpack.c.l.b16 %v1602
    %v1619 = vunpack.c.l.b16 %v1603
    %v1620 = vpack.c.b16 %v1617, %v1616
    %v1621 = vpack.c.b16 %v1619, %v1618
    %v1625 = vsel %vm73, %v1598, 0
    %1627 = vmatprep.subr.bf16.mxu0 0
    %1628 = vmatpush1.bf16.msra.mxu0 %v1620
    %1629 = vmatprep.subr.bf16.mxu0 0
    %1630 = vmatpush1.bf16.msra.mxu0 %v1621
    %1631 = vmatprep.subr.bf16.mxu0 0
    %1632 = vmatpush1.bf16.msra.mxu0 0
    %1633 = vmatprep.subr.bf16.mxu0 0
    %1634 = vmatpush1.bf16.msra.mxu0 0
    %1635 = vmatprep.subr.bf16.mxu0 0
    %1636 = vmatpush1.bf16.msra.mxu0 0
    %1637 = vmatprep.subr.bf16.mxu0 0
    %1638 = vmatpush1.bf16.msra.mxu0 0
    %1639 = vmatprep.subr.bf16.mxu0 0
    %1640 = vmatpush1.bf16.msra.mxu0 0
    %1641 = vmatprep.subr.bf16.mxu0 0
    %1642 = vmatpush1.bf16.msra.mxu0 0
    %1643 = vmatprep.subr.bf16.mxu0 0
    %1644 = vmatpush1.bf16.msra.mxu0 0
    %1645 = vmatprep.subr.bf16.mxu0 0
    %1646 = vmatpush1.bf16.msra.mxu0 0
    %1647 = vmatprep.subr.bf16.mxu0 0
    %1648 = vmatpush1.bf16.msra.mxu0 0
    %1649 = vmatprep.subr.bf16.mxu0 0
    %1650 = vmatpush1.bf16.msra.mxu0 0
    %1651 = vmatprep.subr.bf16.mxu0 0
    %1652 = vmatpush1.bf16.msra.mxu0 0
    %1653 = vmatprep.subr.bf16.mxu0 0
    %1654 = vmatpush1.bf16.msra.mxu0 0
    %1655 = vmatprep.subr.bf16.mxu0 0
    %1656 = vmatpush1.bf16.msra.mxu0 0
    %1657 = vmatprep.subr.bf16.mxu0 0
    %1658 = vmatpush1.bf16.msra.mxu0 0
    %1659 = vmatprep.mubr.bf16.mxu0 0
    %1660 = vmatmul.mubr.bf16.gmra.mrb[0].mxu0 %v1625
    %v1661 = vpop.f32.mrb[0].mxu0
    %v1662 = vadd.f32 %v1610, %v1661
    %v1663 = vpop.f32.mrb[0].mxu0
    %v1664 = vpop.f32.mrb[0].mxu0
    %v1665 = vadd.f32 %v1610, %v1664
    %v1666 = vpop.f32.mrb[0].mxu0
    %1667 = vdwg.mxu0
    %v1668 = vpack.c.bf16 %v1662, %v1662
    %v1669 = vpack.c.bf16 %v1665, %v1665
    %1671 = vrot.lane.b32.xlu0 %v1668, 96
    %v1672 = vpop.permute.xlu0 %1671
    %v1674 = vsel %vm190, %v1668, 0
    %v1677 = vsel %vm190, %v1672, 0
    %1679 = vmatprep.subr.bf16.mxu0 0
    %1680 = vmatpush1.bf16.xpose.msra.mxu0 %v1677
    %1681 = vmatprep.subr.bf16.mxu0 0
    %1682 = vmatpush1.bf16.xpose.msra.mxu0 0
    %1683 = vmatprep.subr.bf16.mxu0 0
    %1684 = vmatpush1.bf16.xpose.msra.mxu0 0
    %1685 = vmatprep.subr.bf16.mxu0 0
    %1686 = vmatpush1.bf16.xpose.msra.mxu0 0
    %1687 = vmatprep.subr.bf16.mxu0 0
    %1688 = vmatpush1.bf16.xpose.msra.mxu0 0
    %1689 = vmatprep.subr.bf16.mxu0 0
    %1690 = vmatpush1.bf16.xpose.msra.mxu0 0
    %1691 = vmatprep.subr.bf16.mxu0 0
    %1692 = vmatpush1.bf16.xpose.msra.mxu0 0
    %1693 = vmatprep.subr.bf16.mxu0 0
    %1694 = vmatpush1.bf16.xpose.msra.mxu0 0
    %1695 = vmatprep.subr.bf16.mxu0 0
    %1696 = vmatpush1.bf16.xpose.msra.mxu0 0
    %1697 = vmatprep.subr.bf16.mxu0 0
    %1698 = vmatpush1.bf16.xpose.msra.mxu0 0
    %1699 = vmatprep.subr.bf16.mxu0 0
    %1700 = vmatpush1.bf16.xpose.msra.mxu0 0
    %1701 = vmatprep.subr.bf16.mxu0 0
    %1702 = vmatpush1.bf16.xpose.msra.mxu0 0
    %1703 = vmatprep.subr.bf16.mxu0 0
    %1704 = vmatpush1.bf16.xpose.msra.mxu0 0
    %1705 = vmatprep.subr.bf16.mxu0 0
    %1706 = vmatpush1.bf16.xpose.msra.mxu0 0
    %1707 = vmatprep.subr.bf16.mxu0 0
    %1708 = vmatpush1.bf16.xpose.msra.mxu0 0
    %1709 = vmatprep.subr.bf16.mxu0 0
    %1710 = vmatpush1.bf16.xpose.msra.mxu0 0
    %1711 = vmatprep.mubr.bf16.mxu0 0
    %1712 = vmatmul.mubr.bf16.gmra.mrb[0].mxu0 %v1674
    %v1713 = vpop.f32.mrb[0].mxu0
    %v1714 = vadd.f32 0.0, %v1713
    %v1715 = vpop.f32.mrb[0].mxu0
    %v1716 = vpop.f32.mrb[0].mxu0
    %v1717 = vpop.f32.mrb[0].mxu0
    %1718 = vdwg.mxu0
    %1720 = vrot.lane.b32.xlu0 %v1669, 96
    %v1721 = vpop.permute.xlu0 %1720
    %v1723 = vsel %vm190, %v1669, 0
    %v1726 = vsel %vm190, %v1721, 0
    %1728 = vmatprep.subr.bf16.mxu0 0
    %1729 = vmatpush1.bf16.xpose.msra.mxu0 %v1726
    %1730 = vmatprep.subr.bf16.mxu0 0
    %1731 = vmatpush1.bf16.xpose.msra.mxu0 0
    %1732 = vmatprep.subr.bf16.mxu0 0
    %1733 = vmatpush1.bf16.xpose.msra.mxu0 0
    %1734 = vmatprep.subr.bf16.mxu0 0
    %1735 = vmatpush1.bf16.xpose.msra.mxu0 0
    %1736 = vmatprep.subr.bf16.mxu0 0
    %1737 = vmatpush1.bf16.xpose.msra.mxu0 0
    %1738 = vmatprep.subr.bf16.mxu0 0
    %1739 = vmatpush1.bf16.xpose.msra.mxu0 0
    %1740 = vmatprep.subr.bf16.mxu0 0
    %1741 = vmatpush1.bf16.xpose.msra.mxu0 0
    %1742 = vmatprep.subr.bf16.mxu0 0
    %1743 = vmatpush1.bf16.xpose.msra.mxu0 0
    %1744 = vmatprep.subr.bf16.mxu0 0
    %1745 = vmatpush1.bf16.xpose.msra.mxu0 0
    %1746 = vmatprep.subr.bf16.mxu0 0
    %1747 = vmatpush1.bf16.xpose.msra.mxu0 0
    %1748 = vmatprep.subr.bf16.mxu0 0
    %1749 = vmatpush1.bf16.xpose.msra.mxu0 0
    %1750 = vmatprep.subr.bf16.mxu0 0
    %1751 = vmatpush1.bf16.xpose.msra.mxu0 0
    %1752 = vmatprep.subr.bf16.mxu0 0
    %1753 = vmatpush1.bf16.xpose.msra.mxu0 0
    %1754 = vmatprep.subr.bf16.mxu0 0
    %1755 = vmatpush1.bf16.xpose.msra.mxu0 0
    %1756 = vmatprep.subr.bf16.mxu0 0
    %1757 = vmatpush1.bf16.xpose.msra.mxu0 0
    %1758 = vmatprep.subr.bf16.mxu0 0
    %1759 = vmatpush1.bf16.xpose.msra.mxu0 0
    %1760 = vmatprep.mubr.bf16.mxu0 0
    %1761 = vmatmul.mubr.bf16.gmra.mrb[0].mxu0 %v1723
    %v1762 = vpop.f32.mrb[0].mxu0
    %v1763 = vadd.f32 0.0, %v1762
    %v1764 = vpop.f32.mrb[0].mxu0
    %v1765 = vpop.f32.mrb[0].mxu0
    %v1766 = vpop.f32.mrb[0].mxu0
    %1767 = vdwg.mxu0
    %v1768 = vmul.f32 %v1714, 0.35355338
    %v1769 = vmul.f32 %v1763, 0.35355338
    %v1770 = vadd.f32 %v1768, %v293
    %v1771 = vadd.f32 %v1769, %v297
    %v1772 = vsel %vm190, %v1770, -inf
    %1773 = vmax.xlane.f32.xlu0 %v1772
    %v1774 = vpop.xlane.xlu0 %1773
    %v1775 = vsel %vm190, %v1771, -inf
    %1776 = vmax.xlane.f32.xlu0 %v1775
    %v1777 = vpop.xlane.xlu0 %1776
    %v1778 = vsub.f32 %v1770, %v1774
    %v1779 = vsub.f32 %v1771, %v1777
    %v1780 = vmul.f32 %v1778, 1.442695
    %v1781 = vpow.pop %v1780
    %v1782 = vmul.f32 %v1779, 1.442695
    %v1783 = vpow.pop %v1782
    %v1784 = vsel %vm190, %v1781, 0.0
    %1785 = vadd.xlane.f32.xlu0 %v1784
    %v1786 = vpop.xlane.xlu0 %1785
    %v1787 = vsel %vm190, %v1783, 0.0
    %1788 = vadd.xlane.f32.xlu0 %v1787
    %v1789 = vpop.xlane.xlu0 %1788
    %v1790 = vrcp.pop %v1786
    %v1791 = vrcp.pop %v1789
    %v1792 = vmul.f32 %v1781, %v1790
    %v1793 = vmul.f32 %v1783, %v1791
    %v1794 = vpack.c.bf16 %v1792, %v1792
    %v1795 = vpack.c.bf16 %v1793, %v1793
    %1796 = vrot.lane.b32.xlu0 %v1668, 64
    %v1797 = vpop.permute.xlu0 %1796
    %v1799 = vsel %vm190, %v1794, 0
    %v1802 = vsel %vm331, %v1797, 0
    %1804 = vmatprep.subr.bf16.mxu0 0
    %1805 = vmatpush1.bf16.msra.mxu0 %v1802
    %1806 = vmatprep.subr.bf16.mxu0 0
    %1807 = vmatpush1.bf16.msra.mxu0 0
    %1808 = vmatprep.subr.bf16.mxu0 0
    %1809 = vmatpush1.bf16.msra.mxu0 0
    %1810 = vmatprep.subr.bf16.mxu0 0
    %1811 = vmatpush1.bf16.msra.mxu0 0
    %1812 = vmatprep.subr.bf16.mxu0 0
    %1813 = vmatpush1.bf16.msra.mxu0 0
    %1814 = vmatprep.subr.bf16.mxu0 0
    %1815 = vmatpush1.bf16.msra.mxu0 0
    %1816 = vmatprep.subr.bf16.mxu0 0
    %1817 = vmatpush1.bf16.msra.mxu0 0
    %1818 = vmatprep.subr.bf16.mxu0 0
    %1819 = vmatpush1.bf16.msra.mxu0 0
    %1820 = vmatprep.subr.bf16.mxu0 0
    %1821 = vmatpush1.bf16.msra.mxu0 0
    %1822 = vmatprep.subr.bf16.mxu0 0
    %1823 = vmatpush1.bf16.msra.mxu0 0
    %1824 = vmatprep.subr.bf16.mxu0 0
    %1825 = vmatpush1.bf16.msra.mxu0 0
    %1826 = vmatprep.subr.bf16.mxu0 0
    %1827 = vmatpush1.bf16.msra.mxu0 0
    %1828 = vmatprep.subr.bf16.mxu0 0
    %1829 = vmatpush1.bf16.msra.mxu0 0
    %1830 = vmatprep.subr.bf16.mxu0 0
    %1831 = vmatpush1.bf16.msra.mxu0 0
    %1832 = vmatprep.subr.bf16.mxu0 0
    %1833 = vmatpush1.bf16.msra.mxu0 0
    %1834 = vmatprep.subr.bf16.mxu0 0
    %1835 = vmatpush1.bf16.msra.mxu0 0
    %1836 = vmatprep.mubr.bf16.mxu0 0
    %1837 = vmatmul.mubr.bf16.gmra.mrb[0].mxu0 %v1799
    %v1838 = vpop.f32.mrb[0].mxu0
    %v1839 = vadd.f32 0.0, %v1838
    %v1840 = vpop.f32.mrb[0].mxu0
    %v1841 = vpop.f32.mrb[0].mxu0
    %v1842 = vpop.f32.mrb[0].mxu0
    %1843 = vdwg.mxu0
    %1844 = vrot.lane.b32.xlu0 %v1669, 64
    %v1845 = vpop.permute.xlu0 %1844
    %v1847 = vsel %vm190, %v1795, 0
    %v1850 = vsel %vm331, %v1845, 0
    %1852 = vmatprep.subr.bf16.mxu0 0
    %1853 = vmatpush1.bf16.msra.mxu0 %v1850
    %1854 = vmatprep.subr.bf16.mxu0 0
    %1855 = vmatpush1.bf16.msra.mxu0 0
    %1856 = vmatprep.subr.bf16.mxu0 0
    %1857 = vmatpush1.bf16.msra.mxu0 0
    %1858 = vmatprep.subr.bf16.mxu0 0
    %1859 = vmatpush1.bf16.msra.mxu0 0
    %1860 = vmatprep.subr.bf16.mxu0 0
    %1861 = vmatpush1.bf16.msra.mxu0 0
    %1862 = vmatprep.subr.bf16.mxu0 0
    %1863 = vmatpush1.bf16.msra.mxu0 0
    %1864 = vmatprep.subr.bf16.mxu0 0
    %1865 = vmatpush1.bf16.msra.mxu0 0
    %1866 = vmatprep.subr.bf16.mxu0 0
    %1867 = vmatpush1.bf16.msra.mxu0 0
    %1868 = vmatprep.subr.bf16.mxu0 0
    %1869 = vmatpush1.bf16.msra.mxu0 0
    %1870 = vmatprep.subr.bf16.mxu0 0
    %1871 = vmatpush1.bf16.msra.mxu0 0
    %1872 = vmatprep.subr.bf16.mxu0 0
    %1873 = vmatpush1.bf16.msra.mxu0 0
    %1874 = vmatprep.subr.bf16.mxu0 0
    %1875 = vmatpush1.bf16.msra.mxu0 0
    %1876 = vmatprep.subr.bf16.mxu0 0
    %1877 = vmatpush1.bf16.msra.mxu0 0
    %1878 = vmatprep.subr.bf16.mxu0 0
    %1879 = vmatpush1.bf16.msra.mxu0 0
    %1880 = vmatprep.subr.bf16.mxu0 0
    %1881 = vmatpush1.bf16.msra.mxu0 0
    %1882 = vmatprep.subr.bf16.mxu0 0
    %1883 = vmatpush1.bf16.msra.mxu0 0
    %1884 = vmatprep.mubr.bf16.mxu0 0
    %1885 = vmatmul.mubr.bf16.gmra.mrb[0].mxu0 %v1847
    %v1886 = vpop.f32.mrb[0].mxu0
    %v1887 = vadd.f32 0.0, %v1886
    %v1888 = vpop.f32.mrb[0].mxu0
    %v1889 = vpop.f32.mrb[0].mxu0
    %v1890 = vpop.f32.mrb[0].mxu0
    %1891 = vdwg.mxu0
    %v1892 = vpack.c.bf16 %v1887, %v1839
    %s1893 = scalar_lea.vmem %s6, 16
    %v1894 = vld [vmem:[%s1893] sm:$0xf]
    %1895 = vrot.lane.b32.xlu0 %v1668, 120
    %v1896 = vpop.permute.xlu0 %1895
    %1897 = vrot.lane.b32.xlu0 %v1668, 88
    %v1898 = vpop.permute.xlu0 %1897
    %v1900 = vsel %vm190, %v1896, 0
    %v1903 = vsel %vm190, %v1898, 0
    %1905 = vmatprep.subr.bf16.mxu0 0
    %1906 = vmatpush1.bf16.xpose.msra.mxu0 %v1903
    %1907 = vmatprep.subr.bf16.mxu0 0
    %1908 = vmatpush1.bf16.xpose.msra.mxu0 0
    %1909 = vmatprep.subr.bf16.mxu0 0
    %1910 = vmatpush1.bf16.xpose.msra.mxu0 0
    %1911 = vmatprep.subr.bf16.mxu0 0
    %1912 = vmatpush1.bf16.xpose.msra.mxu0 0
    %1913 = vmatprep.subr.bf16.mxu0 0
    %1914 = vmatpush1.bf16.xpose.msra.mxu0 0
    %1915 = vmatprep.subr.bf16.mxu0 0
    %1916 = vmatpush1.bf16.xpose.msra.mxu0 0
    %1917 = vmatprep.subr.bf16.mxu0 0
    %1918 = vmatpush1.bf16.xpose.msra.mxu0 0
    %1919 = vmatprep.subr.bf16.mxu0 0
    %1920 = vmatpush1.bf16.xpose.msra.mxu0 0
    %1921 = vmatprep.subr.bf16.mxu0 0
    %1922 = vmatpush1.bf16.xpose.msra.mxu0 0
    %1923 = vmatprep.subr.bf16.mxu0 0
    %1924 = vmatpush1.bf16.xpose.msra.mxu0 0
    %1925 = vmatprep.subr.bf16.mxu0 0
    %1926 = vmatpush1.bf16.xpose.msra.mxu0 0
    %1927 = vmatprep.subr.bf16.mxu0 0
    %1928 = vmatpush1.bf16.xpose.msra.mxu0 0
    %1929 = vmatprep.subr.bf16.mxu0 0
    %1930 = vmatpush1.bf16.xpose.msra.mxu0 0
    %1931 = vmatprep.subr.bf16.mxu0 0
    %1932 = vmatpush1.bf16.xpose.msra.mxu0 0
    %1933 = vmatprep.subr.bf16.mxu0 0
    %1934 = vmatpush1.bf16.xpose.msra.mxu0 0
    %1935 = vmatprep.subr.bf16.mxu0 0
    %1936 = vmatpush1.bf16.xpose.msra.mxu0 0
    %1937 = vmatprep.mubr.bf16.mxu0 0
    %1938 = vmatmul.mubr.bf16.gmra.mrb[0].mxu0 %v1900
    %v1939 = vpop.f32.mrb[0].mxu0
    %v1940 = vadd.f32 0.0, %v1939
    %v1941 = vpop.f32.mrb[0].mxu0
    %v1942 = vpop.f32.mrb[0].mxu0
    %v1943 = vpop.f32.mrb[0].mxu0
    %1944 = vdwg.mxu0
    %1945 = vrot.lane.b32.xlu0 %v1669, 120
    %v1946 = vpop.permute.xlu0 %1945
    %1947 = vrot.lane.b32.xlu0 %v1669, 88
    %v1948 = vpop.permute.xlu0 %1947
    %v1950 = vsel %vm190, %v1946, 0
    %v1953 = vsel %vm190, %v1948, 0
    %1955 = vmatprep.subr.bf16.mxu0 0
    %1956 = vmatpush1.bf16.xpose.msra.mxu0 %v1953
    %1957 = vmatprep.subr.bf16.mxu0 0
    %1958 = vmatpush1.bf16.xpose.msra.mxu0 0
    %1959 = vmatprep.subr.bf16.mxu0 0
    %1960 = vmatpush1.bf16.xpose.msra.mxu0 0
    %1961 = vmatprep.subr.bf16.mxu0 0
    %1962 = vmatpush1.bf16.xpose.msra.mxu0 0
    %1963 = vmatprep.subr.bf16.mxu0 0
    %1964 = vmatpush1.bf16.xpose.msra.mxu0 0
    %1965 = vmatprep.subr.bf16.mxu0 0
    %1966 = vmatpush1.bf16.xpose.msra.mxu0 0
    %1967 = vmatprep.subr.bf16.mxu0 0
    %1968 = vmatpush1.bf16.xpose.msra.mxu0 0
    %1969 = vmatprep.subr.bf16.mxu0 0
    %1970 = vmatpush1.bf16.xpose.msra.mxu0 0
    %1971 = vmatprep.subr.bf16.mxu0 0
    %1972 = vmatpush1.bf16.xpose.msra.mxu0 0
    %1973 = vmatprep.subr.bf16.mxu0 0
    %1974 = vmatpush1.bf16.xpose.msra.mxu0 0
    %1975 = vmatprep.subr.bf16.mxu0 0
    %1976 = vmatpush1.bf16.xpose.msra.mxu0 0
    %1977 = vmatprep.subr.bf16.mxu0 0
    %1978 = vmatpush1.bf16.xpose.msra.mxu0 0
    %1979 = vmatprep.subr.bf16.mxu0 0
    %1980 = vmatpush1.bf16.xpose.msra.mxu0 0
    %1981 = vmatprep.subr.bf16.mxu0 0
    %1982 = vmatpush1.bf16.xpose.msra.mxu0 0
    %1983 = vmatprep.subr.bf16.mxu0 0
    %1984 = vmatpush1.bf16.xpose.msra.mxu0 0
    %1985 = vmatprep.subr.bf16.mxu0 0
    %1986 = vmatpush1.bf16.xpose.msra.mxu0 0
    %1987 = vmatprep.mubr.bf16.mxu0 0
    %1988 = vmatmul.mubr.bf16.gmra.mrb[0].mxu0 %v1950
    %v1989 = vpop.f32.mrb[0].mxu0
    %v1990 = vadd.f32 0.0, %v1989
    %v1991 = vpop.f32.mrb[0].mxu0
    %v1992 = vpop.f32.mrb[0].mxu0
    %v1993 = vpop.f32.mrb[0].mxu0
    %1994 = vdwg.mxu0
    %v1995 = vmul.f32 %v1940, 0.35355338
    %v1996 = vmul.f32 %v1990, 0.35355338
    %v1997 = vadd.f32 %v1995, %v293
    %v1998 = vadd.f32 %v1996, %v297
    %v1999 = vsel %vm190, %v1997, -inf
    %2000 = vmax.xlane.f32.xlu0 %v1999
    %v2001 = vpop.xlane.xlu0 %2000
    %v2002 = vsel %vm190, %v1998, -inf
    %2003 = vmax.xlane.f32.xlu0 %v2002
    %v2004 = vpop.xlane.xlu0 %2003
    %v2005 = vsub.f32 %v1997, %v2001
    %v2006 = vsub.f32 %v1998, %v2004
    %v2007 = vmul.f32 %v2005, 1.442695
    %v2008 = vpow.pop %v2007
    %v2009 = vmul.f32 %v2006, 1.442695
    %v2010 = vpow.pop %v2009
    %v2011 = vsel %vm190, %v2008, 0.0
    %2012 = vadd.xlane.f32.xlu0 %v2011
    %v2013 = vpop.xlane.xlu0 %2012
    %v2014 = vsel %vm190, %v2010, 0.0
    %2015 = vadd.xlane.f32.xlu0 %v2014
    %v2016 = vpop.xlane.xlu0 %2015
    %v2017 = vrcp.pop %v2013
    %v2018 = vrcp.pop %v2016
    %v2019 = vmul.f32 %v2008, %v2017
    %v2020 = vmul.f32 %v2010, %v2018
    %v2021 = vpack.c.bf16 %v2019, %v2019
    %v2022 = vpack.c.bf16 %v2020, %v2020
    %2023 = vrot.lane.b32.xlu0 %v1668, 56
    %v2024 = vpop.permute.xlu0 %2023
    %v2026 = vsel %vm190, %v2021, 0
    %v2029 = vsel %vm331, %v2024, 0
    %2031 = vmatprep.subr.bf16.mxu0 0
    %2032 = vmatpush1.bf16.msra.mxu0 %v2029
    %2033 = vmatprep.subr.bf16.mxu0 0
    %2034 = vmatpush1.bf16.msra.mxu0 0
    %2035 = vmatprep.subr.bf16.mxu0 0
    %2036 = vmatpush1.bf16.msra.mxu0 0
    %2037 = vmatprep.subr.bf16.mxu0 0
    %2038 = vmatpush1.bf16.msra.mxu0 0
    %2039 = vmatprep.subr.bf16.mxu0 0
    %2040 = vmatpush1.bf16.msra.mxu0 0
    %2041 = vmatprep.subr.bf16.mxu0 0
    %2042 = vmatpush1.bf16.msra.mxu0 0
    %2043 = vmatprep.subr.bf16.mxu0 0
    %2044 = vmatpush1.bf16.msra.mxu0 0
    %2045 = vmatprep.subr.bf16.mxu0 0
    %2046 = vmatpush1.bf16.msra.mxu0 0
    %2047 = vmatprep.subr.bf16.mxu0 0
    %2048 = vmatpush1.bf16.msra.mxu0 0
    %2049 = vmatprep.subr.bf16.mxu0 0
    %2050 = vmatpush1.bf16.msra.mxu0 0
    %2051 = vmatprep.subr.bf16.mxu0 0
    %2052 = vmatpush1.bf16.msra.mxu0 0
    %2053 = vmatprep.subr.bf16.mxu0 0
    %2054 = vmatpush1.bf16.msra.mxu0 0
    %2055 = vmatprep.subr.bf16.mxu0 0
    %2056 = vmatpush1.bf16.msra.mxu0 0
    %2057 = vmatprep.subr.bf16.mxu0 0
    %2058 = vmatpush1.bf16.msra.mxu0 0
    %2059 = vmatprep.subr.bf16.mxu0 0
    %2060 = vmatpush1.bf16.msra.mxu0 0
    %2061 = vmatprep.subr.bf16.mxu0 0
    %2062 = vmatpush1.bf16.msra.mxu0 0
    %2063 = vmatprep.mubr.bf16.mxu0 0
    %2064 = vmatmul.mubr.bf16.gmra.mrb[0].mxu0 %v2026
    %v2065 = vpop.f32.mrb[0].mxu0
    %v2066 = vadd.f32 0.0, %v2065
    %v2067 = vpop.f32.mrb[0].mxu0
    %v2068 = vpop.f32.mrb[0].mxu0
    %v2069 = vpop.f32.mrb[0].mxu0
    %2070 = vdwg.mxu0
    %2071 = vrot.lane.b32.xlu0 %v1669, 56
    %v2072 = vpop.permute.xlu0 %2071
    %v2074 = vsel %vm190, %v2022, 0
    %v2077 = vsel %vm331, %v2072, 0
    %2079 = vmatprep.subr.bf16.mxu0 0
    %2080 = vmatpush1.bf16.msra.mxu0 %v2077
    %2081 = vmatprep.subr.bf16.mxu0 0
    %2082 = vmatpush1.bf16.msra.mxu0 0
    %2083 = vmatprep.subr.bf16.mxu0 0
    %2084 = vmatpush1.bf16.msra.mxu0 0
    %2085 = vmatprep.subr.bf16.mxu0 0
    %2086 = vmatpush1.bf16.msra.mxu0 0
    %2087 = vmatprep.subr.bf16.mxu0 0
    %2088 = vmatpush1.bf16.msra.mxu0 0
    %2089 = vmatprep.subr.bf16.mxu0 0
    %2090 = vmatpush1.bf16.msra.mxu0 0
    %2091 = vmatprep.subr.bf16.mxu0 0
    %2092 = vmatpush1.bf16.msra.mxu0 0
    %2093 = vmatprep.subr.bf16.mxu0 0
    %2094 = vmatpush1.bf16.msra.mxu0 0
    %2095 = vmatprep.subr.bf16.mxu0 0
    %2096 = vmatpush1.bf16.msra.mxu0 0
    %2097 = vmatprep.subr.bf16.mxu0 0
    %2098 = vmatpush1.bf16.msra.mxu0 0
    %2099 = vmatprep.subr.bf16.mxu0 0
    %2100 = vmatpush1.bf16.msra.mxu0 0
    %2101 = vmatprep.subr.bf16.mxu0 0
    %2102 = vmatpush1.bf16.msra.mxu0 0
    %2103 = vmatprep.subr.bf16.mxu0 0
    %2104 = vmatpush1.bf16.msra.mxu0 0
    %2105 = vmatprep.subr.bf16.mxu0 0
    %2106 = vmatpush1.bf16.msra.mxu0 0
    %2107 = vmatprep.subr.bf16.mxu0 0
    %2108 = vmatpush1.bf16.msra.mxu0 0
    %2109 = vmatprep.subr.bf16.mxu0 0
    %2110 = vmatpush1.bf16.msra.mxu0 0
    %2111 = vmatprep.mubr.bf16.mxu0 0
    %2112 = vmatmul.mubr.bf16.gmra.mrb[0].mxu0 %v2074
    %v2113 = vpop.f32.mrb[0].mxu0
    %v2114 = vadd.f32 0.0, %v2113
    %v2115 = vpop.f32.mrb[0].mxu0
    %v2116 = vpop.f32.mrb[0].mxu0
    %v2117 = vpop.f32.mrb[0].mxu0
    %2118 = vdwg.mxu0
    %v2119 = vpack.c.bf16 %v2114, %v2066
    %s2120 = scalar_lea.vmem %s6, 20
    %v2121 = vld [vmem:[%s2120] sm:$0xf]
    %v2123 = vsel %vm190, %v2119, 0
    %v2126 = vsel %vm331, %v2121, 0
    %2128 = vmatprep.subr.bf16.mxu0 0
    %2129 = vmatpush1.bf16.msra.mxu0 %v2126
    %2130 = vmatprep.subr.bf16.mxu0 0
    %2131 = vmatpush1.bf16.msra.mxu0 0
    %2132 = vmatprep.subr.bf16.mxu0 0
    %2133 = vmatpush1.bf16.msra.mxu0 0
    %2134 = vmatprep.subr.bf16.mxu0 0
    %2135 = vmatpush1.bf16.msra.mxu0 0
    %2136 = vmatprep.subr.bf16.mxu0 0
    %2137 = vmatpush1.bf16.msra.mxu0 0
    %2138 = vmatprep.subr.bf16.mxu0 0
    %2139 = vmatpush1.bf16.msra.mxu0 0
    %2140 = vmatprep.subr.bf16.mxu0 0
    %2141 = vmatpush1.bf16.msra.mxu0 0
    %2142 = vmatprep.subr.bf16.mxu0 0
    %2143 = vmatpush1.bf16.msra.mxu0 0
    %2144 = vmatprep.subr.bf16.mxu0 0
    %2145 = vmatpush1.bf16.msra.mxu0 0
    %2146 = vmatprep.subr.bf16.mxu0 0
    %2147 = vmatpush1.bf16.msra.mxu0 0
    %2148 = vmatprep.subr.bf16.mxu0 0
    %2149 = vmatpush1.bf16.msra.mxu0 0
    %2150 = vmatprep.subr.bf16.mxu0 0
    %2151 = vmatpush1.bf16.msra.mxu0 0
    %2152 = vmatprep.subr.bf16.mxu0 0
    %2153 = vmatpush1.bf16.msra.mxu0 0
    %2154 = vmatprep.subr.bf16.mxu0 0
    %2155 = vmatpush1.bf16.msra.mxu0 0
    %2156 = vmatprep.subr.bf16.mxu0 0
    %2157 = vmatpush1.bf16.msra.mxu0 0
    %2158 = vmatprep.subr.bf16.mxu0 0
    %2159 = vmatpush1.bf16.msra.mxu0 0
    %2160 = vmatprep.mubr.bf16.mxu0 0
    %2161 = vmatmul.mubr.bf16.gmra.mrb[0].mxu0 %v2123
    %v2162 = vpop.f32.mrb[0].mxu0
    %v2163 = vadd.f32 0.0, %v2162
    %v2164 = vpop.f32.mrb[0].mxu0
    %v2165 = vpop.f32.mrb[0].mxu0
    %v2166 = vadd.f32 0.0, %v2165
    %v2167 = vpop.f32.mrb[0].mxu0
    %2168 = vdwg.mxu0
    %v2170 = vsel %vm190, %v1892, 0
    %v2173 = vsel %vm331, %v1894, 0
    %2175 = vmatprep.subr.bf16.mxu0 0
    %2176 = vmatpush1.bf16.msra.mxu0 %v2173
    %2177 = vmatprep.subr.bf16.mxu0 0
    %2178 = vmatpush1.bf16.msra.mxu0 0
    %2179 = vmatprep.subr.bf16.mxu0 0
    %2180 = vmatpush1.bf16.msra.mxu0 0
    %2181 = vmatprep.subr.bf16.mxu0 0
    %2182 = vmatpush1.bf16.msra.mxu0 0
    %2183 = vmatprep.subr.bf16.mxu0 0
    %2184 = vmatpush1.bf16.msra.mxu0 0
    %2185 = vmatprep.subr.bf16.mxu0 0
    %2186 = vmatpush1.bf16.msra.mxu0 0
    %2187 = vmatprep.subr.bf16.mxu0 0
    %2188 = vmatpush1.bf16.msra.mxu0 0
    %2189 = vmatprep.subr.bf16.mxu0 0
    %2190 = vmatpush1.bf16.msra.mxu0 0
    %2191 = vmatprep.subr.bf16.mxu0 0
    %2192 = vmatpush1.bf16.msra.mxu0 0
    %2193 = vmatprep.subr.bf16.mxu0 0
    %2194 = vmatpush1.bf16.msra.mxu0 0
    %2195 = vmatprep.subr.bf16.mxu0 0
    %2196 = vmatpush1.bf16.msra.mxu0 0
    %2197 = vmatprep.subr.bf16.mxu0 0
    %2198 = vmatpush1.bf16.msra.mxu0 0
    %2199 = vmatprep.subr.bf16.mxu0 0
    %2200 = vmatpush1.bf16.msra.mxu0 0
    %2201 = vmatprep.subr.bf16.mxu0 0
    %2202 = vmatpush1.bf16.msra.mxu0 0
    %2203 = vmatprep.subr.bf16.mxu0 0
    %2204 = vmatpush1.bf16.msra.mxu0 0
    %2205 = vmatprep.subr.bf16.mxu0 0
    %2206 = vmatpush1.bf16.msra.mxu0 0
    %2207 = vmatprep.mubr.bf16.mxu0 0
    %2208 = vmatmul.mubr.bf16.gmra.mrb[0].mxu0 %v2170
    %v2209 = vpop.f32.mrb[0].mxu0
    %v2210 = vadd.f32 %v2163, %v2209
    %v2211 = vpop.f32.mrb[0].mxu0
    %v2212 = vpop.f32.mrb[0].mxu0
    %v2213 = vadd.f32 %v2166, %v2212
    %v2214 = vpop.f32.mrb[0].mxu0
    %2215 = vdwg.mxu0
    %2216 = vrot.lane.b32.xlu0 %v1668, 112
    %v2217 = vpop.permute.xlu0 %2216
    %2218 = vrot.lane.b32.xlu0 %v1668, 80
    %v2219 = vpop.permute.xlu0 %2218
    %v2221 = vsel %vm190, %v2217, 0
    %v2224 = vsel %vm190, %v2219, 0
    %2226 = vmatprep.subr.bf16.mxu0 0
    %2227 = vmatpush1.bf16.xpose.msra.mxu0 %v2224
    %2228 = vmatprep.subr.bf16.mxu0 0
    %2229 = vmatpush1.bf16.xpose.msra.mxu0 0
    %2230 = vmatprep.subr.bf16.mxu0 0
    %2231 = vmatpush1.bf16.xpose.msra.mxu0 0
    %2232 = vmatprep.subr.bf16.mxu0 0
    %2233 = vmatpush1.bf16.xpose.msra.mxu0 0
    %2234 = vmatprep.subr.bf16.mxu0 0
    %2235 = vmatpush1.bf16.xpose.msra.mxu0 0
    %2236 = vmatprep.subr.bf16.mxu0 0
    %2237 = vmatpush1.bf16.xpose.msra.mxu0 0
    %2238 = vmatprep.subr.bf16.mxu0 0
    %2239 = vmatpush1.bf16.xpose.msra.mxu0 0
    %2240 = vmatprep.subr.bf16.mxu0 0
    %2241 = vmatpush1.bf16.xpose.msra.mxu0 0
    %2242 = vmatprep.subr.bf16.mxu0 0
    %2243 = vmatpush1.bf16.xpose.msra.mxu0 0
    %2244 = vmatprep.subr.bf16.mxu0 0
    %2245 = vmatpush1.bf16.xpose.msra.mxu0 0
    %2246 = vmatprep.subr.bf16.mxu0 0
    %2247 = vmatpush1.bf16.xpose.msra.mxu0 0
    %2248 = vmatprep.subr.bf16.mxu0 0
    %2249 = vmatpush1.bf16.xpose.msra.mxu0 0
    %2250 = vmatprep.subr.bf16.mxu0 0
    %2251 = vmatpush1.bf16.xpose.msra.mxu0 0
    %2252 = vmatprep.subr.bf16.mxu0 0
    %2253 = vmatpush1.bf16.xpose.msra.mxu0 0
    %2254 = vmatprep.subr.bf16.mxu0 0
    %2255 = vmatpush1.bf16.xpose.msra.mxu0 0
    %2256 = vmatprep.subr.bf16.mxu0 0
    %2257 = vmatpush1.bf16.xpose.msra.mxu0 0
    %2258 = vmatprep.mubr.bf16.mxu0 0
    %2259 = vmatmul.mubr.bf16.gmra.mrb[0].mxu0 %v2221
    %v2260 = vpop.f32.mrb[0].mxu0
    %v2261 = vadd.f32 0.0, %v2260
    %v2262 = vpop.f32.mrb[0].mxu0
    %v2263 = vpop.f32.mrb[0].mxu0
    %v2264 = vpop.f32.mrb[0].mxu0
    %2265 = vdwg.mxu0
    %2266 = vrot.lane.b32.xlu0 %v1669, 112
    %v2267 = vpop.permute.xlu0 %2266
    %2268 = vrot.lane.b32.xlu0 %v1669, 80
    %v2269 = vpop.permute.xlu0 %2268
    %v2271 = vsel %vm190, %v2267, 0
    %v2274 = vsel %vm190, %v2269, 0
    %2276 = vmatprep.subr.bf16.mxu0 0
    %2277 = vmatpush1.bf16.xpose.msra.mxu0 %v2274
    %2278 = vmatprep.subr.bf16.mxu0 0
    %2279 = vmatpush1.bf16.xpose.msra.mxu0 0
    %2280 = vmatprep.subr.bf16.mxu0 0
    %2281 = vmatpush1.bf16.xpose.msra.mxu0 0
    %2282 = vmatprep.subr.bf16.mxu0 0
    %2283 = vmatpush1.bf16.xpose.msra.mxu0 0
    %2284 = vmatprep.subr.bf16.mxu0 0
    %2285 = vmatpush1.bf16.xpose.msra.mxu0 0
    %2286 = vmatprep.subr.bf16.mxu0 0
    %2287 = vmatpush1.bf16.xpose.msra.mxu0 0
    %2288 = vmatprep.subr.bf16.mxu0 0
    %2289 = vmatpush1.bf16.xpose.msra.mxu0 0
    %2290 = vmatprep.subr.bf16.mxu0 0
    %2291 = vmatpush1.bf16.xpose.msra.mxu0 0
    %2292 = vmatprep.subr.bf16.mxu0 0
    %2293 = vmatpush1.bf16.xpose.msra.mxu0 0
    %2294 = vmatprep.subr.bf16.mxu0 0
    %2295 = vmatpush1.bf16.xpose.msra.mxu0 0
    %2296 = vmatprep.subr.bf16.mxu0 0
    %2297 = vmatpush1.bf16.xpose.msra.mxu0 0
    %2298 = vmatprep.subr.bf16.mxu0 0
    %2299 = vmatpush1.bf16.xpose.msra.mxu0 0
    %2300 = vmatprep.subr.bf16.mxu0 0
    %2301 = vmatpush1.bf16.xpose.msra.mxu0 0
    %2302 = vmatprep.subr.bf16.mxu0 0
    %2303 = vmatpush1.bf16.xpose.msra.mxu0 0
    %2304 = vmatprep.subr.bf16.mxu0 0
    %2305 = vmatpush1.bf16.xpose.msra.mxu0 0
    %2306 = vmatprep.subr.bf16.mxu0 0
    %2307 = vmatpush1.bf16.xpose.msra.mxu0 0
    %2308 = vmatprep.mubr.bf16.mxu0 0
    %2309 = vmatmul.mubr.bf16.gmra.mrb[0].mxu0 %v2271
    %v2310 = vpop.f32.mrb[0].mxu0
    %v2311 = vadd.f32 0.0, %v2310
    %v2312 = vpop.f32.mrb[0].mxu0
    %v2313 = vpop.f32.mrb[0].mxu0
    %v2314 = vpop.f32.mrb[0].mxu0
    %2315 = vdwg.mxu0
    %v2316 = vmul.f32 %v2261, 0.35355338
    %v2317 = vmul.f32 %v2311, 0.35355338
    %v2318 = vadd.f32 %v2316, %v293
    %v2319 = vadd.f32 %v2317, %v297
    %v2320 = vsel %vm190, %v2318, -inf
    %2321 = vmax.xlane.f32.xlu0 %v2320
    %v2322 = vpop.xlane.xlu0 %2321
    %v2323 = vsel %vm190, %v2319, -inf
    %2324 = vmax.xlane.f32.xlu0 %v2323
    %v2325 = vpop.xlane.xlu0 %2324
    %v2326 = vsub.f32 %v2318, %v2322
    %v2327 = vsub.f32 %v2319, %v2325
    %v2328 = vmul.f32 %v2326, 1.442695
    %v2329 = vpow.pop %v2328
    %v2330 = vmul.f32 %v2327, 1.442695
    %v2331 = vpow.pop %v2330
    %v2332 = vsel %vm190, %v2329, 0.0
    %2333 = vadd.xlane.f32.xlu0 %v2332
    %v2334 = vpop.xlane.xlu0 %2333
    %v2335 = vsel %vm190, %v2331, 0.0
    %2336 = vadd.xlane.f32.xlu0 %v2335
    %v2337 = vpop.xlane.xlu0 %2336
    %v2338 = vrcp.pop %v2334
    %v2339 = vrcp.pop %v2337
    %v2340 = vmul.f32 %v2329, %v2338
    %v2341 = vmul.f32 %v2331, %v2339
    %v2342 = vpack.c.bf16 %v2340, %v2340
    %v2343 = vpack.c.bf16 %v2341, %v2341
    %2344 = vrot.lane.b32.xlu0 %v1668, 48
    %v2345 = vpop.permute.xlu0 %2344
    %v2347 = vsel %vm190, %v2342, 0
    %v2350 = vsel %vm331, %v2345, 0
    %2352 = vmatprep.subr.bf16.mxu0 0
    %2353 = vmatpush1.bf16.msra.mxu0 %v2350
    %2354 = vmatprep.subr.bf16.mxu0 0
    %2355 = vmatpush1.bf16.msra.mxu0 0
    %2356 = vmatprep.subr.bf16.mxu0 0
    %2357 = vmatpush1.bf16.msra.mxu0 0
    %2358 = vmatprep.subr.bf16.mxu0 0
    %2359 = vmatpush1.bf16.msra.mxu0 0
    %2360 = vmatprep.subr.bf16.mxu0 0
    %2361 = vmatpush1.bf16.msra.mxu0 0
    %2362 = vmatprep.subr.bf16.mxu0 0
    %2363 = vmatpush1.bf16.msra.mxu0 0
    %2364 = vmatprep.subr.bf16.mxu0 0
    %2365 = vmatpush1.bf16.msra.mxu0 0
    %2366 = vmatprep.subr.bf16.mxu0 0
    %2367 = vmatpush1.bf16.msra.mxu0 0
    %2368 = vmatprep.subr.bf16.mxu0 0
    %2369 = vmatpush1.bf16.msra.mxu0 0
    %2370 = vmatprep.subr.bf16.mxu0 0
    %2371 = vmatpush1.bf16.msra.mxu0 0
    %2372 = vmatprep.subr.bf16.mxu0 0
    %2373 = vmatpush1.bf16.msra.mxu0 0
    %2374 = vmatprep.subr.bf16.mxu0 0
    %2375 = vmatpush1.bf16.msra.mxu0 0
    %2376 = vmatprep.subr.bf16.mxu0 0
    %2377 = vmatpush1.bf16.msra.mxu0 0
    %2378 = vmatprep.subr.bf16.mxu0 0
    %2379 = vmatpush1.bf16.msra.mxu0 0
    %2380 = vmatprep.subr.bf16.mxu0 0
    %2381 = vmatpush1.bf16.msra.mxu0 0
    %2382 = vmatprep.subr.bf16.mxu0 0
    %2383 = vmatpush1.bf16.msra.mxu0 0
    %2384 = vmatprep.mubr.bf16.mxu0 0
    %2385 = vmatmul.mubr.bf16.gmra.mrb[0].mxu0 %v2347
    %v2386 = vpop.f32.mrb[0].mxu0
    %v2387 = vadd.f32 0.0, %v2386
    %v2388 = vpop.f32.mrb[0].mxu0
    %v2389 = vpop.f32.mrb[0].mxu0
    %v2390 = vpop.f32.mrb[0].mxu0
    %2391 = vdwg.mxu0
    %2392 = vrot.lane.b32.xlu0 %v1669, 48
    %v2393 = vpop.permute.xlu0 %2392
    %v2395 = vsel %vm190, %v2343, 0
    %v2398 = vsel %vm331, %v2393, 0
    %2400 = vmatprep.subr.bf16.mxu0 0
    %2401 = vmatpush1.bf16.msra.mxu0 %v2398
    %2402 = vmatprep.subr.bf16.mxu0 0
    %2403 = vmatpush1.bf16.msra.mxu0 0
    %2404 = vmatprep.subr.bf16.mxu0 0
    %2405 = vmatpush1.bf16.msra.mxu0 0
    %2406 = vmatprep.subr.bf16.mxu0 0
    %2407 = vmatpush1.bf16.msra.mxu0 0
    %2408 = vmatprep.subr.bf16.mxu0 0
    %2409 = vmatpush1.bf16.msra.mxu0 0
    %2410 = vmatprep.subr.bf16.mxu0 0
    %2411 = vmatpush1.bf16.msra.mxu0 0
    %2412 = vmatprep.subr.bf16.mxu0 0
    %2413 = vmatpush1.bf16.msra.mxu0 0
    %2414 = vmatprep.subr.bf16.mxu0 0
    %2415 = vmatpush1.bf16.msra.mxu0 0
    %2416 = vmatprep.subr.bf16.mxu0 0
    %2417 = vmatpush1.bf16.msra.mxu0 0
    %2418 = vmatprep.subr.bf16.mxu0 0
    %2419 = vmatpush1.bf16.msra.mxu0 0
    %2420 = vmatprep.subr.bf16.mxu0 0
    %2421 = vmatpush1.bf16.msra.mxu0 0
    %2422 = vmatprep.subr.bf16.mxu0 0
    %2423 = vmatpush1.bf16.msra.mxu0 0
    %2424 = vmatprep.subr.bf16.mxu0 0
    %2425 = vmatpush1.bf16.msra.mxu0 0
    %2426 = vmatprep.subr.bf16.mxu0 0
    %2427 = vmatpush1.bf16.msra.mxu0 0
    %2428 = vmatprep.subr.bf16.mxu0 0
    %2429 = vmatpush1.bf16.msra.mxu0 0
    %2430 = vmatprep.subr.bf16.mxu0 0
    %2431 = vmatpush1.bf16.msra.mxu0 0
    %2432 = vmatprep.mubr.bf16.mxu0 0
    %2433 = vmatmul.mubr.bf16.gmra.mrb[0].mxu0 %v2395
    %v2434 = vpop.f32.mrb[0].mxu0
    %v2435 = vadd.f32 0.0, %v2434
    %v2436 = vpop.f32.mrb[0].mxu0
    %v2437 = vpop.f32.mrb[0].mxu0
    %v2438 = vpop.f32.mrb[0].mxu0
    %2439 = vdwg.mxu0
    %v2440 = vpack.c.bf16 %v2435, %v2387
    %s2441 = scalar_lea.vmem %s6, 24
    %v2442 = vld [vmem:[%s2441] sm:$0xf]
    %v2444 = vsel %vm190, %v2440, 0
    %v2447 = vsel %vm331, %v2442, 0
    %2449 = vmatprep.subr.bf16.mxu0 0
    %2450 = vmatpush1.bf16.msra.mxu0 %v2447
    %2451 = vmatprep.subr.bf16.mxu0 0
    %2452 = vmatpush1.bf16.msra.mxu0 0
    %2453 = vmatprep.subr.bf16.mxu0 0
    %2454 = vmatpush1.bf16.msra.mxu0 0
    %2455 = vmatprep.subr.bf16.mxu0 0
    %2456 = vmatpush1.bf16.msra.mxu0 0
    %2457 = vmatprep.subr.bf16.mxu0 0
    %2458 = vmatpush1.bf16.msra.mxu0 0
    %2459 = vmatprep.subr.bf16.mxu0 0
    %2460 = vmatpush1.bf16.msra.mxu0 0
    %2461 = vmatprep.subr.bf16.mxu0 0
    %2462 = vmatpush1.bf16.msra.mxu0 0
    %2463 = vmatprep.subr.bf16.mxu0 0
    %2464 = vmatpush1.bf16.msra.mxu0 0
    %2465 = vmatprep.subr.bf16.mxu0 0
    %2466 = vmatpush1.bf16.msra.mxu0 0
    %2467 = vmatprep.subr.bf16.mxu0 0
    %2468 = vmatpush1.bf16.msra.mxu0 0
    %2469 = vmatprep.subr.bf16.mxu0 0
    %2470 = vmatpush1.bf16.msra.mxu0 0
    %2471 = vmatprep.subr.bf16.mxu0 0
    %2472 = vmatpush1.bf16.msra.mxu0 0
    %2473 = vmatprep.subr.bf16.mxu0 0
    %2474 = vmatpush1.bf16.msra.mxu0 0
    %2475 = vmatprep.subr.bf16.mxu0 0
    %2476 = vmatpush1.bf16.msra.mxu0 0
    %2477 = vmatprep.subr.bf16.mxu0 0
    %2478 = vmatpush1.bf16.msra.mxu0 0
    %2479 = vmatprep.subr.bf16.mxu0 0
    %2480 = vmatpush1.bf16.msra.mxu0 0
    %2481 = vmatprep.mubr.bf16.mxu0 0
    %2482 = vmatmul.mubr.bf16.gmra.mrb[0].mxu0 %v2444
    %v2483 = vpop.f32.mrb[0].mxu0
    %v2484 = vadd.f32 0.0, %v2483
    %v2485 = vpop.f32.mrb[0].mxu0
    %v2486 = vpop.f32.mrb[0].mxu0
    %v2487 = vadd.f32 0.0, %v2486
    %v2488 = vpop.f32.mrb[0].mxu0
    %2489 = vdwg.mxu0
    %v2490 = vadd.f32 %v2210, %v2484
    %v2491 = vadd.f32 %v2213, %v2487
    %2492 = vrot.lane.b32.xlu0 %v1668, 104
    %v2493 = vpop.permute.xlu0 %2492
    %2494 = vrot.lane.b32.xlu0 %v1668, 72
    %v2495 = vpop.permute.xlu0 %2494
    %v2497 = vsel %vm190, %v2493, 0
    %v2500 = vsel %vm190, %v2495, 0
    %2502 = vmatprep.subr.bf16.mxu0 0
    %2503 = vmatpush1.bf16.xpose.msra.mxu0 %v2500
    %2504 = vmatprep.subr.bf16.mxu0 0
    %2505 = vmatpush1.bf16.xpose.msra.mxu0 0
    %2506 = vmatprep.subr.bf16.mxu0 0
    %2507 = vmatpush1.bf16.xpose.msra.mxu0 0
    %2508 = vmatprep.subr.bf16.mxu0 0
    %2509 = vmatpush1.bf16.xpose.msra.mxu0 0
    %2510 = vmatprep.subr.bf16.mxu0 0
    %2511 = vmatpush1.bf16.xpose.msra.mxu0 0
    %2512 = vmatprep.subr.bf16.mxu0 0
    %2513 = vmatpush1.bf16.xpose.msra.mxu0 0
    %2514 = vmatprep.subr.bf16.mxu0 0
    %2515 = vmatpush1.bf16.xpose.msra.mxu0 0
    %2516 = vmatprep.subr.bf16.mxu0 0
    %2517 = vmatpush1.bf16.xpose.msra.mxu0 0
    %2518 = vmatprep.subr.bf16.mxu0 0
    %2519 = vmatpush1.bf16.xpose.msra.mxu0 0
    %2520 = vmatprep.subr.bf16.mxu0 0
    %2521 = vmatpush1.bf16.xpose.msra.mxu0 0
    %2522 = vmatprep.subr.bf16.mxu0 0
    %2523 = vmatpush1.bf16.xpose.msra.mxu0 0
    %2524 = vmatprep.subr.bf16.mxu0 0
    %2525 = vmatpush1.bf16.xpose.msra.mxu0 0
    %2526 = vmatprep.subr.bf16.mxu0 0
    %2527 = vmatpush1.bf16.xpose.msra.mxu0 0
    %2528 = vmatprep.subr.bf16.mxu0 0
    %2529 = vmatpush1.bf16.xpose.msra.mxu0 0
    %2530 = vmatprep.subr.bf16.mxu0 0
    %2531 = vmatpush1.bf16.xpose.msra.mxu0 0
    %2532 = vmatprep.subr.bf16.mxu0 0
    %2533 = vmatpush1.bf16.xpose.msra.mxu0 0
    %2534 = vmatprep.mubr.bf16.mxu0 0
    %2535 = vmatmul.mubr.bf16.gmra.mrb[0].mxu0 %v2497
    %v2536 = vpop.f32.mrb[0].mxu0
    %v2537 = vadd.f32 0.0, %v2536
    %v2538 = vpop.f32.mrb[0].mxu0
    %v2539 = vpop.f32.mrb[0].mxu0
    %v2540 = vpop.f32.mrb[0].mxu0
    %2541 = vdwg.mxu0
    %2542 = vrot.lane.b32.xlu0 %v1669, 104
    %v2543 = vpop.permute.xlu0 %2542
    %2544 = vrot.lane.b32.xlu0 %v1669, 72
    %v2545 = vpop.permute.xlu0 %2544
    %v2547 = vsel %vm190, %v2543, 0
    %v2550 = vsel %vm190, %v2545, 0
    %2552 = vmatprep.subr.bf16.mxu0 0
    %2553 = vmatpush1.bf16.xpose.msra.mxu0 %v2550
    %2554 = vmatprep.subr.bf16.mxu0 0
    %2555 = vmatpush1.bf16.xpose.msra.mxu0 0
    %2556 = vmatprep.subr.bf16.mxu0 0
    %2557 = vmatpush1.bf16.xpose.msra.mxu0 0
    %2558 = vmatprep.subr.bf16.mxu0 0
    %2559 = vmatpush1.bf16.xpose.msra.mxu0 0
    %2560 = vmatprep.subr.bf16.mxu0 0
    %2561 = vmatpush1.bf16.xpose.msra.mxu0 0
    %2562 = vmatprep.subr.bf16.mxu0 0
    %2563 = vmatpush1.bf16.xpose.msra.mxu0 0
    %2564 = vmatprep.subr.bf16.mxu0 0
    %2565 = vmatpush1.bf16.xpose.msra.mxu0 0
    %2566 = vmatprep.subr.bf16.mxu0 0
    %2567 = vmatpush1.bf16.xpose.msra.mxu0 0
    %2568 = vmatprep.subr.bf16.mxu0 0
    %2569 = vmatpush1.bf16.xpose.msra.mxu0 0
    %2570 = vmatprep.subr.bf16.mxu0 0
    %2571 = vmatpush1.bf16.xpose.msra.mxu0 0
    %2572 = vmatprep.subr.bf16.mxu0 0
    %2573 = vmatpush1.bf16.xpose.msra.mxu0 0
    %2574 = vmatprep.subr.bf16.mxu0 0
    %2575 = vmatpush1.bf16.xpose.msra.mxu0 0
    %2576 = vmatprep.subr.bf16.mxu0 0
    %2577 = vmatpush1.bf16.xpose.msra.mxu0 0
    %2578 = vmatprep.subr.bf16.mxu0 0
    %2579 = vmatpush1.bf16.xpose.msra.mxu0 0
    %2580 = vmatprep.subr.bf16.mxu0 0
    %2581 = vmatpush1.bf16.xpose.msra.mxu0 0
    %2582 = vmatprep.subr.bf16.mxu0 0
    %2583 = vmatpush1.bf16.xpose.msra.mxu0 0
    %2584 = vmatprep.mubr.bf16.mxu0 0
    %2585 = vmatmul.mubr.bf16.gmra.mrb[0].mxu0 %v2547
    %v2586 = vpop.f32.mrb[0].mxu0
    %v2587 = vadd.f32 0.0, %v2586
    %v2588 = vpop.f32.mrb[0].mxu0
    %v2589 = vpop.f32.mrb[0].mxu0
    %v2590 = vpop.f32.mrb[0].mxu0
    %2591 = vdwg.mxu0
    %v2592 = vmul.f32 %v2537, 0.35355338
    %v2593 = vmul.f32 %v2587, 0.35355338
    %v2594 = vadd.f32 %v2592, %v293
    %v2595 = vadd.f32 %v2593, %v297
    %v2596 = vsel %vm190, %v2594, -inf
    %2597 = vmax.xlane.f32.xlu0 %v2596
    %v2598 = vpop.xlane.xlu0 %2597
    %v2599 = vsel %vm190, %v2595, -inf
    %2600 = vmax.xlane.f32.xlu0 %v2599
    %v2601 = vpop.xlane.xlu0 %2600
    %v2602 = vsub.f32 %v2594, %v2598
    %v2603 = vsub.f32 %v2595, %v2601
    %v2604 = vmul.f32 %v2602, 1.442695
    %v2605 = vpow.pop %v2604
    %v2606 = vmul.f32 %v2603, 1.442695
    %v2607 = vpow.pop %v2606
    %v2608 = vsel %vm190, %v2605, 0.0
    %2609 = vadd.xlane.f32.xlu0 %v2608
    %v2610 = vpop.xlane.xlu0 %2609
    %v2611 = vsel %vm190, %v2607, 0.0
    %2612 = vadd.xlane.f32.xlu0 %v2611
    %v2613 = vpop.xlane.xlu0 %2612
    %v2614 = vrcp.pop %v2610
    %v2615 = vrcp.pop %v2613
    %v2616 = vmul.f32 %v2605, %v2614
    %v2617 = vmul.f32 %v2607, %v2615
    %v2618 = vpack.c.bf16 %v2616, %v2616
    %v2619 = vpack.c.bf16 %v2617, %v2617
    %2620 = vrot.lane.b32.xlu0 %v1668, 40
    %v2621 = vpop.permute.xlu0 %2620
    %v2623 = vsel %vm190, %v2618, 0
    %v2626 = vsel %vm331, %v2621, 0
    %2628 = vmatprep.subr.bf16.mxu0 0
    %2629 = vmatpush1.bf16.msra.mxu0 %v2626
    %2630 = vmatprep.subr.bf16.mxu0 0
    %2631 = vmatpush1.bf16.msra.mxu0 0
    %2632 = vmatprep.subr.bf16.mxu0 0
    %2633 = vmatpush1.bf16.msra.mxu0 0
    %2634 = vmatprep.subr.bf16.mxu0 0
    %2635 = vmatpush1.bf16.msra.mxu0 0
    %2636 = vmatprep.subr.bf16.mxu0 0
    %2637 = vmatpush1.bf16.msra.mxu0 0
    %2638 = vmatprep.subr.bf16.mxu0 0
    %2639 = vmatpush1.bf16.msra.mxu0 0
    %2640 = vmatprep.subr.bf16.mxu0 0
    %2641 = vmatpush1.bf16.msra.mxu0 0
    %2642 = vmatprep.subr.bf16.mxu0 0
    %2643 = vmatpush1.bf16.msra.mxu0 0
    %2644 = vmatprep.subr.bf16.mxu0 0
    %2645 = vmatpush1.bf16.msra.mxu0 0
    %2646 = vmatprep.subr.bf16.mxu0 0
    %2647 = vmatpush1.bf16.msra.mxu0 0
    %2648 = vmatprep.subr.bf16.mxu0 0
    %2649 = vmatpush1.bf16.msra.mxu0 0
    %2650 = vmatprep.subr.bf16.mxu0 0
    %2651 = vmatpush1.bf16.msra.mxu0 0
    %2652 = vmatprep.subr.bf16.mxu0 0
    %2653 = vmatpush1.bf16.msra.mxu0 0
    %2654 = vmatprep.subr.bf16.mxu0 0
    %2655 = vmatpush1.bf16.msra.mxu0 0
    %2656 = vmatprep.subr.bf16.mxu0 0
    %2657 = vmatpush1.bf16.msra.mxu0 0
    %2658 = vmatprep.subr.bf16.mxu0 0
    %2659 = vmatpush1.bf16.msra.mxu0 0
    %2660 = vmatprep.mubr.bf16.mxu0 0
    %2661 = vmatmul.mubr.bf16.gmra.mrb[0].mxu0 %v2623
    %v2662 = vpop.f32.mrb[0].mxu0
    %v2663 = vadd.f32 0.0, %v2662
    %v2664 = vpop.f32.mrb[0].mxu0
    %v2665 = vpop.f32.mrb[0].mxu0
    %v2666 = vpop.f32.mrb[0].mxu0
    %2667 = vdwg.mxu0
    %2668 = vrot.lane.b32.xlu0 %v1669, 40
    %v2669 = vpop.permute.xlu0 %2668
    %v2671 = vsel %vm190, %v2619, 0
    %v2674 = vsel %vm331, %v2669, 0
    %2676 = vmatprep.subr.bf16.mxu0 0
    %2677 = vmatpush1.bf16.msra.mxu0 %v2674
    %2678 = vmatprep.subr.bf16.mxu0 0
    %2679 = vmatpush1.bf16.msra.mxu0 0
    %2680 = vmatprep.subr.bf16.mxu0 0
    %2681 = vmatpush1.bf16.msra.mxu0 0
    %2682 = vmatprep.subr.bf16.mxu0 0
    %2683 = vmatpush1.bf16.msra.mxu0 0
    %2684 = vmatprep.subr.bf16.mxu0 0
    %2685 = vmatpush1.bf16.msra.mxu0 0
    %2686 = vmatprep.subr.bf16.mxu0 0
    %2687 = vmatpush1.bf16.msra.mxu0 0
    %2688 = vmatprep.subr.bf16.mxu0 0
    %2689 = vmatpush1.bf16.msra.mxu0 0
    %2690 = vmatprep.subr.bf16.mxu0 0
    %2691 = vmatpush1.bf16.msra.mxu0 0
    %2692 = vmatprep.subr.bf16.mxu0 0
    %2693 = vmatpush1.bf16.msra.mxu0 0
    %2694 = vmatprep.subr.bf16.mxu0 0
    %2695 = vmatpush1.bf16.msra.mxu0 0
    %2696 = vmatprep.subr.bf16.mxu0 0
    %2697 = vmatpush1.bf16.msra.mxu0 0
    %2698 = vmatprep.subr.bf16.mxu0 0
    %2699 = vmatpush1.bf16.msra.mxu0 0
    %2700 = vmatprep.subr.bf16.mxu0 0
    %2701 = vmatpush1.bf16.msra.mxu0 0
    %2702 = vmatprep.subr.bf16.mxu0 0
    %2703 = vmatpush1.bf16.msra.mxu0 0
    %2704 = vmatprep.subr.bf16.mxu0 0
    %2705 = vmatpush1.bf16.msra.mxu0 0
    %2706 = vmatprep.subr.bf16.mxu0 0
    %2707 = vmatpush1.bf16.msra.mxu0 0
    %2708 = vmatprep.mubr.bf16.mxu0 0
    %2709 = vmatmul.mubr.bf16.gmra.mrb[0].mxu0 %v2671
    %v2710 = vpop.f32.mrb[0].mxu0
    %v2711 = vadd.f32 0.0, %v2710
    %v2712 = vpop.f32.mrb[0].mxu0
    %v2713 = vpop.f32.mrb[0].mxu0
    %v2714 = vpop.f32.mrb[0].mxu0
    %2715 = vdwg.mxu0
    %v2716 = vpack.c.bf16 %v2711, %v2663
    %s2717 = scalar_lea.vmem %s6, 28
    %v2718 = vld [vmem:[%s2717] sm:$0xf]
    %v2720 = vsel %vm190, %v2716, 0
    %v2723 = vsel %vm331, %v2718, 0
    %2725 = vmatprep.subr.bf16.mxu0 0
    %2726 = vmatpush1.bf16.msra.mxu0 %v2723
    %2727 = vmatprep.subr.bf16.mxu0 0
    %2728 = vmatpush1.bf16.msra.mxu0 0
    %2729 = vmatprep.subr.bf16.mxu0 0
    %2730 = vmatpush1.bf16.msra.mxu0 0
    %2731 = vmatprep.subr.bf16.mxu0 0
    %2732 = vmatpush1.bf16.msra.mxu0 0
    %2733 = vmatprep.subr.bf16.mxu0 0
    %2734 = vmatpush1.bf16.msra.mxu0 0
    %2735 = vmatprep.subr.bf16.mxu0 0
    %2736 = vmatpush1.bf16.msra.mxu0 0
    %2737 = vmatprep.subr.bf16.mxu0 0
    %2738 = vmatpush1.bf16.msra.mxu0 0
    %2739 = vmatprep.subr.bf16.mxu0 0
    %2740 = vmatpush1.bf16.msra.mxu0 0
    %2741 = vmatprep.subr.bf16.mxu0 0
    %2742 = vmatpush1.bf16.msra.mxu0 0
    %2743 = vmatprep.subr.bf16.mxu0 0
    %2744 = vmatpush1.bf16.msra.mxu0 0
    %2745 = vmatprep.subr.bf16.mxu0 0
    %2746 = vmatpush1.bf16.msra.mxu0 0
    %2747 = vmatprep.subr.bf16.mxu0 0
    %2748 = vmatpush1.bf16.msra.mxu0 0
    %2749 = vmatprep.subr.bf16.mxu0 0
    %2750 = vmatpush1.bf16.msra.mxu0 0
    %2751 = vmatprep.subr.bf16.mxu0 0
    %2752 = vmatpush1.bf16.msra.mxu0 0
    %2753 = vmatprep.subr.bf16.mxu0 0
    %2754 = vmatpush1.bf16.msra.mxu0 0
    %2755 = vmatprep.subr.bf16.mxu0 0
    %2756 = vmatpush1.bf16.msra.mxu0 0
    %2757 = vmatprep.mubr.bf16.mxu0 0
    %2758 = vmatmul.mubr.bf16.gmra.mrb[0].mxu0 %v2720
    %v2759 = vpop.f32.mrb[0].mxu0
    %v2760 = vadd.f32 0.0, %v2759
    %v2761 = vpop.f32.mrb[0].mxu0
    %v2762 = vpop.f32.mrb[0].mxu0
    %v2763 = vadd.f32 0.0, %v2762
    %v2764 = vpop.f32.mrb[0].mxu0
    %2765 = vdwg.mxu0
    %v2766 = vadd.f32 %v2490, %v2760
    %v2767 = vadd.f32 %v2491, %v2763
    %s2768 = scalar_lea.vmem %s7, 1
    %v2769 = vld [vmem:[%s2768] sm:$0x1]
    %v2771 = vlaneseq
    %v2772 = vshrl.u32 %v2771, 7
    %v2773 = vsub.s32 0, %v2772
    %v2774 = vrot.slane %v2769, %v2773
    %v2776 = vadd.f32 %v2766, %v2774
    %v2777 = vadd.f32 %v2767, %v2774
    %v2778 = vadd.f32 %v1596, %v2776
    %v2779 = vadd.f32 %v1597, %v2777
    %s2780 = scalar_lea.vmem %s8, 1
    %v2781 = vld [vmem:[%s2780] sm:$0x1]
    %s2782 = scalar_lea.vmem %s9, 1
    %v2783 = vld [vmem:[%s2782] sm:$0x1]
    %v2784 = vsel %vm73, %v2778, 0.0
    %2785 = vadd.xlane.f32.xlu0 %v2784
    %v2786 = vpop.xlane.xlu0 %2785
    %v2787 = vsel %vm73, %v2779, 0.0
    %2788 = vadd.xlane.f32.xlu0 %v2787
    %v2789 = vpop.xlane.xlu0 %2788
    %v2790 = vmul.f32 %v2786, %v80
    %v2791 = vmul.f32 %v2789, %v80
    %v2792 = vsub.f32 %v2778, %v2790
    %v2793 = vsub.f32 %v2779, %v2791
    %v2794 = vmul.f32 %v2792, %v2792
    %v2795 = vmul.f32 %v2793, %v2793
    %v2796 = vsel %vm73, %v2794, 0.0
    %2797 = vadd.xlane.f32.xlu0 %v2796
    %v2798 = vpop.xlane.xlu0 %2797
    %v2799 = vsel %vm73, %v2795, 0.0
    %2800 = vadd.xlane.f32.xlu0 %v2799
    %v2801 = vpop.xlane.xlu0 %2800
    %v2802 = vmul.f32 %v2798, %v80
    %v2803 = vmul.f32 %v2801, %v80
    %v2804 = vadd.f32 %v2802, 1e-12
    %v2805 = vadd.f32 %v2803, 1e-12
    %v2806 = vrsqrt.pop %v2804
    %v2807 = vrsqrt.pop %v2805
    %v2808 = vmul.f32 %v2792, %v2806
    %v2809 = vmul.f32 %v2793, %v2807
    %v2811 = vlaneseq
    %v2812 = vshrl.u32 %v2811, 7
    %v2813 = vsub.s32 0, %v2812
    %v2814 = vrot.slane %v2781, %v2813
    %v2816 = vmul.f32 %v2808, %v2814
    %v2817 = vmul.f32 %v2809, %v2814
    %v2819 = vlaneseq
    %v2820 = vshrl.u32 %v2819, 7
    %v2821 = vsub.s32 0, %v2820
    %v2822 = vrot.slane %v2783, %v2821
    %v2824 = vadd.f32 %v2816, %v2822
    %v2825 = vadd.f32 %v2817, %v2822
    %v2826 = vpack.c.bf16 %v2825, %v2824
    %s2827 = scalar_lea.vmem %s10, 16
    %v2828 = vld [vmem:[%s2827] sm:$0xf]
    %v2829 = vld [vmem:[%s2827 + $0x4] sm:$0xf]
    %v2830 = vld [vmem:[%s2827 + $0x8] sm:$0xf]
    %v2831 = vld [vmem:[%s2827 + $0xc] sm:$0xf]
    %s2832 = scalar_lea.vmem %s11, 1
    %v2833 = vld [vmem:[%s2832] sm:$0x1]
    %v2835 = vlaneseq
    %v2836 = vshrl.u32 %v2835, 7
    %v2837 = vsub.s32 0, %v2836
    %v2838 = vrot.slane %v2833, %v2837
    %v2844 = vunpack.c.l.b16 %v2828
    %v2845 = vunpack.c.l.b16 %v2829
    %v2846 = vunpack.c.l.b16 %v2830
    %v2847 = vunpack.c.l.b16 %v2831
    %v2848 = vpack.c.b16 %v2845, %v2844
    %v2849 = vpack.c.b16 %v2847, %v2846
    %v2853 = vsel %vm73, %v2826, 0
    %2855 = vmatprep.subr.bf16.mxu0 0
    %2856 = vmatpush1.bf16.msra.mxu0 %v2848
    %2857 = vmatprep.subr.bf16.mxu0 0
    %2858 = vmatpush1.bf16.msra.mxu0 %v2849
    %2859 = vmatprep.subr.bf16.mxu0 0
    %2860 = vmatpush1.bf16.msra.mxu0 0
    %2861 = vmatprep.subr.bf16.mxu0 0
    %2862 = vmatpush1.bf16.msra.mxu0 0
    %2863 = vmatprep.subr.bf16.mxu0 0
    %2864 = vmatpush1.bf16.msra.mxu0 0
    %2865 = vmatprep.subr.bf16.mxu0 0
    %2866 = vmatpush1.bf16.msra.mxu0 0
    %2867 = vmatprep.subr.bf16.mxu0 0
    %2868 = vmatpush1.bf16.msra.mxu0 0
    %2869 = vmatprep.subr.bf16.mxu0 0
    %2870 = vmatpush1.bf16.msra.mxu0 0
    %2871 = vmatprep.subr.bf16.mxu0 0
    %2872 = vmatpush1.bf16.msra.mxu0 0
    %2873 = vmatprep.subr.bf16.mxu0 0
    %2874 = vmatpush1.bf16.msra.mxu0 0
    %2875 = vmatprep.subr.bf16.mxu0 0
    %2876 = vmatpush1.bf16.msra.mxu0 0
    %2877 = vmatprep.subr.bf16.mxu0 0
    %2878 = vmatpush1.bf16.msra.mxu0 0
    %2879 = vmatprep.subr.bf16.mxu0 0
    %2880 = vmatpush1.bf16.msra.mxu0 0
    %2881 = vmatprep.subr.bf16.mxu0 0
    %2882 = vmatpush1.bf16.msra.mxu0 0
    %2883 = vmatprep.subr.bf16.mxu0 0
    %2884 = vmatpush1.bf16.msra.mxu0 0
    %2885 = vmatprep.subr.bf16.mxu0 0
    %2886 = vmatpush1.bf16.msra.mxu0 0
    %2887 = vmatprep.mubr.bf16.mxu0 0
    %2888 = vmatmul.mubr.bf16.gmra.mrb[0].mxu0 %v2853
    %v2889 = vpop.f32.mrb[0].mxu0
    %v2890 = vadd.f32 %v2838, %v2889
    %v2891 = vpop.f32.mrb[0].mxu0
    %v2892 = vpop.f32.mrb[0].mxu0
    %v2893 = vadd.f32 %v2838, %v2892
    %v2894 = vpop.f32.mrb[0].mxu0
    %2895 = vdwg.mxu0
    %v2896 = vmul.f32 %v2890, %v2890
    %v2897 = vmul.f32 %v2893, %v2893
    %v2898 = vmul.f32 %v2890, %v2896
    %v2899 = vmul.f32 %v2893, %v2897
    %v2900 = vmul.f32 %v2898, 0.044715
    %v2901 = vmul.f32 %v2899, 0.044715
    %v2902 = vadd.f32 %v2890, %v2900
    %v2903 = vadd.f32 %v2893, %v2901
    %v2904 = vmul.f32 %v2902, 0.7978846
    %v2905 = vmul.f32 %v2903, 0.7978846
    %v2906 = vtanh.pop %v2904
    %v2907 = vtanh.pop %v2905
    %v2908 = vadd.f32 %v2906, 1.0
    %v2909 = vadd.f32 %v2907, 1.0
    %v2910 = vmul.f32 %v2908, 0.5
    %v2911 = vmul.f32 %v2909, 0.5
    %v2912 = vmul.f32 %v2890, %v2910
    %v2913 = vmul.f32 %v2893, %v2911
    %v2914 = vpack.c.bf16 %v2913, %v2912
    %s2915 = scalar_lea.vmem %s12, 64
    %v2916 = vld [vmem:[%s2915] sm:$0xf]
    %v2917 = vld [vmem:[%s2915 + $0x4] sm:$0xf]
    %v2918 = vld [vmem:[%s2915 + $0x8] sm:$0xf]
    %v2919 = vld [vmem:[%s2915 + $0xc] sm:$0xf]
    %v2920 = vld [vmem:[%s2915 + $0x10] sm:$0xf]
    %v2921 = vld [vmem:[%s2915 + $0x14] sm:$0xf]
    %v2922 = vld [vmem:[%s2915 + $0x18] sm:$0xf]
    %v2923 = vld [vmem:[%s2915 + $0x1c] sm:$0xf]
    %v2924 = vld [vmem:[%s2915 + $0x20] sm:$0xf]
    %v2925 = vld [vmem:[%s2915 + $0x24] sm:$0xf]
    %v2926 = vld [vmem:[%s2915 + $0x28] sm:$0xf]
    %v2927 = vld [vmem:[%s2915 + $0x2c] sm:$0xf]
    %v2928 = vld [vmem:[%s2915 + $0x30] sm:$0xf]
    %v2929 = vld [vmem:[%s2915 + $0x34] sm:$0xf]
    %v2930 = vld [vmem:[%s2915 + $0x38] sm:$0xf]
    %v2931 = vld [vmem:[%s2915 + $0x3c] sm:$0xf]
    %s2932 = scalar_lea.vmem %s13, 1
    %v2933 = vld [vmem:[%s2932] sm:$0x1]
    %v2935 = vlaneseq
    %v2936 = vshrl.u32 %v2935, 7
    %v2937 = vsub.s32 0, %v2936
    %v2938 = vrot.slane %v2933, %v2937
    %v2956 = vunpack.c.l.b16 %v2916
    %v2957 = vunpack.c.l.b16 %v2917
    %v2958 = vunpack.c.l.b16 %v2918
    %v2959 = vunpack.c.l.b16 %v2919
    %v2960 = vunpack.c.l.b16 %v2920
    %v2961 = vunpack.c.l.b16 %v2921
    %v2962 = vunpack.c.l.b16 %v2922
    %v2963 = vunpack.c.l.b16 %v2923
    %v2964 = vunpack.c.l.b16 %v2924
    %v2965 = vunpack.c.l.b16 %v2925
    %v2966 = vunpack.c.l.b16 %v2926
    %v2967 = vunpack.c.l.b16 %v2927
    %v2968 = vunpack.c.l.b16 %v2928
    %v2969 = vunpack.c.l.b16 %v2929
    %v2970 = vunpack.c.l.b16 %v2930
    %v2971 = vunpack.c.l.b16 %v2931
    %v2972 = vpack.c.b16 %v2957, %v2956
    %v2973 = vpack.c.b16 %v2959, %v2958
    %v2974 = vpack.c.b16 %v2961, %v2960
    %v2975 = vpack.c.b16 %v2963, %v2962
    %v2976 = vpack.c.b16 %v2965, %v2964
    %v2977 = vpack.c.b16 %v2967, %v2966
    %v2978 = vpack.c.b16 %v2969, %v2968
    %v2979 = vpack.c.b16 %v2971, %v2970
    %2988 = vmatprep.subr.bf16.mxu0 0
    %2989 = vmatpush1.bf16.msra.mxu0 %v2972
    %2990 = vmatprep.subr.bf16.mxu0 0
    %2991 = vmatpush1.bf16.msra.mxu0 %v2973
    %2992 = vmatprep.subr.bf16.mxu0 0
    %2993 = vmatpush1.bf16.msra.mxu0 %v2974
    %2994 = vmatprep.subr.bf16.mxu0 0
    %2995 = vmatpush1.bf16.msra.mxu0 %v2975
    %2996 = vmatprep.subr.bf16.mxu0 0
    %2997 = vmatpush1.bf16.msra.mxu0 %v2976
    %2998 = vmatprep.subr.bf16.mxu0 0
    %2999 = vmatpush1.bf16.msra.mxu0 %v2977
    %3000 = vmatprep.subr.bf16.mxu0 0
    %3001 = vmatpush1.bf16.msra.mxu0 %v2978
    %3002 = vmatprep.subr.bf16.mxu0 0
    %3003 = vmatpush1.bf16.msra.mxu0 %v2979
    %3004 = vmatprep.subr.bf16.mxu0 0
    %3005 = vmatpush1.bf16.msra.mxu0 0
    %3006 = vmatprep.subr.bf16.mxu0 0
    %3007 = vmatpush1.bf16.msra.mxu0 0
    %3008 = vmatprep.subr.bf16.mxu0 0
    %3009 = vmatpush1.bf16.msra.mxu0 0
    %3010 = vmatprep.subr.bf16.mxu0 0
    %3011 = vmatpush1.bf16.msra.mxu0 0
    %3012 = vmatprep.subr.bf16.mxu0 0
    %3013 = vmatpush1.bf16.msra.mxu0 0
    %3014 = vmatprep.subr.bf16.mxu0 0
    %3015 = vmatpush1.bf16.msra.mxu0 0
    %3016 = vmatprep.subr.bf16.mxu0 0
    %3017 = vmatpush1.bf16.msra.mxu0 0
    %3018 = vmatprep.subr.bf16.mxu0 0
    %3019 = vmatpush1.bf16.msra.mxu0 0
    %3020 = vmatprep.mubr.bf16.mxu0 0
    %3021 = vmatmul.mubr.bf16.gmra.mrb[0].mxu0 %v2914
    %v3022 = vpop.f32.mrb[0].mxu0
    %v3023 = vadd.f32 %v2938, %v3022
    %v3024 = vpop.f32.mrb[0].mxu0
    %v3025 = vpop.f32.mrb[0].mxu0
    %v3026 = vadd.f32 %v2938, %v3025
    %v3027 = vpop.f32.mrb[0].mxu0
    %3028 = vdwg.mxu0
    %v3029 = vadd.f32 %v2824, %v3023
    %v3030 = vadd.f32 %v2825, %v3026
    %s3031 = scalar_lea.vmem %s14, 1
    %v3032 = vld [vmem:[%s3031] sm:$0x1]
    %s3033 = scalar_lea.vmem %s15, 1
    %v3034 = vld [vmem:[%s3033] sm:$0x1]
    %v3035 = vsel %vm73, %v3029, 0.0
    %3036 = vadd.xlane.f32.xlu0 %v3035
    %v3037 = vpop.xlane.xlu0 %3036
    %v3038 = vsel %vm73, %v3030, 0.0
    %3039 = vadd.xlane.f32.xlu0 %v3038
    %v3040 = vpop.xlane.xlu0 %3039
    %v3041 = vmul.f32 %v3037, %v80
    %v3042 = vmul.f32 %v3040, %v80
    %v3043 = vsub.f32 %v3029, %v3041
    %v3044 = vsub.f32 %v3030, %v3042
    %v3045 = vmul.f32 %v3043, %v3043
    %v3046 = vmul.f32 %v3044, %v3044
    %v3047 = vsel %vm73, %v3045, 0.0
    %3048 = vadd.xlane.f32.xlu0 %v3047
    %v3049 = vpop.xlane.xlu0 %3048
    %v3050 = vsel %vm73, %v3046, 0.0
    %3051 = vadd.xlane.f32.xlu0 %v3050
    %v3052 = vpop.xlane.xlu0 %3051
    %v3053 = vmul.f32 %v3049, %v80
    %v3054 = vmul.f32 %v3052, %v80
    %v3055 = vadd.f32 %v3053, 1e-12
    %v3056 = vadd.f32 %v3054, 1e-12
    %v3057 = vrsqrt.pop %v3055
    %v3058 = vrsqrt.pop %v3056
    %v3059 = vmul.f32 %v3043, %v3057
    %v3060 = vmul.f32 %v3044, %v3058
    %v3062 = vlaneseq
    %v3063 = vshrl.u32 %v3062, 7
    %v3064 = vsub.s32 0, %v3063
    %v3065 = vrot.slane %v3032, %v3064
    %v3067 = vmul.f32 %v3059, %v3065
    %v3068 = vmul.f32 %v3060, %v3065
    %v3070 = vlaneseq
    %v3071 = vshrl.u32 %v3070, 7
    %v3072 = vsub.s32 0, %v3071
    %v3073 = vrot.slane %v3034, %v3072
    %v3075 = vadd.f32 %v3067, %v3073
    %v3076 = vadd.f32 %v3068, %v3073
    %v3077 = vpack.c.bf16 %v3075, %v3075
    %v3078 = vpack.c.bf16 %v3076, %v3076
    %v3079 = vld [vmem:[%s16] sm:$0xf]
    %v3080 = vld [vmem:[%s16 + $0x4] sm:$0xf]
    %v3081 = vld [vmem:[%s16 + $0x8] sm:$0xf]
    %v3082 = vld [vmem:[%s16 + $0xc] sm:$0xf]
    %v3083 = vld [vmem:[%s17] sm:$0x1]
    %v3085 = vlaneseq
    %v3086 = vshrl.u32 %v3085, 7
    %v3087 = vsub.s32 0, %v3086
    %v3088 = vrot.slane %v3083, %v3087
    %v3092 = vunpack.c.l.b16 %v3077
    %v3093 = vunpack.c.l.b16 %v3078
    %v3094 = vrot.slane %v3093, 7
    %vm3095 = vcmask 1041409
    %v3096 = vsel %vm3095, %v3094, %v3092
    %v3097 = vpack.c.b16 %v3096, %v3096
    %v3102 = vunpack.c.l.b16 %v3079
    %v3103 = vunpack.c.l.b16 %v3080
    %v3104 = vunpack.c.l.b16 %v3081
    %v3105 = vunpack.c.l.b16 %v3082
    %v3106 = vpack.c.b16 %v3103, %v3102
    %v3107 = vpack.c.b16 %v3105, %v3104
    %v3111 = vsel %vm73, %v3097, 0
    %3113 = vmatprep.subr.bf16.mxu0 0
    %3114 = vmatpush1.bf16.msra.mxu0 %v3106
    %3115 = vmatprep.subr.bf16.mxu0 0
    %3116 = vmatpush1.bf16.msra.mxu0 %v3107
    %3117 = vmatprep.subr.bf16.mxu0 0
    %3118 = vmatpush1.bf16.msra.mxu0 0
    %3119 = vmatprep.subr.bf16.mxu0 0
    %3120 = vmatpush1.bf16.msra.mxu0 0
    %3121 = vmatprep.subr.bf16.mxu0 0
    %3122 = vmatpush1.bf16.msra.mxu0 0
    %3123 = vmatprep.subr.bf16.mxu0 0
    %3124 = vmatpush1.bf16.msra.mxu0 0
    %3125 = vmatprep.subr.bf16.mxu0 0
    %3126 = vmatpush1.bf16.msra.mxu0 0
    %3127 = vmatprep.subr.bf16.mxu0 0
    %3128 = vmatpush1.bf16.msra.mxu0 0
    %3129 = vmatprep.subr.bf16.mxu0 0
    %3130 = vmatpush1.bf16.msra.mxu0 0
    %3131 = vmatprep.subr.bf16.mxu0 0
    %3132 = vmatpush1.bf16.msra.mxu0 0
    %3133 = vmatprep.subr.bf16.mxu0 0
    %3134 = vmatpush1.bf16.msra.mxu0 0
    %3135 = vmatprep.subr.bf16.mxu0 0
    %3136 = vmatpush1.bf16.msra.mxu0 0
    %3137 = vmatprep.subr.bf16.mxu0 0
    %3138 = vmatpush1.bf16.msra.mxu0 0
    %3139 = vmatprep.subr.bf16.mxu0 0
    %3140 = vmatpush1.bf16.msra.mxu0 0
    %3141 = vmatprep.subr.bf16.mxu0 0
    %3142 = vmatpush1.bf16.msra.mxu0 0
    %3143 = vmatprep.subr.bf16.mxu0 0
    %3144 = vmatpush1.bf16.msra.mxu0 0
    %3145 = vmatprep.mubr.bf16.mxu0 0
    %3146 = vmatmul.mubr.bf16.gmra.mrb[0].mxu0 %v3111
    %v3147 = vpop.f32.mrb[0].mxu0
    %v3148 = vadd.f32 %v3088, %v3147
    %v3149 = vpop.f32.mrb[0].mxu0
    %v3150 = vpop.f32.mrb[0].mxu0
    %v3151 = vpop.f32.mrb[0].mxu0
    %3152 = vdwg.mxu0
    %v3153 = vtanh.pop %v3148
    %v3154 = vpack.c.bf16 %v3153, %v3153
    %v3155 = vld [vmem:[%s18] sm:$0xf]
    %v3156 = vld [vmem:[%s18 + $0x4] sm:$0xf]
    %v3157 = vld [vmem:[%s18 + $0x8] sm:$0xf]
    %v3158 = vld [vmem:[%s18 + $0xc] sm:$0xf]
    %v3159 = vld [vmem:[%s19] sm:$0x1]
    %v3161 = vlaneseq
    %v3162 = vshrl.u32 %v3161, 7
    %v3163 = vsub.s32 0, %v3162
    %v3164 = vrot.slane %v3159, %v3163
    %v3170 = vunpack.c.l.b16 %v3155
    %v3171 = vunpack.c.l.b16 %v3156
    %v3172 = vunpack.c.l.b16 %v3157
    %v3173 = vunpack.c.l.b16 %v3158
    %v3174 = vpack.c.b16 %v3171, %v3170
    %v3175 = vpack.c.b16 %v3173, %v3172
    %v3179 = vsel %vm73, %v3154, 0
    %3181 = vmatprep.subr.bf16.mxu0 0
    %3182 = vmatpush1.bf16.msra.mxu0 %v3174
    %3183 = vmatprep.subr.bf16.mxu0 0
    %3184 = vmatpush1.bf16.msra.mxu0 %v3175
    %3185 = vmatprep.subr.bf16.mxu0 0
    %3186 = vmatpush1.bf16.msra.mxu0 0
    %3187 = vmatprep.subr.bf16.mxu0 0
    %3188 = vmatpush1.bf16.msra.mxu0 0
    %3189 = vmatprep.subr.bf16.mxu0 0
    %3190 = vmatpush1.bf16.msra.mxu0 0
    %3191 = vmatprep.subr.bf16.mxu0 0
    %3192 = vmatpush1.bf16.msra.mxu0 0
    %3193 = vmatprep.subr.bf16.mxu0 0
    %3194 = vmatpush1.bf16.msra.mxu0 0
    %3195 = vmatprep.subr.bf16.mxu0 0
    %3196 = vmatpush1.bf16.msra.mxu0 0
    %3197 = vmatprep.subr.bf16.mxu0 0
    %3198 = vmatpush1.bf16.msra.mxu0 0
    %3199 = vmatprep.subr.bf16.mxu0 0
    %3200 = vmatpush1.bf16.msra.mxu0 0
    %3201 = vmatprep.subr.bf16.mxu0 0
    %3202 = vmatpush1.bf16.msra.mxu0 0
    %3203 = vmatprep.subr.bf16.mxu0 0
    %3204 = vmatpush1.bf16.msra.mxu0 0
    %3205 = vmatprep.subr.bf16.mxu0 0
    %3206 = vmatpush1.bf16.msra.mxu0 0
    %3207 = vmatprep.subr.bf16.mxu0 0
    %3208 = vmatpush1.bf16.msra.mxu0 0
    %3209 = vmatprep.subr.bf16.mxu0 0
    %3210 = vmatpush1.bf16.msra.mxu0 0
    %3211 = vmatprep.subr.bf16.mxu0 0
    %3212 = vmatpush1.bf16.msra.mxu0 0
    %3213 = vmatprep.mubr.bf16.mxu0 0
    %3214 = vmatmul.mubr.bf16.gmra.mrb[0].mxu0 %v3179
    %v3215 = vpop.f32.mrb[0].mxu0
    %v3216 = vadd.f32 %v3164, %v3215
    %v3217 = vpop.f32.mrb[0].mxu0
    %v3218 = vpop.f32.mrb[0].mxu0
    %v3219 = vpop.f32.mrb[0].mxu0
    %3220 = vdwg.mxu0
    %3221 = vst [vmem:[#allocation2] sm:$0x3] %v3216
    // Predicated region
    $region82: #{sentiment_transformer_forward.1} parent=1 // pred_check
      _
    $region83: #{sentiment_transformer_forward.1} parent=1 // pred_check_branch
      %3223 = sbr.rel (0) target = $region85
    $region84: #{sentiment_transformer_forward.1} parent=1 // pred_region
      %s3225 = ssub.s32 32, 32
      %3226 = vsyncadd [#allocation3], %s3225
      %s3228 = sshll.u32 [#allocation2], 4
      %s3229 = int_to_ptr.vmem [resolvable:$true] %s3228
      %3231 = dma.vmem_to_hbm [thread:$0]  %s3229, 32, %s20, [#allocation3]
    $region85: #{sentiment_transformer_forward.1} parent=1 // pred_fallthru
      _
    // Predicated region
    $region86: #{sentiment_transformer_forward.1} parent=1 // pred_check
      _
    $region87: #{sentiment_transformer_forward.1} parent=1 // pred_check_branch
      %3233 = sbr.rel (0) target = $region89
    $region88: #{sentiment_transformer_forward.1} parent=1 // pred_region
      %3234 = dma.done [#allocation3], 32
    $region89: #{sentiment_transformer_forward.1} parent=1 // pred_fallthru
      _
    %3235 = vsyncpa [#allocation3], 1

</llo_original>
